<compile_context>
chip_gen: v7x
topology: tpu7x:2x2x1
jax: 0.10.0
libtpu: 0.0.40
codegen_flags: <defaults>
</compile_context>

<pallas_src>
import functools

import jax
import jax.numpy as jnp
from jax.experimental import pallas as pl
from jax.experimental.pallas import tpu as pltpu

KSIZE = 7
PAD = 3


def _largest_divisor_leq(n, cap):
    cap = max(1, min(n, cap))
    for d in range(cap, 0, -1):
        if n % d == 0:
            return d
    return 1


def _spatial_attn_kernel(w_ref, x_ref, o_ref, sum_ref, max_ref, psum_ref,
                         pmax_ref, *, W, HW, MARG, nb, ck, nchunks):
    # w_ref  : SMEM (2*7*7,) f32 flattened OIHW weights; channel-0 (avg) taps
    #          are pre-scaled by 1/C so the kernel only needs a channel *sum*.
    # x_ref  : VMEM (nb, cblk, HW)  lane-dense input block (HW = H*W on lanes)
    # o_ref  : VMEM (nb, 1, HW)     attention-map block
    # sum_ref, max_ref   : VMEM (nb, HW) f32      running channel sum / max
    # psum_ref, pmax_ref : VMEM (nb, HW + 2*MARG) zero-margined flat planes
    ci = pl.program_id(1)
    nc = pl.num_programs(1)

    @pl.when(ci == 0)
    def _init():
        sum_ref[...] = jnp.zeros_like(sum_ref)
        max_ref[...] = jnp.full_like(max_ref, -jnp.inf)

    # Stream the channel block in <=8-channel chunks: bounds live ranges and
    # widens (possibly bf16) activations to f32 per chunk, not per block.
    def c_body(k, carry):
        s, m = carry
        start = pl.multiple_of(k * ck, ck)
        chunk = x_ref[:, pl.ds(start, ck), :].astype(jnp.float32)  # (nb, ck, HW)
        return s + jnp.sum(chunk, axis=1), jnp.maximum(m, jnp.max(chunk, axis=1))

    s, m = jax.lax.fori_loop(0, nchunks, c_body,
                             (sum_ref[...], max_ref[...]),
                             unroll=nchunks <= 8)
    sum_ref[...] = s
    max_ref[...] = m

    @pl.when(ci == nc - 1)
    def _conv_and_store():
        # Hoisted column-validity masks (horizontal zero padding): tap dx is
        # valid at output column x iff 0 <= x + dx - PAD < W.
        xpos = jax.lax.broadcasted_iota(jnp.int32, (1, HW), 1) % W
        col_ok = [(xpos >= PAD - dx) & (xpos < W + PAD - dx)
                  for dx in range(KSIZE)]

        acc = jnp.zeros((nb, HW), jnp.float32)
        for pi, (plane_ref, vals) in enumerate(((psum_ref, s), (pmax_ref, m))):
            # Halo-only zeroing: interior is fully overwritten below; the two
            # aligned margin strips provide the vertical (row) zero padding.
            plane_ref[:, 0:MARG] = jnp.zeros((nb, MARG), jnp.float32)
            plane_ref[:, MARG + HW:MARG + HW + MARG] = jnp.zeros(
                (nb, MARG), jnp.float32)
            plane_ref[:, MARG:MARG + HW] = vals
            plane = plane_ref[...]                         # (nb, HW + 2*MARG)
            for dy in range(KSIZE):
                row_acc = None
                for dx in range(KSIZE):
                    w = w_ref[(pi * KSIZE + dy) * KSIZE + dx]   # SMEM scalar
                    a = MARG + (dy - PAD) * W + (dx - PAD)
                    tap = jax.lax.slice(plane, (0, a), (nb, a + HW))
                    if dx != PAD:              # center column never masked
                        tap = jnp.where(col_ok[dx], tap, 0.0)
                    term = w * tap
                    row_acc = term if row_acc is None else row_acc + term
                acc = acc + row_acc

        # sigmoid(x) = 0.5 * tanh(0.5*x) + 0.5  -> EUP transcendental slot.
        out = (0.5 * jnp.tanh(0.5 * acc) + 0.5).astype(o_ref.dtype)
        for n in range(nb):                    # natural-layout (1, HW) stores
            o_ref[n] = jax.lax.slice(out, (n, 0), (n + 1, HW))


def spatial_attention(x, conv_w, *, max_batch_block=8,
                      target_block_bytes=4 * 1024 * 1024):
    """x: (N, C, H, W), conv_w: (1, 2, 7, 7) PyTorch OIHW. Returns (N, 1, H, W)."""
    N, C, H, W = x.shape
    HW = H * W
    marg_min = PAD * (W + 1)                    # worst-case flat tap offset
    MARG = ((marg_min + 127) // 128) * 128      # round up -> aligned margins
    HWP = HW + 2 * MARG

    # v7x: batch block <= ceil(N/2) so the "parallel" axis spans both cores.
    nb = _largest_divisor_leq(N, max(1, min(max_batch_block, pl.cdiv(N, 2))))

    # Channel tile from a VMEM budget (double-buffered input block); must
    # divide C and obey the block rule (multiple of the sublane tile, or C).
    sub = 8 * max(1, 4 // x.dtype.itemsize)     # 8 for f32, 16 for bf16
    bytes_per_channel = max(1, nb * HW * x.dtype.itemsize)
    cblk_cap = max(1, int(target_block_bytes // bytes_per_channel))
    cblk = _largest_divisor_leq(C, cblk_cap)
    if cblk != C and cblk % sub != 0:
        mult = [d for d in range(sub, min(C, cblk_cap) + 1, sub) if C % d == 0]
        cblk = max(mult) if mult else C
    ck = _largest_divisor_leq(cblk, 8)          # <=8 channels live at a time
    nchunks = cblk // ck

    # Fold the 1/C mean normalization into the channel-0 (avg-plane) weights.
    w2 = conv_w.astype(jnp.float32).reshape(2, KSIZE * KSIZE)
    w2 = w2.at[0].multiply(1.0 / C)
    w_flat = w2.reshape(-1)                     # (2*7*7,)

    x_flat = x.reshape(N, C, HW)                # free: collapses trailing dims

    kernel = functools.partial(_spatial_attn_kernel, W=W, HW=HW, MARG=MARG,
                               nb=nb, ck=ck, nchunks=nchunks)
    out = pl.pallas_call(
        kernel,
        out_shape=jax.ShapeDtypeStruct((N, 1, HW), x.dtype),
        grid=(N // nb, C // cblk),
        in_specs=[
            pl.BlockSpec(memory_space=pltpu.MemorySpace.SMEM),   # weights
            pl.BlockSpec((nb, cblk, HW), lambda b, c: (b, c, 0)),
        ],
        out_specs=pl.BlockSpec((nb, 1, HW), lambda b, c: (b, 0, 0)),
        scratch_shapes=[
            pltpu.VMEM((nb, HW), jnp.float32),     # running channel sum
            pltpu.VMEM((nb, HW), jnp.float32),     # running channel max
            pltpu.VMEM((nb, HWP), jnp.float32),    # zero-margined sum plane
            pltpu.VMEM((nb, HWP), jnp.float32),    # zero-margined max plane
        ],
        compiler_params=pltpu.CompilerParams(
            dimension_semantics=("parallel", "arbitrary"),
            vmem_limit_bytes=48 * 1024 * 1024,
        ),
    )(w_flat, x_flat)
    return out.reshape(N, 1, H, W)


def _reference(x, conv_w):
    avg = jnp.mean(x, axis=1, keepdims=True)
    mx = jnp.max(x, axis=1, keepdims=True)
    cat = jnp.concatenate([avg, mx], axis=1)
    y = jax.lax.conv_general_dilated(
        cat, conv_w, window_strides=(1, 1),
        padding=((PAD, PAD), (PAD, PAD)),
        dimension_numbers=("NCHW", "OIHW", "NCHW"),
        precision=jax.lax.Precision.HIGHEST)
    return jax.nn.sigmoid(y)


if __name__ == "__main__":
    key = jax.random.PRNGKey(0)
    kx, kw = jax.random.split(key)

    N, C, H, W = 2, 4, 16, 16
    x = jax.random.normal(kx, (N, C, H, W), dtype=jnp.float32)

    # Deterministic synthetic Conv2d(2, 1, 7, bias=False) weight, kaiming-ish scale.
    fan_in = 2 * KSIZE * KSIZE
    conv_w = jax.random.normal(kw, (1, 2, KSIZE, KSIZE), dtype=jnp.float32) * (fan_in ** -0.5)

    out = jax.block_until_ready(spatial_attention(x, conv_w))
    ref = jax.block_until_ready(_reference(x, conv_w))

    assert out.shape == (N, 1, H, W)
    err = float(jnp.max(jnp.abs(out - ref)))
    assert jnp.allclose(out, ref, atol=1e-5, rtol=1e-5), err

    print("KERNEL_OK")
</pallas_src>

<mosaic_0001>
module attributes {stable_mosaic.version = 11 : i64} {
  func.func @_spatial_attn_kernel(%arg0: i32, %arg1: i32, %arg2: memref<98xf32, #tpu.memory_space<smem>>, %arg3: memref<1x4x256xf32, #tpu.memory_space<vmem>>, %arg4: memref<1x1x256xf32, #tpu.memory_space<vmem>>, %arg5: memref<1x256xf32, #tpu.memory_space<vmem>>, %arg6: memref<1x256xf32, #tpu.memory_space<vmem>>, %arg7: memref<1x512xf32, #tpu.memory_space<vmem>>, %arg8: memref<1x512xf32, #tpu.memory_space<vmem>>) attributes {dimension_semantics = [#tpu.dimension_semantics<parallel>, #tpu.dimension_semantics<arbitrary>], iteration_bounds = array<i64: 2, 1>, scalar_prefetch = 0 : i64, scratch_operands = 4 : i64, tpu.core_type = #tpu.core_type<tc>, window_params = [{transform_indices = @transform_0, window_bounds = array<i64: 98>}, {transform_indices = @transform_1, window_bounds = array<i64: 1, 4, 256>}, {transform_indices = @transform_2, window_bounds = array<i64: 1, 1, 256>}]} {
    %c0_i32 = arith.constant 0 : i32
    %0 = arith.cmpi eq, %arg1, %c0_i32 : i32
    %1 = arith.extui %0 : i1 to i32
    %c0_i32_0 = arith.constant 0 : i32
    %2 = arith.cmpi ne, %1, %c0_i32_0 : i32
    scf.if %2 {
      %cst_14 = arith.constant 0.000000e+00 : f32
      %18 = vector.broadcast %cst_14 : f32 to vector<1x256xf32>
      %c0_15 = arith.constant 0 : index
      %c0_16 = arith.constant 0 : index
      %19 = vector.load %arg5[%c0_15, %c0_16] : memref<1x256xf32, #tpu.memory_space<vmem>>, vector<1x256xf32>
      tpu.vector_store %arg5[%c0_15, %c0_16], %18 {strides = array<i32>} : memref<1x256xf32, #tpu.memory_space<vmem>>, vector<1x256xf32>,
      %cst_17 = arith.constant 0xFF800000 : f32
      %20 = vector.broadcast %cst_17 : f32 to vector<1x256xf32>
      %c0_18 = arith.constant 0 : index
      %c0_19 = arith.constant 0 : index
      %21 = vector.load %arg6[%c0_18, %c0_19] : memref<1x256xf32, #tpu.memory_space<vmem>>, vector<1x256xf32>
      tpu.vector_store %arg6[%c0_18, %c0_19], %20 {strides = array<i32>} : memref<1x256xf32, #tpu.memory_space<vmem>>, vector<1x256xf32>,
    } else {
    }
    %c0 = arith.constant 0 : index
    %c0_1 = arith.constant 0 : index
    %3 = vector.load %arg5[%c0, %c0_1] : memref<1x256xf32, #tpu.memory_space<vmem>>, vector<1x256xf32>
    %c0_2 = arith.constant 0 : index
    %c0_3 = arith.constant 0 : index
    %4 = vector.load %arg6[%c0_2, %c0_3] : memref<1x256xf32, #tpu.memory_space<vmem>>, vector<1x256xf32>
    %c0_i32_4 = arith.constant 0 : i32
    %c4_i32 = arith.constant 4 : i32
    %5 = arith.muli %c0_i32_4, %c4_i32 : i32
    %6 = tpu.assume_multiple %5, 4 : i32
    %c0_5 = arith.constant 0 : index
    %7 = arith.index_cast %6 : i32 to index
    %c0_6 = arith.constant 0 : index
    %8 = vector.load %arg3[%c0_5, %7, %c0_6] : memref<1x4x256xf32, #tpu.memory_space<vmem>>, vector<1x4x256xf32>
    %cst = arith.constant dense<0.000000e+00> : vector<1x256xf32>
    %9 = vector.multi_reduction <add>, %8, %cst [1] : vector<1x4x256xf32> to vector<1x256xf32>
    %10 = arith.addf %3, %9 : vector<1x256xf32>
    %cst_7 = arith.constant dense<0xFF800000> : vector<1x256xf32>
    %11 = vector.multi_reduction <maximumf>, %8, %cst_7 [1] : vector<1x4x256xf32> to vector<1x256xf32>
    %12 = arith.maximumf %4, %11 : vector<1x256xf32>
    %c1_i32 = arith.constant 1 : i32
    %c0_8 = arith.constant 0 : index
    %c0_9 = arith.constant 0 : index
    %13 = vector.load %arg5[%c0_8, %c0_9] : memref<1x256xf32, #tpu.memory_space<vmem>>, vector<1x256xf32>
    tpu.vector_store %arg5[%c0_8, %c0_9], %10 {strides = array<i32>} : memref<1x256xf32, #tpu.memory_space<vmem>>, vector<1x256xf32>,
    %c0_10 = arith.constant 0 : index
    %c0_11 = arith.constant 0 : index
    %14 = vector.load %arg6[%c0_10, %c0_11] : memref<1x256xf32, #tpu.memory_space<vmem>>, vector<1x256xf32>
    tpu.vector_store %arg6[%c0_10, %c0_11], %12 {strides = array<i32>} : memref<1x256xf32, #tpu.memory_space<vmem>>, vector<1x256xf32>,
    %c0_i32_12 = arith.constant 0 : i32
    %15 = arith.cmpi eq, %arg1, %c0_i32_12 : i32
    %16 = arith.extui %15 : i1 to i32
    %c0_i32_13 = arith.constant 0 : i32
    %17 = arith.cmpi ne, %16, %c0_i32_13 : i32
    scf.if %17 {
      %18 = tpu.iota {dimensions = array<i32: 1>} : vector<1x256xi32>
      %c16_i32 = arith.constant 16 : i32
      %c0_i32_14 = arith.constant 0 : i32
      %19 = arith.cmpi eq, %c16_i32, %c0_i32_14 : i32
      %c1_i32_15 = arith.constant 1 : i32
      %20 = arith.select %19, %c1_i32_15, %c16_i32 : i32
      %21 = vector.broadcast %20 : i32 to vector<1x256xi32>
      %22 = arith.remsi %18, %21 : vector<1x256xi32>
      %c0_i32_16 = arith.constant 0 : i32
      %23 = vector.broadcast %c0_i32_16 : i32 to vector<1x256xi32>
      %24 = arith.cmpi ne, %22, %23 : vector<1x256xi32>
      %c0_i32_17 = arith.constant 0 : i32
      %25 = vector.broadcast %c0_i32_17 : i32 to vector<1x256xi32>
      %26 = arith.cmpi slt, %22, %25 : vector<1x256xi32>
      %c0_i32_18 = arith.constant 0 : i32
      %27 = arith.cmpi slt, %20, %c0_i32_18 : i32
      %28 = vector.broadcast %27 : i1 to vector<1x256xi1>
      %29 = vector.broadcast %28 : vector<1x256xi1> to vector<1x256xi1>
      %30 = arith.xori %26, %29 : vector<1x256xi1>
      %31 = arith.andi %30, %24 : vector<1x256xi1>
      %32 = vector.broadcast %20 : i32 to vector<1x256xi32>
      %33 = arith.addi %22, %32 : vector<1x256xi32>
      %34 = arith.select %31, %33, %22 : vector<1x256xi1>, vector<1x256xi32>
      %c3_i32 = arith.constant 3 : i32
      %35 = vector.broadcast %c3_i32 : i32 to vector<1x256xi32>
      %36 = arith.cmpi sge, %34, %35 : vector<1x256xi32>
      %c19_i32 = arith.constant 19 : i32
      %37 = vector.broadcast %c19_i32 : i32 to vector<1x256xi32>
      %38 = arith.cmpi slt, %34, %37 : vector<1x256xi32>
      %39 = arith.andi %36, %38 : vector<1x256xi1>
      %c2_i32 = arith.constant 2 : i32
      %40 = vector.broadcast %c2_i32 : i32 to vector<1x256xi32>
      %41 = arith.cmpi sge, %34, %40 : vector<1x256xi32>
      %c18_i32 = arith.constant 18 : i32
      %42 = vector.broadcast %c18_i32 : i32 to vector<1x256xi32>
      %43 = arith.cmpi slt, %34, %42 : vector<1x256xi32>
      %44 = arith.andi %41, %43 : vector<1x256xi1>
      %c1_i32_19 = arith.constant 1 : i32
      %45 = vector.broadcast %c1_i32_19 : i32 to vector<1x256xi32>
      %46 = arith.cmpi sge, %34, %45 : vector<1x256xi32>
      %c17_i32 = arith.constant 17 : i32
      %47 = vector.broadcast %c17_i32 : i32 to vector<1x256xi32>
      %48 = arith.cmpi slt, %34, %47 : vector<1x256xi32>
      %49 = arith.andi %46, %48 : vector<1x256xi1>
      %c-1_i32 = arith.constant -1 : i32
      %50 = vector.broadcast %c-1_i32 : i32 to vector<1x256xi32>
      %51 = arith.cmpi sge, %34, %50 : vector<1x256xi32>
      %c15_i32 = arith.constant 15 : i32
      %52 = vector.broadcast %c15_i32 : i32 to vector<1x256xi32>
      %53 = arith.cmpi slt, %34, %52 : vector<1x256xi32>
      %54 = arith.andi %51, %53 : vector<1x256xi1>
      %c-2_i32 = arith.constant -2 : i32
      %55 = vector.broadcast %c-2_i32 : i32 to vector<1x256xi32>
      %56 = arith.cmpi sge, %34, %55 : vector<1x256xi32>
      %c14_i32 = arith.constant 14 : i32
      %57 = vector.broadcast %c14_i32 : i32 to vector<1x256xi32>
      %58 = arith.cmpi slt, %34, %57 : vector<1x256xi32>
      %59 = arith.andi %56, %58 : vector<1x256xi1>
      %c-3_i32 = arith.constant -3 : i32
      %60 = vector.broadcast %c-3_i32 : i32 to vector<1x256xi32>
      %61 = arith.cmpi sge, %34, %60 : vector<1x256xi32>
      %c13_i32 = arith.constant 13 : i32
      %62 = vector.broadcast %c13_i32 : i32 to vector<1x256xi32>
      %63 = arith.cmpi slt, %34, %62 : vector<1x256xi32>
      %64 = arith.andi %61, %63 : vector<1x256xi1>
      %cst_20 = arith.constant 0.000000e+00 : f32
      %65 = vector.broadcast %cst_20 : f32 to vector<1x256xf32>
      %cst_21 = arith.constant 0.000000e+00 : f32
      %66 = vector.broadcast %cst_21 : f32 to vector<1x128xf32>
      %c0_22 = arith.constant 0 : index
      %c0_23 = arith.constant 0 : index
      %67 = vector.load %arg7[%c0_22, %c0_23] : memref<1x512xf32, #tpu.memory_space<vmem>>, vector<1x128xf32>
      tpu.vector_store %arg7[%c0_22, %c0_23], %66 {strides = array<i32>} : memref<1x512xf32, #tpu.memory_space<vmem>>, vector<1x128xf32>,
      %cst_24 = arith.constant 0.000000e+00 : f32
      %68 = vector.broadcast %cst_24 : f32 to vector<1x128xf32>
      %c0_25 = arith.constant 0 : index
      %c384 = arith.constant 384 : index
      %69 = vector.load %arg7[%c0_25, %c384] : memref<1x512xf32, #tpu.memory_space<vmem>>, vector<1x128xf32>
      tpu.vector_store %arg7[%c0_25, %c384], %68 {strides = array<i32>} : memref<1x512xf32, #tpu.memory_space<vmem>>, vector<1x128xf32>,
      %c0_26 = arith.constant 0 : index
      %c128 = arith.constant 128 : index
      %70 = vector.load %arg7[%c0_26, %c128] : memref<1x512xf32, #tpu.memory_space<vmem>>, vector<1x256xf32>
      tpu.vector_store %arg7[%c0_26, %c128], %10 {strides = array<i32>} : memref<1x512xf32, #tpu.memory_space<vmem>>, vector<1x256xf32>,
      %c0_27 = arith.constant 0 : index
      %c0_28 = arith.constant 0 : index
      %71 = vector.load %arg7[%c0_27, %c0_28] : memref<1x512xf32, #tpu.memory_space<vmem>>, vector<1x512xf32>
      %c0_29 = arith.constant 0 : index
      %72 = memref.load %arg2[%c0_29] : memref<98xf32, #tpu.memory_space<smem>>
      %73 = vector.extract_strided_slice %71 {offsets = [0, 77], sizes = [1, 256], strides = [1, 1]} : vector<1x512xf32> to vector<1x256xf32>
      %cst_30 = arith.constant 0.000000e+00 : f32
      %74 = vector.broadcast %cst_30 : f32 to vector<1x256xf32>
      %75 = arith.select %39, %73, %74 : vector<1x256xi1>, vector<1x256xf32>
      %76 = vector.broadcast %72 : f32 to vector<1x256xf32>
      %77 = arith.mulf %76, %75 : vector<1x256xf32>
      %c1 = arith.constant 1 : index
      %78 = memref.load %arg2[%c1] : memref<98xf32, #tpu.memory_space<smem>>
      %79 = vector.extract_strided_slice %71 {offsets = [0, 78], sizes = [1, 256], strides = [1, 1]} : vector<1x512xf32> to vector<1x256xf32>
      %cst_31 = arith.constant 0.000000e+00 : f32
      %80 = vector.broadcast %cst_31 : f32 to vector<1x256xf32>
      %81 = arith.select %44, %79, %80 : vector<1x256xi1>, vector<1x256xf32>
      %82 = vector.broadcast %78 : f32 to vector<1x256xf32>
      %83 = arith.mulf %82, %81 : vector<1x256xf32>
      %84 = arith.addf %77, %83 : vector<1x256xf32>
      %c2 = arith.constant 2 : index
      %85 = memref.load %arg2[%c2] : memref<98xf32, #tpu.memory_space<smem>>
      %86 = vector.extract_strided_slice %71 {offsets = [0, 79], sizes = [1, 256], strides = [1, 1]} : vector<1x512xf32> to vector<1x256xf32>
      %cst_32 = arith.constant 0.000000e+00 : f32
      %87 = vector.broadcast %cst_32 : f32 to vector<1x256xf32>
      %88 = arith.select %49, %86, %87 : vector<1x256xi1>, vector<1x256xf32>
      %89 = vector.broadcast %85 : f32 to vector<1x256xf32>
      %90 = arith.mulf %89, %88 : vector<1x256xf32>
      %91 = arith.addf %84, %90 : vector<1x256xf32>
      %c3 = arith.constant 3 : index
      %92 = memref.load %arg2[%c3] : memref<98xf32, #tpu.memory_space<smem>>
      %93 = vector.extract_strided_slice %71 {offsets = [0, 80], sizes = [1, 256], strides = [1, 1]} : vector<1x512xf32> to vector<1x256xf32>
      %94 = vector.broadcast %92 : f32 to vector<1x256xf32>
      %95 = arith.mulf %94, %93 : vector<1x256xf32>
      %96 = arith.addf %91, %95 : vector<1x256xf32>
      %c4 = arith.constant 4 : index
      %97 = memref.load %arg2[%c4] : memref<98xf32, #tpu.memory_space<smem>>
      %98 = vector.extract_strided_slice %71 {offsets = [0, 81], sizes = [1, 256], strides = [1, 1]} : vector<1x512xf32> to vector<1x256xf32>
      %cst_33 = arith.constant 0.000000e+00 : f32
      %99 = vector.broadcast %cst_33 : f32 to vector<1x256xf32>
      %100 = arith.select %54, %98, %99 : vector<1x256xi1>, vector<1x256xf32>
      %101 = vector.broadcast %97 : f32 to vector<1x256xf32>
      %102 = arith.mulf %101, %100 : vector<1x256xf32>
      %103 = arith.addf %96, %102 : vector<1x256xf32>
      %c5 = arith.constant 5 : index
      %104 = memref.load %arg2[%c5] : memref<98xf32, #tpu.memory_space<smem>>
      %105 = vector.extract_strided_slice %71 {offsets = [0, 82], sizes = [1, 256], strides = [1, 1]} : vector<1x512xf32> to vector<1x256xf32>
      %cst_34 = arith.constant 0.000000e+00 : f32
      %106 = vector.broadcast %cst_34 : f32 to vector<1x256xf32>
      %107 = arith.select %59, %105, %106 : vector<1x256xi1>, vector<1x256xf32>
      %108 = vector.broadcast %104 : f32 to vector<1x256xf32>
      %109 = arith.mulf %108, %107 : vector<1x256xf32>
      %110 = arith.addf %103, %109 : vector<1x256xf32>
      %c6 = arith.constant 6 : index
      %111 = memref.load %arg2[%c6] : memref<98xf32, #tpu.memory_space<smem>>
      %112 = vector.extract_strided_slice %71 {offsets = [0, 83], sizes = [1, 256], strides = [1, 1]} : vector<1x512xf32> to vector<1x256xf32>
      %cst_35 = arith.constant 0.000000e+00 : f32
      %113 = vector.broadcast %cst_35 : f32 to vector<1x256xf32>
      %114 = arith.select %64, %112, %113 : vector<1x256xi1>, vector<1x256xf32>
      %115 = vector.broadcast %111 : f32 to vector<1x256xf32>
      %116 = arith.mulf %115, %114 : vector<1x256xf32>
      %117 = arith.addf %110, %116 : vector<1x256xf32>
      %118 = arith.addf %65, %117 : vector<1x256xf32>
      %c7 = arith.constant 7 : index
      %119 = memref.load %arg2[%c7] : memref<98xf32, #tpu.memory_space<smem>>
      %120 = vector.extract_strided_slice %71 {offsets = [0, 93], sizes = [1, 256], strides = [1, 1]} : vector<1x512xf32> to vector<1x256xf32>
      %cst_36 = arith.constant 0.000000e+00 : f32
      %121 = vector.broadcast %cst_36 : f32 to vector<1x256xf32>
      %122 = arith.select %39, %120, %121 : vector<1x256xi1>, vector<1x256xf32>
      %123 = vector.broadcast %119 : f32 to vector<1x256xf32>
      %124 = arith.mulf %123, %122 : vector<1x256xf32>
      %c8 = arith.constant 8 : index
      %125 = memref.load %arg2[%c8] : memref<98xf32, #tpu.memory_space<smem>>
      %126 = vector.extract_strided_slice %71 {offsets = [0, 94], sizes = [1, 256], strides = [1, 1]} : vector<1x512xf32> to vector<1x256xf32>
      %cst_37 = arith.constant 0.000000e+00 : f32
      %127 = vector.broadcast %cst_37 : f32 to vector<1x256xf32>
      %128 = arith.select %44, %126, %127 : vector<1x256xi1>, vector<1x256xf32>
      %129 = vector.broadcast %125 : f32 to vector<1x256xf32>
      %130 = arith.mulf %129, %128 : vector<1x256xf32>
      %131 = arith.addf %124, %130 : vector<1x256xf32>
      %c9 = arith.constant 9 : index
      %132 = memref.load %arg2[%c9] : memref<98xf32, #tpu.memory_space<smem>>
      %133 = vector.extract_strided_slice %71 {offsets = [0, 95], sizes = [1, 256], strides = [1, 1]} : vector<1x512xf32> to vector<1x256xf32>
      %cst_38 = arith.constant 0.000000e+00 : f32
      %134 = vector.broadcast %cst_38 : f32 to vector<1x256xf32>
      %135 = arith.select %49, %133, %134 : vector<1x256xi1>, vector<1x256xf32>
      %136 = vector.broadcast %132 : f32 to vector<1x256xf32>
      %137 = arith.mulf %136, %135 : vector<1x256xf32>
      %138 = arith.addf %131, %137 : vector<1x256xf32>
      %c10 = arith.constant 10 : index
      %139 = memref.load %arg2[%c10] : memref<98xf32, #tpu.memory_space<smem>>
      %140 = vector.extract_strided_slice %71 {offsets = [0, 96], sizes = [1, 256], strides = [1, 1]} : vector<1x512xf32> to vector<1x256xf32>
      %141 = vector.broadcast %139 : f32 to vector<1x256xf32>
      %142 = arith.mulf %141, %140 : vector<1x256xf32>
      %143 = arith.addf %138, %142 : vector<1x256xf32>
      %c11 = arith.constant 11 : index
      %144 = memref.load %arg2[%c11] : memref<98xf32, #tpu.memory_space<smem>>
      %145 = vector.extract_strided_slice %71 {offsets = [0, 97], sizes = [1, 256], strides = [1, 1]} : vector<1x512xf32> to vector<1x256xf32>
      %cst_39 = arith.constant 0.000000e+00 : f32
      %146 = vector.broadcast %cst_39 : f32 to vector<1x256xf32>
      %147 = arith.select %54, %145, %146 : vector<1x256xi1>, vector<1x256xf32>
      %148 = vector.broadcast %144 : f32 to vector<1x256xf32>
      %149 = arith.mulf %148, %147 : vector<1x256xf32>
      %150 = arith.addf %143, %149 : vector<1x256xf32>
      %c12 = arith.constant 12 : index
      %151 = memref.load %arg2[%c12] : memref<98xf32, #tpu.memory_space<smem>>
      %152 = vector.extract_strided_slice %71 {offsets = [0, 98], sizes = [1, 256], strides = [1, 1]} : vector<1x512xf32> to vector<1x256xf32>
      %cst_40 = arith.constant 0.000000e+00 : f32
      %153 = vector.broadcast %cst_40 : f32 to vector<1x256xf32>
      %154 = arith.select %59, %152, %153 : vector<1x256xi1>, vector<1x256xf32>
      %155 = vector.broadcast %151 : f32 to vector<1x256xf32>
      %156 = arith.mulf %155, %154 : vector<1x256xf32>
      %157 = arith.addf %150, %156 : vector<1x256xf32>
      %c13 = arith.constant 13 : index
      %158 = memref.load %arg2[%c13] : memref<98xf32, #tpu.memory_space<smem>>
      %159 = vector.extract_strided_slice %71 {offsets = [0, 99], sizes = [1, 256], strides = [1, 1]} : vector<1x512xf32> to vector<1x256xf32>
      %cst_41 = arith.constant 0.000000e+00 : f32
      %160 = vector.broadcast %cst_41 : f32 to vector<1x256xf32>
      %161 = arith.select %64, %159, %160 : vector<1x256xi1>, vector<1x256xf32>
      %162 = vector.broadcast %158 : f32 to vector<1x256xf32>
      %163 = arith.mulf %162, %161 : vector<1x256xf32>
      %164 = arith.addf %157, %163 : vector<1x256xf32>
      %165 = arith.addf %118, %164 : vector<1x256xf32>
      %c14 = arith.constant 14 : index
      %166 = memref.load %arg2[%c14] : memref<98xf32, #tpu.memory_space<smem>>
      %167 = vector.extract_strided_slice %71 {offsets = [0, 109], sizes = [1, 256], strides = [1, 1]} : vector<1x512xf32> to vector<1x256xf32>
      %cst_42 = arith.constant 0.000000e+00 : f32
      %168 = vector.broadcast %cst_42 : f32 to vector<1x256xf32>
      %169 = arith.select %39, %167, %168 : vector<1x256xi1>, vector<1x256xf32>
      %170 = vector.broadcast %166 : f32 to vector<1x256xf32>
      %171 = arith.mulf %170, %169 : vector<1x256xf32>
      %c15 = arith.constant 15 : index
      %172 = memref.load %arg2[%c15] : memref<98xf32, #tpu.memory_space<smem>>
      %173 = vector.extract_strided_slice %71 {offsets = [0, 110], sizes = [1, 256], strides = [1, 1]} : vector<1x512xf32> to vector<1x256xf32>
      %cst_43 = arith.constant 0.000000e+00 : f32
      %174 = vector.broadcast %cst_43 : f32 to vector<1x256xf32>
      %175 = arith.select %44, %173, %174 : vector<1x256xi1>, vector<1x256xf32>
      %176 = vector.broadcast %172 : f32 to vector<1x256xf32>
      %177 = arith.mulf %176, %175 : vector<1x256xf32>
      %178 = arith.addf %171, %177 : vector<1x256xf32>
      %c16 = arith.constant 16 : index
      %179 = memref.load %arg2[%c16] : memref<98xf32, #tpu.memory_space<smem>>
      %180 = vector.extract_strided_slice %71 {offsets = [0, 111], sizes = [1, 256], strides = [1, 1]} : vector<1x512xf32> to vector<1x256xf32>
      %cst_44 = arith.constant 0.000000e+00 : f32
      %181 = vector.broadcast %cst_44 : f32 to vector<1x256xf32>
      %182 = arith.select %49, %180, %181 : vector<1x256xi1>, vector<1x256xf32>
      %183 = vector.broadcast %179 : f32 to vector<1x256xf32>
      %184 = arith.mulf %183, %182 : vector<1x256xf32>
      %185 = arith.addf %178, %184 : vector<1x256xf32>
      %c17 = arith.constant 17 : index
      %186 = memref.load %arg2[%c17] : memref<98xf32, #tpu.memory_space<smem>>
      %187 = vector.extract_strided_slice %71 {offsets = [0, 112], sizes = [1, 256], strides = [1, 1]} : vector<1x512xf32> to vector<1x256xf32>
      %188 = vector.broadcast %186 : f32 to vector<1x256xf32>
      %189 = arith.mulf %188, %187 : vector<1x256xf32>
      %190 = arith.addf %185, %189 : vector<1x256xf32>
      %c18 = arith.constant 18 : index
      %191 = memref.load %arg2[%c18] : memref<98xf32, #tpu.memory_space<smem>>
      %192 = vector.extract_strided_slice %71 {offsets = [0, 113], sizes = [1, 256], strides = [1, 1]} : vector<1x512xf32> to vector<1x256xf32>
      %cst_45 = arith.constant 0.000000e+00 : f32
      %193 = vector.broadcast %cst_45 : f32 to vector<1x256xf32>
      %194 = arith.select %54, %192, %193 : vector<1x256xi1>, vector<1x256xf32>
      %195 = vector.broadcast %191 : f32 to vector<1x256xf32>
      %196 = arith.mulf %195, %194 : vector<1x256xf32>
      %197 = arith.addf %190, %196 : vector<1x256xf32>
      %c19 = arith.constant 19 : index
      %198 = memref.load %arg2[%c19] : memref<98xf32, #tpu.memory_space<smem>>
      %199 = vector.extract_strided_slice %71 {offsets = [0, 114], sizes = [1, 256], strides = [1, 1]} : vector<1x512xf32> to vector<1x256xf32>
      %cst_46 = arith.constant 0.000000e+00 : f32
      %200 = vector.broadcast %cst_46 : f32 to vector<1x256xf32>
      %201 = arith.select %59, %199, %200 : vector<1x256xi1>, vector<1x256xf32>
      %202 = vector.broadcast %198 : f32 to vector<1x256xf32>
      %203 = arith.mulf %202, %201 : vector<1x256xf32>
      %204 = arith.addf %197, %203 : vector<1x256xf32>
      %c20 = arith.constant 20 : index
      %205 = memref.load %arg2[%c20] : memref<98xf32, #tpu.memory_space<smem>>
      %206 = vector.extract_strided_slice %71 {offsets = [0, 115], sizes = [1, 256], strides = [1, 1]} : vector<1x512xf32> to vector<1x256xf32>
      %cst_47 = arith.constant 0.000000e+00 : f32
      %207 = vector.broadcast %cst_47 : f32 to vector<1x256xf32>
      %208 = arith.select %64, %206, %207 : vector<1x256xi1>, vector<1x256xf32>
      %209 = vector.broadcast %205 : f32 to vector<1x256xf32>
      %210 = arith.mulf %209, %208 : vector<1x256xf32>
      %211 = arith.addf %204, %210 : vector<1x256xf32>
      %212 = arith.addf %165, %211 : vector<1x256xf32>
      %c21 = arith.constant 21 : index
      %213 = memref.load %arg2[%c21] : memref<98xf32, #tpu.memory_space<smem>>
      %214 = vector.extract_strided_slice %71 {offsets = [0, 125], sizes = [1, 256], strides = [1, 1]} : vector<1x512xf32> to vector<1x256xf32>
      %cst_48 = arith.constant 0.000000e+00 : f32
      %215 = vector.broadcast %cst_48 : f32 to vector<1x256xf32>
      %216 = arith.select %39, %214, %215 : vector<1x256xi1>, vector<1x256xf32>
      %217 = vector.broadcast %213 : f32 to vector<1x256xf32>
      %218 = arith.mulf %217, %216 : vector<1x256xf32>
      %c22 = arith.constant 22 : index
      %219 = memref.load %arg2[%c22] : memref<98xf32, #tpu.memory_space<smem>>
      %220 = vector.extract_strided_slice %71 {offsets = [0, 126], sizes = [1, 256], strides = [1, 1]} : vector<1x512xf32> to vector<1x256xf32>
      %cst_49 = arith.constant 0.000000e+00 : f32
      %221 = vector.broadcast %cst_49 : f32 to vector<1x256xf32>
      %222 = arith.select %44, %220, %221 : vector<1x256xi1>, vector<1x256xf32>
      %223 = vector.broadcast %219 : f32 to vector<1x256xf32>
      %224 = arith.mulf %223, %222 : vector<1x256xf32>
      %225 = arith.addf %218, %224 : vector<1x256xf32>
      %c23 = arith.constant 23 : index
      %226 = memref.load %arg2[%c23] : memref<98xf32, #tpu.memory_space<smem>>
      %227 = vector.extract_strided_slice %71 {offsets = [0, 127], sizes = [1, 256], strides = [1, 1]} : vector<1x512xf32> to vector<1x256xf32>
      %cst_50 = arith.constant 0.000000e+00 : f32
      %228 = vector.broadcast %cst_50 : f32 to vector<1x256xf32>
      %229 = arith.select %49, %227, %228 : vector<1x256xi1>, vector<1x256xf32>
      %230 = vector.broadcast %226 : f32 to vector<1x256xf32>
      %231 = arith.mulf %230, %229 : vector<1x256xf32>
      %232 = arith.addf %225, %231 : vector<1x256xf32>
      %c24 = arith.constant 24 : index
      %233 = memref.load %arg2[%c24] : memref<98xf32, #tpu.memory_space<smem>>
      %234 = vector.extract_strided_slice %71 {offsets = [0, 128], sizes = [1, 256], strides = [1, 1]} : vector<1x512xf32> to vector<1x256xf32>
      %235 = vector.broadcast %233 : f32 to vector<1x256xf32>
      %236 = arith.mulf %235, %234 : vector<1x256xf32>
      %237 = arith.addf %232, %236 : vector<1x256xf32>
      %c25 = arith.constant 25 : index
      %238 = memref.load %arg2[%c25] : memref<98xf32, #tpu.memory_space<smem>>
      %239 = vector.extract_strided_slice %71 {offsets = [0, 129], sizes = [1, 256], strides = [1, 1]} : vector<1x512xf32> to vector<1x256xf32>
      %cst_51 = arith.constant 0.000000e+00 : f32
      %240 = vector.broadcast %cst_51 : f32 to vector<1x256xf32>
      %241 = arith.select %54, %239, %240 : vector<1x256xi1>, vector<1x256xf32>
      %242 = vector.broadcast %238 : f32 to vector<1x256xf32>
      %243 = arith.mulf %242, %241 : vector<1x256xf32>
      %244 = arith.addf %237, %243 : vector<1x256xf32>
      %c26 = arith.constant 26 : index
      %245 = memref.load %arg2[%c26] : memref<98xf32, #tpu.memory_space<smem>>
      %246 = vector.extract_strided_slice %71 {offsets = [0, 130], sizes = [1, 256], strides = [1, 1]} : vector<1x512xf32> to vector<1x256xf32>
      %cst_52 = arith.constant 0.000000e+00 : f32
      %247 = vector.broadcast %cst_52 : f32 to vector<1x256xf32>
      %248 = arith.select %59, %246, %247 : vector<1x256xi1>, vector<1x256xf32>
      %249 = vector.broadcast %245 : f32 to vector<1x256xf32>
      %250 = arith.mulf %249, %248 : vector<1x256xf32>
      %251 = arith.addf %244, %250 : vector<1x256xf32>
      %c27 = arith.constant 27 : index
      %252 = memref.load %arg2[%c27] : memref<98xf32, #tpu.memory_space<smem>>
      %253 = vector.extract_strided_slice %71 {offsets = [0, 131], sizes = [1, 256], strides = [1, 1]} : vector<1x512xf32> to vector<1x256xf32>
      %cst_53 = arith.constant 0.000000e+00 : f32
      %254 = vector.broadcast %cst_53 : f32 to vector<1x256xf32>
      %255 = arith.select %64, %253, %254 : vector<1x256xi1>, vector<1x256xf32>
      %256 = vector.broadcast %252 : f32 to vector<1x256xf32>
      %257 = arith.mulf %256, %255 : vector<1x256xf32>
      %258 = arith.addf %251, %257 : vector<1x256xf32>
      %259 = arith.addf %212, %258 : vector<1x256xf32>
      %c28 = arith.constant 28 : index
      %260 = memref.load %arg2[%c28] : memref<98xf32, #tpu.memory_space<smem>>
      %261 = vector.extract_strided_slice %71 {offsets = [0, 141], sizes = [1, 256], strides = [1, 1]} : vector<1x512xf32> to vector<1x256xf32>
      %cst_54 = arith.constant 0.000000e+00 : f32
      %262 = vector.broadcast %cst_54 : f32 to vector<1x256xf32>
      %263 = arith.select %39, %261, %262 : vector<1x256xi1>, vector<1x256xf32>
      %264 = vector.broadcast %260 : f32 to vector<1x256xf32>
      %265 = arith.mulf %264, %263 : vector<1x256xf32>
      %c29 = arith.constant 29 : index
      %266 = memref.load %arg2[%c29] : memref<98xf32, #tpu.memory_space<smem>>
      %267 = vector.extract_strided_slice %71 {offsets = [0, 142], sizes = [1, 256], strides = [1, 1]} : vector<1x512xf32> to vector<1x256xf32>
      %cst_55 = arith.constant 0.000000e+00 : f32
      %268 = vector.broadcast %cst_55 : f32 to vector<1x256xf32>
      %269 = arith.select %44, %267, %268 : vector<1x256xi1>, vector<1x256xf32>
      %270 = vector.broadcast %266 : f32 to vector<1x256xf32>
      %271 = arith.mulf %270, %269 : vector<1x256xf32>
      %272 = arith.addf %265, %271 : vector<1x256xf32>
      %c30 = arith.constant 30 : index
      %273 = memref.load %arg2[%c30] : memref<98xf32, #tpu.memory_space<smem>>
      %274 = vector.extract_strided_slice %71 {offsets = [0, 143], sizes = [1, 256], strides = [1, 1]} : vector<1x512xf32> to vector<1x256xf32>
      %cst_56 = arith.constant 0.000000e+00 : f32
      %275 = vector.broadcast %cst_56 : f32 to vector<1x256xf32>
      %276 = arith.select %49, %274, %275 : vector<1x256xi1>, vector<1x256xf32>
      %277 = vector.broadcast %273 : f32 to vector<1x256xf32>
      %278 = arith.mulf %277, %276 : vector<1x256xf32>
      %279 = arith.addf %272, %278 : vector<1x256xf32>
      %c31 = arith.constant 31 : index
      %280 = memref.load %arg2[%c31] : memref<98xf32, #tpu.memory_space<smem>>
      %281 = vector.extract_strided_slice %71 {offsets = [0, 144], sizes = [1, 256], strides = [1, 1]} : vector<1x512xf32> to vector<1x256xf32>
      %282 = vector.broadcast %280 : f32 to vector<1x256xf32>
      %283 = arith.mulf %282, %281 : vector<1x256xf32>
      %284 = arith.addf %279, %283 : vector<1x256xf32>
      %c32 = arith.constant 32 : index
      %285 = memref.load %arg2[%c32] : memref<98xf32, #tpu.memory_space<smem>>
      %286 = vector.extract_strided_slice %71 {offsets = [0, 145], sizes = [1, 256], strides = [1, 1]} : vector<1x512xf32> to vector<1x256xf32>
      %cst_57 = arith.constant 0.000000e+00 : f32
      %287 = vector.broadcast %cst_57 : f32 to vector<1x256xf32>
      %288 = arith.select %54, %286, %287 : vector<1x256xi1>, vector<1x256xf32>
      %289 = vector.broadcast %285 : f32 to vector<1x256xf32>
      %290 = arith.mulf %289, %288 : vector<1x256xf32>
      %291 = arith.addf %284, %290 : vector<1x256xf32>
      %c33 = arith.constant 33 : index
      %292 = memref.load %arg2[%c33] : memref<98xf32, #tpu.memory_space<smem>>
      %293 = vector.extract_strided_slice %71 {offsets = [0, 146], sizes = [1, 256], strides = [1, 1]} : vector<1x512xf32> to vector<1x256xf32>
      %cst_58 = arith.constant 0.000000e+00 : f32
      %294 = vector.broadcast %cst_58 : f32 to vector<1x256xf32>
      %295 = arith.select %59, %293, %294 : vector<1x256xi1>, vector<1x256xf32>
      %296 = vector.broadcast %292 : f32 to vector<1x256xf32>
      %297 = arith.mulf %296, %295 : vector<1x256xf32>
      %298 = arith.addf %291, %297 : vector<1x256xf32>
      %c34 = arith.constant 34 : index
      %299 = memref.load %arg2[%c34] : memref<98xf32, #tpu.memory_space<smem>>
      %300 = vector.extract_strided_slice %71 {offsets = [0, 147], sizes = [1, 256], strides = [1, 1]} : vector<1x512xf32> to vector<1x256xf32>
      %cst_59 = arith.constant 0.000000e+00 : f32
      %301 = vector.broadcast %cst_59 : f32 to vector<1x256xf32>
      %302 = arith.select %64, %300, %301 : vector<1x256xi1>, vector<1x256xf32>
      %303 = vector.broadcast %299 : f32 to vector<1x256xf32>
      %304 = arith.mulf %303, %302 : vector<1x256xf32>
      %305 = arith.addf %298, %304 : vector<1x256xf32>
      %306 = arith.addf %259, %305 : vector<1x256xf32>
      %c35 = arith.constant 35 : index
      %307 = memref.load %arg2[%c35] : memref<98xf32, #tpu.memory_space<smem>>
      %308 = vector.extract_strided_slice %71 {offsets = [0, 157], sizes = [1, 256], strides = [1, 1]} : vector<1x512xf32> to vector<1x256xf32>
      %cst_60 = arith.constant 0.000000e+00 : f32
      %309 = vector.broadcast %cst_60 : f32 to vector<1x256xf32>
      %310 = arith.select %39, %308, %309 : vector<1x256xi1>, vector<1x256xf32>
      %311 = vector.broadcast %307 : f32 to vector<1x256xf32>
      %312 = arith.mulf %311, %310 : vector<1x256xf32>
      %c36 = arith.constant 36 : index
      %313 = memref.load %arg2[%c36] : memref<98xf32, #tpu.memory_space<smem>>
      %314 = vector.extract_strided_slice %71 {offsets = [0, 158], sizes = [1, 256], strides = [1, 1]} : vector<1x512xf32> to vector<1x256xf32>
      %cst_61 = arith.constant 0.000000e+00 : f32
      %315 = vector.broadcast %cst_61 : f32 to vector<1x256xf32>
      %316 = arith.select %44, %314, %315 : vector<1x256xi1>, vector<1x256xf32>
      %317 = vector.broadcast %313 : f32 to vector<1x256xf32>
      %318 = arith.mulf %317, %316 : vector<1x256xf32>
      %319 = arith.addf %312, %318 : vector<1x256xf32>
      %c37 = arith.constant 37 : index
      %320 = memref.load %arg2[%c37] : memref<98xf32, #tpu.memory_space<smem>>
      %321 = vector.extract_strided_slice %71 {offsets = [0, 159], sizes = [1, 256], strides = [1, 1]} : vector<1x512xf32> to vector<1x256xf32>
      %cst_62 = arith.constant 0.000000e+00 : f32
      %322 = vector.broadcast %cst_62 : f32 to vector<1x256xf32>
      %323 = arith.select %49, %321, %322 : vector<1x256xi1>, vector<1x256xf32>
      %324 = vector.broadcast %320 : f32 to vector<1x256xf32>
      %325 = arith.mulf %324, %323 : vector<1x256xf32>
      %326 = arith.addf %319, %325 : vector<1x256xf32>
      %c38 = arith.constant 38 : index
      %327 = memref.load %arg2[%c38] : memref<98xf32, #tpu.memory_space<smem>>
      %328 = vector.extract_strided_slice %71 {offsets = [0, 160], sizes = [1, 256], strides = [1, 1]} : vector<1x512xf32> to vector<1x256xf32>
      %329 = vector.broadcast %327 : f32 to vector<1x256xf32>
      %330 = arith.mulf %329, %328 : vector<1x256xf32>
      %331 = arith.addf %326, %330 : vector<1x256xf32>
      %c39 = arith.constant 39 : index
      %332 = memref.load %arg2[%c39] : memref<98xf32, #tpu.memory_space<smem>>
      %333 = vector.extract_strided_slice %71 {offsets = [0, 161], sizes = [1, 256], strides = [1, 1]} : vector<1x512xf32> to vector<1x256xf32>
      %cst_63 = arith.constant 0.000000e+00 : f32
      %334 = vector.broadcast %cst_63 : f32 to vector<1x256xf32>
      %335 = arith.select %54, %333, %334 : vector<1x256xi1>, vector<1x256xf32>
      %336 = vector.broadcast %332 : f32 to vector<1x256xf32>
      %337 = arith.mulf %336, %335 : vector<1x256xf32>
      %338 = arith.addf %331, %337 : vector<1x256xf32>
      %c40 = arith.constant 40 : index
      %339 = memref.load %arg2[%c40] : memref<98xf32, #tpu.memory_space<smem>>
      %340 = vector.extract_strided_slice %71 {offsets = [0, 162], sizes = [1, 256], strides = [1, 1]} : vector<1x512xf32> to vector<1x256xf32>
      %cst_64 = arith.constant 0.000000e+00 : f32
      %341 = vector.broadcast %cst_64 : f32 to vector<1x256xf32>
      %342 = arith.select %59, %340, %341 : vector<1x256xi1>, vector<1x256xf32>
      %343 = vector.broadcast %339 : f32 to vector<1x256xf32>
      %344 = arith.mulf %343, %342 : vector<1x256xf32>
      %345 = arith.addf %338, %344 : vector<1x256xf32>
      %c41 = arith.constant 41 : index
      %346 = memref.load %arg2[%c41] : memref<98xf32, #tpu.memory_space<smem>>
      %347 = vector.extract_strided_slice %71 {offsets = [0, 163], sizes = [1, 256], strides = [1, 1]} : vector<1x512xf32> to vector<1x256xf32>
      %cst_65 = arith.constant 0.000000e+00 : f32
      %348 = vector.broadcast %cst_65 : f32 to vector<1x256xf32>
      %349 = arith.select %64, %347, %348 : vector<1x256xi1>, vector<1x256xf32>
      %350 = vector.broadcast %346 : f32 to vector<1x256xf32>
      %351 = arith.mulf %350, %349 : vector<1x256xf32>
      %352 = arith.addf %345, %351 : vector<1x256xf32>
      %353 = arith.addf %306, %352 : vector<1x256xf32>
      %c42 = arith.constant 42 : index
      %354 = memref.load %arg2[%c42] : memref<98xf32, #tpu.memory_space<smem>>
      %355 = vector.extract_strided_slice %71 {offsets = [0, 173], sizes = [1, 256], strides = [1, 1]} : vector<1x512xf32> to vector<1x256xf32>
      %cst_66 = arith.constant 0.000000e+00 : f32
      %356 = vector.broadcast %cst_66 : f32 to vector<1x256xf32>
      %357 = arith.select %39, %355, %356 : vector<1x256xi1>, vector<1x256xf32>
      %358 = vector.broadcast %354 : f32 to vector<1x256xf32>
      %359 = arith.mulf %358, %357 : vector<1x256xf32>
      %c43 = arith.constant 43 : index
      %360 = memref.load %arg2[%c43] : memref<98xf32, #tpu.memory_space<smem>>
      %361 = vector.extract_strided_slice %71 {offsets = [0, 174], sizes = [1, 256], strides = [1, 1]} : vector<1x512xf32> to vector<1x256xf32>
      %cst_67 = arith.constant 0.000000e+00 : f32
      %362 = vector.broadcast %cst_67 : f32 to vector<1x256xf32>
      %363 = arith.select %44, %361, %362 : vector<1x256xi1>, vector<1x256xf32>
      %364 = vector.broadcast %360 : f32 to vector<1x256xf32>
      %365 = arith.mulf %364, %363 : vector<1x256xf32>
      %366 = arith.addf %359, %365 : vector<1x256xf32>
      %c44 = arith.constant 44 : index
      %367 = memref.load %arg2[%c44] : memref<98xf32, #tpu.memory_space<smem>>
      %368 = vector.extract_strided_slice %71 {offsets = [0, 175], sizes = [1, 256], strides = [1, 1]} : vector<1x512xf32> to vector<1x256xf32>
      %cst_68 = arith.constant 0.000000e+00 : f32
      %369 = vector.broadcast %cst_68 : f32 to vector<1x256xf32>
      %370 = arith.select %49, %368, %369 : vector<1x256xi1>, vector<1x256xf32>
      %371 = vector.broadcast %367 : f32 to vector<1x256xf32>
      %372 = arith.mulf %371, %370 : vector<1x256xf32>
      %373 = arith.addf %366, %372 : vector<1x256xf32>
      %c45 = arith.constant 45 : index
      %374 = memref.load %arg2[%c45] : memref<98xf32, #tpu.memory_space<smem>>
      %375 = vector.extract_strided_slice %71 {offsets = [0, 176], sizes = [1, 256], strides = [1, 1]} : vector<1x512xf32> to vector<1x256xf32>
      %376 = vector.broadcast %374 : f32 to vector<1x256xf32>
      %377 = arith.mulf %376, %375 : vector<1x256xf32>
      %378 = arith.addf %373, %377 : vector<1x256xf32>
      %c46 = arith.constant 46 : index
      %379 = memref.load %arg2[%c46] : memref<98xf32, #tpu.memory_space<smem>>
      %380 = vector.extract_strided_slice %71 {offsets = [0, 177], sizes = [1, 256], strides = [1, 1]} : vector<1x512xf32> to vector<1x256xf32>
      %cst_69 = arith.constant 0.000000e+00 : f32
      %381 = vector.broadcast %cst_69 : f32 to vector<1x256xf32>
      %382 = arith.select %54, %380, %381 : vector<1x256xi1>, vector<1x256xf32>
      %383 = vector.broadcast %379 : f32 to vector<1x256xf32>
      %384 = arith.mulf %383, %382 : vector<1x256xf32>
      %385 = arith.addf %378, %384 : vector<1x256xf32>
      %c47 = arith.constant 47 : index
      %386 = memref.load %arg2[%c47] : memref<98xf32, #tpu.memory_space<smem>>
      %387 = vector.extract_strided_slice %71 {offsets = [0, 178], sizes = [1, 256], strides = [1, 1]} : vector<1x512xf32> to vector<1x256xf32>
      %cst_70 = arith.constant 0.000000e+00 : f32
      %388 = vector.broadcast %cst_70 : f32 to vector<1x256xf32>
      %389 = arith.select %59, %387, %388 : vector<1x256xi1>, vector<1x256xf32>
      %390 = vector.broadcast %386 : f32 to vector<1x256xf32>
      %391 = arith.mulf %390, %389 : vector<1x256xf32>
      %392 = arith.addf %385, %391 : vector<1x256xf32>
      %c48 = arith.constant 48 : index
      %393 = memref.load %arg2[%c48] : memref<98xf32, #tpu.memory_space<smem>>
      %394 = vector.extract_strided_slice %71 {offsets = [0, 179], sizes = [1, 256], strides = [1, 1]} : vector<1x512xf32> to vector<1x256xf32>
      %cst_71 = arith.constant 0.000000e+00 : f32
      %395 = vector.broadcast %cst_71 : f32 to vector<1x256xf32>
      %396 = arith.select %64, %394, %395 : vector<1x256xi1>, vector<1x256xf32>
      %397 = vector.broadcast %393 : f32 to vector<1x256xf32>
      %398 = arith.mulf %397, %396 : vector<1x256xf32>
      %399 = arith.addf %392, %398 : vector<1x256xf32>
      %400 = arith.addf %353, %399 : vector<1x256xf32>
      %cst_72 = arith.constant 0.000000e+00 : f32
      %401 = vector.broadcast %cst_72 : f32 to vector<1x128xf32>
      %c0_73 = arith.constant 0 : index
      %c0_74 = arith.constant 0 : index
      %402 = vector.load %arg8[%c0_73, %c0_74] : memref<1x512xf32, #tpu.memory_space<vmem>>, vector<1x128xf32>
      tpu.vector_store %arg8[%c0_73, %c0_74], %401 {strides = array<i32>} : memref<1x512xf32, #tpu.memory_space<vmem>>, vector<1x128xf32>,
      %cst_75 = arith.constant 0.000000e+00 : f32
      %403 = vector.broadcast %cst_75 : f32 to vector<1x128xf32>
      %c0_76 = arith.constant 0 : index
      %c384_77 = arith.constant 384 : index
      %404 = vector.load %arg8[%c0_76, %c384_77] : memref<1x512xf32, #tpu.memory_space<vmem>>, vector<1x128xf32>
      tpu.vector_store %arg8[%c0_76, %c384_77], %403 {strides = array<i32>} : memref<1x512xf32, #tpu.memory_space<vmem>>, vector<1x128xf32>,
      %c0_78 = arith.constant 0 : index
      %c128_79 = arith.constant 128 : index
      %405 = vector.load %arg8[%c0_78, %c128_79] : memref<1x512xf32, #tpu.memory_space<vmem>>, vector<1x256xf32>
      tpu.vector_store %arg8[%c0_78, %c128_79], %12 {strides = array<i32>} : memref<1x512xf32, #tpu.memory_space<vmem>>, vector<1x256xf32>,
      %c0_80 = arith.constant 0 : index
      %c0_81 = arith.constant 0 : index
      %406 = vector.load %arg8[%c0_80, %c0_81] : memref<1x512xf32, #tpu.memory_space<vmem>>, vector<1x512xf32>
      %c49 = arith.constant 49 : index
      %407 = memref.load %arg2[%c49] : memref<98xf32, #tpu.memory_space<smem>>
      %408 = vector.extract_strided_slice %406 {offsets = [0, 77], sizes = [1, 256], strides = [1, 1]} : vector<1x512xf32> to vector<1x256xf32>
      %cst_82 = arith.constant 0.000000e+00 : f32
      %409 = vector.broadcast %cst_82 : f32 to vector<1x256xf32>
      %410 = arith.select %39, %408, %409 : vector<1x256xi1>, vector<1x256xf32>
      %411 = vector.broadcast %407 : f32 to vector<1x256xf32>
      %412 = arith.mulf %411, %410 : vector<1x256xf32>
      %c50 = arith.constant 50 : index
      %413 = memref.load %arg2[%c50] : memref<98xf32, #tpu.memory_space<smem>>
      %414 = vector.extract_strided_slice %406 {offsets = [0, 78], sizes = [1, 256], strides = [1, 1]} : vector<1x512xf32> to vector<1x256xf32>
      %cst_83 = arith.constant 0.000000e+00 : f32
      %415 = vector.broadcast %cst_83 : f32 to vector<1x256xf32>
      %416 = arith.select %44, %414, %415 : vector<1x256xi1>, vector<1x256xf32>
      %417 = vector.broadcast %413 : f32 to vector<1x256xf32>
      %418 = arith.mulf %417, %416 : vector<1x256xf32>
      %419 = arith.addf %412, %418 : vector<1x256xf32>
      %c51 = arith.constant 51 : index
      %420 = memref.load %arg2[%c51] : memref<98xf32, #tpu.memory_space<smem>>
      %421 = vector.extract_strided_slice %406 {offsets = [0, 79], sizes = [1, 256], strides = [1, 1]} : vector<1x512xf32> to vector<1x256xf32>
      %cst_84 = arith.constant 0.000000e+00 : f32
      %422 = vector.broadcast %cst_84 : f32 to vector<1x256xf32>
      %423 = arith.select %49, %421, %422 : vector<1x256xi1>, vector<1x256xf32>
      %424 = vector.broadcast %420 : f32 to vector<1x256xf32>
      %425 = arith.mulf %424, %423 : vector<1x256xf32>
      %426 = arith.addf %419, %425 : vector<1x256xf32>
      %c52 = arith.constant 52 : index
      %427 = memref.load %arg2[%c52] : memref<98xf32, #tpu.memory_space<smem>>
      %428 = vector.extract_strided_slice %406 {offsets = [0, 80], sizes = [1, 256], strides = [1, 1]} : vector<1x512xf32> to vector<1x256xf32>
      %429 = vector.broadcast %427 : f32 to vector<1x256xf32>
      %430 = arith.mulf %429, %428 : vector<1x256xf32>
      %431 = arith.addf %426, %430 : vector<1x256xf32>
      %c53 = arith.constant 53 : index
      %432 = memref.load %arg2[%c53] : memref<98xf32, #tpu.memory_space<smem>>
      %433 = vector.extract_strided_slice %406 {offsets = [0, 81], sizes = [1, 256], strides = [1, 1]} : vector<1x512xf32> to vector<1x256xf32>
      %cst_85 = arith.constant 0.000000e+00 : f32
      %434 = vector.broadcast %cst_85 : f32 to vector<1x256xf32>
      %435 = arith.select %54, %433, %434 : vector<1x256xi1>, vector<1x256xf32>
      %436 = vector.broadcast %432 : f32 to vector<1x256xf32>
      %437 = arith.mulf %436, %435 : vector<1x256xf32>
      %438 = arith.addf %431, %437 : vector<1x256xf32>
      %c54 = arith.constant 54 : index
      %439 = memref.load %arg2[%c54] : memref<98xf32, #tpu.memory_space<smem>>
      %440 = vector.extract_strided_slice %406 {offsets = [0, 82], sizes = [1, 256], strides = [1, 1]} : vector<1x512xf32> to vector<1x256xf32>
      %cst_86 = arith.constant 0.000000e+00 : f32
      %441 = vector.broadcast %cst_86 : f32 to vector<1x256xf32>
      %442 = arith.select %59, %440, %441 : vector<1x256xi1>, vector<1x256xf32>
      %443 = vector.broadcast %439 : f32 to vector<1x256xf32>
      %444 = arith.mulf %443, %442 : vector<1x256xf32>
      %445 = arith.addf %438, %444 : vector<1x256xf32>
      %c55 = arith.constant 55 : index
      %446 = memref.load %arg2[%c55] : memref<98xf32, #tpu.memory_space<smem>>
      %447 = vector.extract_strided_slice %406 {offsets = [0, 83], sizes = [1, 256], strides = [1, 1]} : vector<1x512xf32> to vector<1x256xf32>
      %cst_87 = arith.constant 0.000000e+00 : f32
      %448 = vector.broadcast %cst_87 : f32 to vector<1x256xf32>
      %449 = arith.select %64, %447, %448 : vector<1x256xi1>, vector<1x256xf32>
      %450 = vector.broadcast %446 : f32 to vector<1x256xf32>
      %451 = arith.mulf %450, %449 : vector<1x256xf32>
      %452 = arith.addf %445, %451 : vector<1x256xf32>
      %453 = arith.addf %400, %452 : vector<1x256xf32>
      %c56 = arith.constant 56 : index
      %454 = memref.load %arg2[%c56] : memref<98xf32, #tpu.memory_space<smem>>
      %455 = vector.extract_strided_slice %406 {offsets = [0, 93], sizes = [1, 256], strides = [1, 1]} : vector<1x512xf32> to vector<1x256xf32>
      %cst_88 = arith.constant 0.000000e+00 : f32
      %456 = vector.broadcast %cst_88 : f32 to vector<1x256xf32>
      %457 = arith.select %39, %455, %456 : vector<1x256xi1>, vector<1x256xf32>
      %458 = vector.broadcast %454 : f32 to vector<1x256xf32>
      %459 = arith.mulf %458, %457 : vector<1x256xf32>
      %c57 = arith.constant 57 : index
      %460 = memref.load %arg2[%c57] : memref<98xf32, #tpu.memory_space<smem>>
      %461 = vector.extract_strided_slice %406 {offsets = [0, 94], sizes = [1, 256], strides = [1, 1]} : vector<1x512xf32> to vector<1x256xf32>
      %cst_89 = arith.constant 0.000000e+00 : f32
      %462 = vector.broadcast %cst_89 : f32 to vector<1x256xf32>
      %463 = arith.select %44, %461, %462 : vector<1x256xi1>, vector<1x256xf32>
      %464 = vector.broadcast %460 : f32 to vector<1x256xf32>
      %465 = arith.mulf %464, %463 : vector<1x256xf32>
      %466 = arith.addf %459, %465 : vector<1x256xf32>
      %c58 = arith.constant 58 : index
      %467 = memref.load %arg2[%c58] : memref<98xf32, #tpu.memory_space<smem>>
      %468 = vector.extract_strided_slice %406 {offsets = [0, 95], sizes = [1, 256], strides = [1, 1]} : vector<1x512xf32> to vector<1x256xf32>
      %cst_90 = arith.constant 0.000000e+00 : f32
      %469 = vector.broadcast %cst_90 : f32 to vector<1x256xf32>
      %470 = arith.select %49, %468, %469 : vector<1x256xi1>, vector<1x256xf32>
      %471 = vector.broadcast %467 : f32 to vector<1x256xf32>
      %472 = arith.mulf %471, %470 : vector<1x256xf32>
      %473 = arith.addf %466, %472 : vector<1x256xf32>
      %c59 = arith.constant 59 : index
      %474 = memref.load %arg2[%c59] : memref<98xf32, #tpu.memory_space<smem>>
      %475 = vector.extract_strided_slice %406 {offsets = [0, 96], sizes = [1, 256], strides = [1, 1]} : vector<1x512xf32> to vector<1x256xf32>
      %476 = vector.broadcast %474 : f32 to vector<1x256xf32>
      %477 = arith.mulf %476, %475 : vector<1x256xf32>
      %478 = arith.addf %473, %477 : vector<1x256xf32>
      %c60 = arith.constant 60 : index
      %479 = memref.load %arg2[%c60] : memref<98xf32, #tpu.memory_space<smem>>
      %480 = vector.extract_strided_slice %406 {offsets = [0, 97], sizes = [1, 256], strides = [1, 1]} : vector<1x512xf32> to vector<1x256xf32>
      %cst_91 = arith.constant 0.000000e+00 : f32
      %481 = vector.broadcast %cst_91 : f32 to vector<1x256xf32>
      %482 = arith.select %54, %480, %481 : vector<1x256xi1>, vector<1x256xf32>
      %483 = vector.broadcast %479 : f32 to vector<1x256xf32>
      %484 = arith.mulf %483, %482 : vector<1x256xf32>
      %485 = arith.addf %478, %484 : vector<1x256xf32>
      %c61 = arith.constant 61 : index
      %486 = memref.load %arg2[%c61] : memref<98xf32, #tpu.memory_space<smem>>
      %487 = vector.extract_strided_slice %406 {offsets = [0, 98], sizes = [1, 256], strides = [1, 1]} : vector<1x512xf32> to vector<1x256xf32>
      %cst_92 = arith.constant 0.000000e+00 : f32
      %488 = vector.broadcast %cst_92 : f32 to vector<1x256xf32>
      %489 = arith.select %59, %487, %488 : vector<1x256xi1>, vector<1x256xf32>
      %490 = vector.broadcast %486 : f32 to vector<1x256xf32>
      %491 = arith.mulf %490, %489 : vector<1x256xf32>
      %492 = arith.addf %485, %491 : vector<1x256xf32>
      %c62 = arith.constant 62 : index
      %493 = memref.load %arg2[%c62] : memref<98xf32, #tpu.memory_space<smem>>
      %494 = vector.extract_strided_slice %406 {offsets = [0, 99], sizes = [1, 256], strides = [1, 1]} : vector<1x512xf32> to vector<1x256xf32>
      %cst_93 = arith.constant 0.000000e+00 : f32
      %495 = vector.broadcast %cst_93 : f32 to vector<1x256xf32>
      %496 = arith.select %64, %494, %495 : vector<1x256xi1>, vector<1x256xf32>
      %497 = vector.broadcast %493 : f32 to vector<1x256xf32>
      %498 = arith.mulf %497, %496 : vector<1x256xf32>
      %499 = arith.addf %492, %498 : vector<1x256xf32>
      %500 = arith.addf %453, %499 : vector<1x256xf32>
      %c63 = arith.constant 63 : index
      %501 = memref.load %arg2[%c63] : memref<98xf32, #tpu.memory_space<smem>>
      %502 = vector.extract_strided_slice %406 {offsets = [0, 109], sizes = [1, 256], strides = [1, 1]} : vector<1x512xf32> to vector<1x256xf32>
      %cst_94 = arith.constant 0.000000e+00 : f32
      %503 = vector.broadcast %cst_94 : f32 to vector<1x256xf32>
      %504 = arith.select %39, %502, %503 : vector<1x256xi1>, vector<1x256xf32>
      %505 = vector.broadcast %501 : f32 to vector<1x256xf32>
      %506 = arith.mulf %505, %504 : vector<1x256xf32>
      %c64 = arith.constant 64 : index
      %507 = memref.load %arg2[%c64] : memref<98xf32, #tpu.memory_space<smem>>
      %508 = vector.extract_strided_slice %406 {offsets = [0, 110], sizes = [1, 256], strides = [1, 1]} : vector<1x512xf32> to vector<1x256xf32>
      %cst_95 = arith.constant 0.000000e+00 : f32
      %509 = vector.broadcast %cst_95 : f32 to vector<1x256xf32>
      %510 = arith.select %44, %508, %509 : vector<1x256xi1>, vector<1x256xf32>
      %511 = vector.broadcast %507 : f32 to vector<1x256xf32>
      %512 = arith.mulf %511, %510 : vector<1x256xf32>
      %513 = arith.addf %506, %512 : vector<1x256xf32>
      %c65 = arith.constant 65 : index
      %514 = memref.load %arg2[%c65] : memref<98xf32, #tpu.memory_space<smem>>
      %515 = vector.extract_strided_slice %406 {offsets = [0, 111], sizes = [1, 256], strides = [1, 1]} : vector<1x512xf32> to vector<1x256xf32>
      %cst_96 = arith.constant 0.000000e+00 : f32
      %516 = vector.broadcast %cst_96 : f32 to vector<1x256xf32>
      %517 = arith.select %49, %515, %516 : vector<1x256xi1>, vector<1x256xf32>
      %518 = vector.broadcast %514 : f32 to vector<1x256xf32>
      %519 = arith.mulf %518, %517 : vector<1x256xf32>
      %520 = arith.addf %513, %519 : vector<1x256xf32>
      %c66 = arith.constant 66 : index
      %521 = memref.load %arg2[%c66] : memref<98xf32, #tpu.memory_space<smem>>
      %522 = vector.extract_strided_slice %406 {offsets = [0, 112], sizes = [1, 256], strides = [1, 1]} : vector<1x512xf32> to vector<1x256xf32>
      %523 = vector.broadcast %521 : f32 to vector<1x256xf32>
      %524 = arith.mulf %523, %522 : vector<1x256xf32>
      %525 = arith.addf %520, %524 : vector<1x256xf32>
      %c67 = arith.constant 67 : index
      %526 = memref.load %arg2[%c67] : memref<98xf32, #tpu.memory_space<smem>>
      %527 = vector.extract_strided_slice %406 {offsets = [0, 113], sizes = [1, 256], strides = [1, 1]} : vector<1x512xf32> to vector<1x256xf32>
      %cst_97 = arith.constant 0.000000e+00 : f32
      %528 = vector.broadcast %cst_97 : f32 to vector<1x256xf32>
      %529 = arith.select %54, %527, %528 : vector<1x256xi1>, vector<1x256xf32>
      %530 = vector.broadcast %526 : f32 to vector<1x256xf32>
      %531 = arith.mulf %530, %529 : vector<1x256xf32>
      %532 = arith.addf %525, %531 : vector<1x256xf32>
      %c68 = arith.constant 68 : index
      %533 = memref.load %arg2[%c68] : memref<98xf32, #tpu.memory_space<smem>>
      %534 = vector.extract_strided_slice %406 {offsets = [0, 114], sizes = [1, 256], strides = [1, 1]} : vector<1x512xf32> to vector<1x256xf32>
      %cst_98 = arith.constant 0.000000e+00 : f32
      %535 = vector.broadcast %cst_98 : f32 to vector<1x256xf32>
      %536 = arith.select %59, %534, %535 : vector<1x256xi1>, vector<1x256xf32>
      %537 = vector.broadcast %533 : f32 to vector<1x256xf32>
      %538 = arith.mulf %537, %536 : vector<1x256xf32>
      %539 = arith.addf %532, %538 : vector<1x256xf32>
      %c69 = arith.constant 69 : index
      %540 = memref.load %arg2[%c69] : memref<98xf32, #tpu.memory_space<smem>>
      %541 = vector.extract_strided_slice %406 {offsets = [0, 115], sizes = [1, 256], strides = [1, 1]} : vector<1x512xf32> to vector<1x256xf32>
      %cst_99 = arith.constant 0.000000e+00 : f32
      %542 = vector.broadcast %cst_99 : f32 to vector<1x256xf32>
      %543 = arith.select %64, %541, %542 : vector<1x256xi1>, vector<1x256xf32>
      %544 = vector.broadcast %540 : f32 to vector<1x256xf32>
      %545 = arith.mulf %544, %543 : vector<1x256xf32>
      %546 = arith.addf %539, %545 : vector<1x256xf32>
      %547 = arith.addf %500, %546 : vector<1x256xf32>
      %c70 = arith.constant 70 : index
      %548 = memref.load %arg2[%c70] : memref<98xf32, #tpu.memory_space<smem>>
      %549 = vector.extract_strided_slice %406 {offsets = [0, 125], sizes = [1, 256], strides = [1, 1]} : vector<1x512xf32> to vector<1x256xf32>
      %cst_100 = arith.constant 0.000000e+00 : f32
      %550 = vector.broadcast %cst_100 : f32 to vector<1x256xf32>
      %551 = arith.select %39, %549, %550 : vector<1x256xi1>, vector<1x256xf32>
      %552 = vector.broadcast %548 : f32 to vector<1x256xf32>
      %553 = arith.mulf %552, %551 : vector<1x256xf32>
      %c71 = arith.constant 71 : index
      %554 = memref.load %arg2[%c71] : memref<98xf32, #tpu.memory_space<smem>>
      %555 = vector.extract_strided_slice %406 {offsets = [0, 126], sizes = [1, 256], strides = [1, 1]} : vector<1x512xf32> to vector<1x256xf32>
      %cst_101 = arith.constant 0.000000e+00 : f32
      %556 = vector.broadcast %cst_101 : f32 to vector<1x256xf32>
      %557 = arith.select %44, %555, %556 : vector<1x256xi1>, vector<1x256xf32>
      %558 = vector.broadcast %554 : f32 to vector<1x256xf32>
      %559 = arith.mulf %558, %557 : vector<1x256xf32>
      %560 = arith.addf %553, %559 : vector<1x256xf32>
      %c72 = arith.constant 72 : index
      %561 = memref.load %arg2[%c72] : memref<98xf32, #tpu.memory_space<smem>>
      %562 = vector.extract_strided_slice %406 {offsets = [0, 127], sizes = [1, 256], strides = [1, 1]} : vector<1x512xf32> to vector<1x256xf32>
      %cst_102 = arith.constant 0.000000e+00 : f32
      %563 = vector.broadcast %cst_102 : f32 to vector<1x256xf32>
      %564 = arith.select %49, %562, %563 : vector<1x256xi1>, vector<1x256xf32>
      %565 = vector.broadcast %561 : f32 to vector<1x256xf32>
      %566 = arith.mulf %565, %564 : vector<1x256xf32>
      %567 = arith.addf %560, %566 : vector<1x256xf32>
      %c73 = arith.constant 73 : index
      %568 = memref.load %arg2[%c73] : memref<98xf32, #tpu.memory_space<smem>>
      %569 = vector.extract_strided_slice %406 {offsets = [0, 128], sizes = [1, 256], strides = [1, 1]} : vector<1x512xf32> to vector<1x256xf32>
      %570 = vector.broadcast %568 : f32 to vector<1x256xf32>
      %571 = arith.mulf %570, %569 : vector<1x256xf32>
      %572 = arith.addf %567, %571 : vector<1x256xf32>
      %c74 = arith.constant 74 : index
      %573 = memref.load %arg2[%c74] : memref<98xf32, #tpu.memory_space<smem>>
      %574 = vector.extract_strided_slice %406 {offsets = [0, 129], sizes = [1, 256], strides = [1, 1]} : vector<1x512xf32> to vector<1x256xf32>
      %cst_103 = arith.constant 0.000000e+00 : f32
      %575 = vector.broadcast %cst_103 : f32 to vector<1x256xf32>
      %576 = arith.select %54, %574, %575 : vector<1x256xi1>, vector<1x256xf32>
      %577 = vector.broadcast %573 : f32 to vector<1x256xf32>
      %578 = arith.mulf %577, %576 : vector<1x256xf32>
      %579 = arith.addf %572, %578 : vector<1x256xf32>
      %c75 = arith.constant 75 : index
      %580 = memref.load %arg2[%c75] : memref<98xf32, #tpu.memory_space<smem>>
      %581 = vector.extract_strided_slice %406 {offsets = [0, 130], sizes = [1, 256], strides = [1, 1]} : vector<1x512xf32> to vector<1x256xf32>
      %cst_104 = arith.constant 0.000000e+00 : f32
      %582 = vector.broadcast %cst_104 : f32 to vector<1x256xf32>
      %583 = arith.select %59, %581, %582 : vector<1x256xi1>, vector<1x256xf32>
      %584 = vector.broadcast %580 : f32 to vector<1x256xf32>
      %585 = arith.mulf %584, %583 : vector<1x256xf32>
      %586 = arith.addf %579, %585 : vector<1x256xf32>
      %c76 = arith.constant 76 : index
      %587 = memref.load %arg2[%c76] : memref<98xf32, #tpu.memory_space<smem>>
      %588 = vector.extract_strided_slice %406 {offsets = [0, 131], sizes = [1, 256], strides = [1, 1]} : vector<1x512xf32> to vector<1x256xf32>
      %cst_105 = arith.constant 0.000000e+00 : f32
      %589 = vector.broadcast %cst_105 : f32 to vector<1x256xf32>
      %590 = arith.select %64, %588, %589 : vector<1x256xi1>, vector<1x256xf32>
      %591 = vector.broadcast %587 : f32 to vector<1x256xf32>
      %592 = arith.mulf %591, %590 : vector<1x256xf32>
      %593 = arith.addf %586, %592 : vector<1x256xf32>
      %594 = arith.addf %547, %593 : vector<1x256xf32>
      %c77 = arith.constant 77 : index
      %595 = memref.load %arg2[%c77] : memref<98xf32, #tpu.memory_space<smem>>
      %596 = vector.extract_strided_slice %406 {offsets = [0, 141], sizes = [1, 256], strides = [1, 1]} : vector<1x512xf32> to vector<1x256xf32>
      %cst_106 = arith.constant 0.000000e+00 : f32
      %597 = vector.broadcast %cst_106 : f32 to vector<1x256xf32>
      %598 = arith.select %39, %596, %597 : vector<1x256xi1>, vector<1x256xf32>
      %599 = vector.broadcast %595 : f32 to vector<1x256xf32>
      %600 = arith.mulf %599, %598 : vector<1x256xf32>
      %c78 = arith.constant 78 : index
      %601 = memref.load %arg2[%c78] : memref<98xf32, #tpu.memory_space<smem>>
      %602 = vector.extract_strided_slice %406 {offsets = [0, 142], sizes = [1, 256], strides = [1, 1]} : vector<1x512xf32> to vector<1x256xf32>
      %cst_107 = arith.constant 0.000000e+00 : f32
      %603 = vector.broadcast %cst_107 : f32 to vector<1x256xf32>
      %604 = arith.select %44, %602, %603 : vector<1x256xi1>, vector<1x256xf32>
      %605 = vector.broadcast %601 : f32 to vector<1x256xf32>
      %606 = arith.mulf %605, %604 : vector<1x256xf32>
      %607 = arith.addf %600, %606 : vector<1x256xf32>
      %c79 = arith.constant 79 : index
      %608 = memref.load %arg2[%c79] : memref<98xf32, #tpu.memory_space<smem>>
      %609 = vector.extract_strided_slice %406 {offsets = [0, 143], sizes = [1, 256], strides = [1, 1]} : vector<1x512xf32> to vector<1x256xf32>
      %cst_108 = arith.constant 0.000000e+00 : f32
      %610 = vector.broadcast %cst_108 : f32 to vector<1x256xf32>
      %611 = arith.select %49, %609, %610 : vector<1x256xi1>, vector<1x256xf32>
      %612 = vector.broadcast %608 : f32 to vector<1x256xf32>
      %613 = arith.mulf %612, %611 : vector<1x256xf32>
      %614 = arith.addf %607, %613 : vector<1x256xf32>
      %c80 = arith.constant 80 : index
      %615 = memref.load %arg2[%c80] : memref<98xf32, #tpu.memory_space<smem>>
      %616 = vector.extract_strided_slice %406 {offsets = [0, 144], sizes = [1, 256], strides = [1, 1]} : vector<1x512xf32> to vector<1x256xf32>
      %617 = vector.broadcast %615 : f32 to vector<1x256xf32>
      %618 = arith.mulf %617, %616 : vector<1x256xf32>
      %619 = arith.addf %614, %618 : vector<1x256xf32>
      %c81 = arith.constant 81 : index
      %620 = memref.load %arg2[%c81] : memref<98xf32, #tpu.memory_space<smem>>
      %621 = vector.extract_strided_slice %406 {offsets = [0, 145], sizes = [1, 256], strides = [1, 1]} : vector<1x512xf32> to vector<1x256xf32>
      %cst_109 = arith.constant 0.000000e+00 : f32
      %622 = vector.broadcast %cst_109 : f32 to vector<1x256xf32>
      %623 = arith.select %54, %621, %622 : vector<1x256xi1>, vector<1x256xf32>
      %624 = vector.broadcast %620 : f32 to vector<1x256xf32>
      %625 = arith.mulf %624, %623 : vector<1x256xf32>
      %626 = arith.addf %619, %625 : vector<1x256xf32>
      %c82 = arith.constant 82 : index
      %627 = memref.load %arg2[%c82] : memref<98xf32, #tpu.memory_space<smem>>
      %628 = vector.extract_strided_slice %406 {offsets = [0, 146], sizes = [1, 256], strides = [1, 1]} : vector<1x512xf32> to vector<1x256xf32>
      %cst_110 = arith.constant 0.000000e+00 : f32
      %629 = vector.broadcast %cst_110 : f32 to vector<1x256xf32>
      %630 = arith.select %59, %628, %629 : vector<1x256xi1>, vector<1x256xf32>
      %631 = vector.broadcast %627 : f32 to vector<1x256xf32>
      %632 = arith.mulf %631, %630 : vector<1x256xf32>
      %633 = arith.addf %626, %632 : vector<1x256xf32>
      %c83 = arith.constant 83 : index
      %634 = memref.load %arg2[%c83] : memref<98xf32, #tpu.memory_space<smem>>
      %635 = vector.extract_strided_slice %406 {offsets = [0, 147], sizes = [1, 256], strides = [1, 1]} : vector<1x512xf32> to vector<1x256xf32>
      %cst_111 = arith.constant 0.000000e+00 : f32
      %636 = vector.broadcast %cst_111 : f32 to vector<1x256xf32>
      %637 = arith.select %64, %635, %636 : vector<1x256xi1>, vector<1x256xf32>
      %638 = vector.broadcast %634 : f32 to vector<1x256xf32>
      %639 = arith.mulf %638, %637 : vector<1x256xf32>
      %640 = arith.addf %633, %639 : vector<1x256xf32>
      %641 = arith.addf %594, %640 : vector<1x256xf32>
      %c84 = arith.constant 84 : index
      %642 = memref.load %arg2[%c84] : memref<98xf32, #tpu.memory_space<smem>>
      %643 = vector.extract_strided_slice %406 {offsets = [0, 157], sizes = [1, 256], strides = [1, 1]} : vector<1x512xf32> to vector<1x256xf32>
      %cst_112 = arith.constant 0.000000e+00 : f32
      %644 = vector.broadcast %cst_112 : f32 to vector<1x256xf32>
      %645 = arith.select %39, %643, %644 : vector<1x256xi1>, vector<1x256xf32>
      %646 = vector.broadcast %642 : f32 to vector<1x256xf32>
      %647 = arith.mulf %646, %645 : vector<1x256xf32>
      %c85 = arith.constant 85 : index
      %648 = memref.load %arg2[%c85] : memref<98xf32, #tpu.memory_space<smem>>
      %649 = vector.extract_strided_slice %406 {offsets = [0, 158], sizes = [1, 256], strides = [1, 1]} : vector<1x512xf32> to vector<1x256xf32>
      %cst_113 = arith.constant 0.000000e+00 : f32
      %650 = vector.broadcast %cst_113 : f32 to vector<1x256xf32>
      %651 = arith.select %44, %649, %650 : vector<1x256xi1>, vector<1x256xf32>
      %652 = vector.broadcast %648 : f32 to vector<1x256xf32>
      %653 = arith.mulf %652, %651 : vector<1x256xf32>
      %654 = arith.addf %647, %653 : vector<1x256xf32>
      %c86 = arith.constant 86 : index
      %655 = memref.load %arg2[%c86] : memref<98xf32, #tpu.memory_space<smem>>
      %656 = vector.extract_strided_slice %406 {offsets = [0, 159], sizes = [1, 256], strides = [1, 1]} : vector<1x512xf32> to vector<1x256xf32>
      %cst_114 = arith.constant 0.000000e+00 : f32
      %657 = vector.broadcast %cst_114 : f32 to vector<1x256xf32>
      %658 = arith.select %49, %656, %657 : vector<1x256xi1>, vector<1x256xf32>
      %659 = vector.broadcast %655 : f32 to vector<1x256xf32>
      %660 = arith.mulf %659, %658 : vector<1x256xf32>
      %661 = arith.addf %654, %660 : vector<1x256xf32>
      %c87 = arith.constant 87 : index
      %662 = memref.load %arg2[%c87] : memref<98xf32, #tpu.memory_space<smem>>
      %663 = vector.extract_strided_slice %406 {offsets = [0, 160], sizes = [1, 256], strides = [1, 1]} : vector<1x512xf32> to vector<1x256xf32>
      %664 = vector.broadcast %662 : f32 to vector<1x256xf32>
      %665 = arith.mulf %664, %663 : vector<1x256xf32>
      %666 = arith.addf %661, %665 : vector<1x256xf32>
      %c88 = arith.constant 88 : index
      %667 = memref.load %arg2[%c88] : memref<98xf32, #tpu.memory_space<smem>>
      %668 = vector.extract_strided_slice %406 {offsets = [0, 161], sizes = [1, 256], strides = [1, 1]} : vector<1x512xf32> to vector<1x256xf32>
      %cst_115 = arith.constant 0.000000e+00 : f32
      %669 = vector.broadcast %cst_115 : f32 to vector<1x256xf32>
      %670 = arith.select %54, %668, %669 : vector<1x256xi1>, vector<1x256xf32>
      %671 = vector.broadcast %667 : f32 to vector<1x256xf32>
      %672 = arith.mulf %671, %670 : vector<1x256xf32>
      %673 = arith.addf %666, %672 : vector<1x256xf32>
      %c89 = arith.constant 89 : index
      %674 = memref.load %arg2[%c89] : memref<98xf32, #tpu.memory_space<smem>>
      %675 = vector.extract_strided_slice %406 {offsets = [0, 162], sizes = [1, 256], strides = [1, 1]} : vector<1x512xf32> to vector<1x256xf32>
      %cst_116 = arith.constant 0.000000e+00 : f32
      %676 = vector.broadcast %cst_116 : f32 to vector<1x256xf32>
      %677 = arith.select %59, %675, %676 : vector<1x256xi1>, vector<1x256xf32>
      %678 = vector.broadcast %674 : f32 to vector<1x256xf32>
      %679 = arith.mulf %678, %677 : vector<1x256xf32>
      %680 = arith.addf %673, %679 : vector<1x256xf32>
      %c90 = arith.constant 90 : index
      %681 = memref.load %arg2[%c90] : memref<98xf32, #tpu.memory_space<smem>>
      %682 = vector.extract_strided_slice %406 {offsets = [0, 163], sizes = [1, 256], strides = [1, 1]} : vector<1x512xf32> to vector<1x256xf32>
      %cst_117 = arith.constant 0.000000e+00 : f32
      %683 = vector.broadcast %cst_117 : f32 to vector<1x256xf32>
      %684 = arith.select %64, %682, %683 : vector<1x256xi1>, vector<1x256xf32>
      %685 = vector.broadcast %681 : f32 to vector<1x256xf32>
      %686 = arith.mulf %685, %684 : vector<1x256xf32>
      %687 = arith.addf %680, %686 : vector<1x256xf32>
      %688 = arith.addf %641, %687 : vector<1x256xf32>
      %c91 = arith.constant 91 : index
      %689 = memref.load %arg2[%c91] : memref<98xf32, #tpu.memory_space<smem>>
      %690 = vector.extract_strided_slice %406 {offsets = [0, 173], sizes = [1, 256], strides = [1, 1]} : vector<1x512xf32> to vector<1x256xf32>
      %cst_118 = arith.constant 0.000000e+00 : f32
      %691 = vector.broadcast %cst_118 : f32 to vector<1x256xf32>
      %692 = arith.select %39, %690, %691 : vector<1x256xi1>, vector<1x256xf32>
      %693 = vector.broadcast %689 : f32 to vector<1x256xf32>
      %694 = arith.mulf %693, %692 : vector<1x256xf32>
      %c92 = arith.constant 92 : index
      %695 = memref.load %arg2[%c92] : memref<98xf32, #tpu.memory_space<smem>>
      %696 = vector.extract_strided_slice %406 {offsets = [0, 174], sizes = [1, 256], strides = [1, 1]} : vector<1x512xf32> to vector<1x256xf32>
      %cst_119 = arith.constant 0.000000e+00 : f32
      %697 = vector.broadcast %cst_119 : f32 to vector<1x256xf32>
      %698 = arith.select %44, %696, %697 : vector<1x256xi1>, vector<1x256xf32>
      %699 = vector.broadcast %695 : f32 to vector<1x256xf32>
      %700 = arith.mulf %699, %698 : vector<1x256xf32>
      %701 = arith.addf %694, %700 : vector<1x256xf32>
      %c93 = arith.constant 93 : index
      %702 = memref.load %arg2[%c93] : memref<98xf32, #tpu.memory_space<smem>>
      %703 = vector.extract_strided_slice %406 {offsets = [0, 175], sizes = [1, 256], strides = [1, 1]} : vector<1x512xf32> to vector<1x256xf32>
      %cst_120 = arith.constant 0.000000e+00 : f32
      %704 = vector.broadcast %cst_120 : f32 to vector<1x256xf32>
      %705 = arith.select %49, %703, %704 : vector<1x256xi1>, vector<1x256xf32>
      %706 = vector.broadcast %702 : f32 to vector<1x256xf32>
      %707 = arith.mulf %706, %705 : vector<1x256xf32>
      %708 = arith.addf %701, %707 : vector<1x256xf32>
      %c94 = arith.constant 94 : index
      %709 = memref.load %arg2[%c94] : memref<98xf32, #tpu.memory_space<smem>>
      %710 = vector.extract_strided_slice %406 {offsets = [0, 176], sizes = [1, 256], strides = [1, 1]} : vector<1x512xf32> to vector<1x256xf32>
      %711 = vector.broadcast %709 : f32 to vector<1x256xf32>
      %712 = arith.mulf %711, %710 : vector<1x256xf32>
      %713 = arith.addf %708, %712 : vector<1x256xf32>
      %c95 = arith.constant 95 : index
      %714 = memref.load %arg2[%c95] : memref<98xf32, #tpu.memory_space<smem>>
      %715 = vector.extract_strided_slice %406 {offsets = [0, 177], sizes = [1, 256], strides = [1, 1]} : vector<1x512xf32> to vector<1x256xf32>
      %cst_121 = arith.constant 0.000000e+00 : f32
      %716 = vector.broadcast %cst_121 : f32 to vector<1x256xf32>
      %717 = arith.select %54, %715, %716 : vector<1x256xi1>, vector<1x256xf32>
      %718 = vector.broadcast %714 : f32 to vector<1x256xf32>
      %719 = arith.mulf %718, %717 : vector<1x256xf32>
      %720 = arith.addf %713, %719 : vector<1x256xf32>
      %c96 = arith.constant 96 : index
      %721 = memref.load %arg2[%c96] : memref<98xf32, #tpu.memory_space<smem>>
      %722 = vector.extract_strided_slice %406 {offsets = [0, 178], sizes = [1, 256], strides = [1, 1]} : vector<1x512xf32> to vector<1x256xf32>
      %cst_122 = arith.constant 0.000000e+00 : f32
      %723 = vector.broadcast %cst_122 : f32 to vector<1x256xf32>
      %724 = arith.select %59, %722, %723 : vector<1x256xi1>, vector<1x256xf32>
      %725 = vector.broadcast %721 : f32 to vector<1x256xf32>
      %726 = arith.mulf %725, %724 : vector<1x256xf32>
      %727 = arith.addf %720, %726 : vector<1x256xf32>
      %c97 = arith.constant 97 : index
      %728 = memref.load %arg2[%c97] : memref<98xf32, #tpu.memory_space<smem>>
      %729 = vector.extract_strided_slice %406 {offsets = [0, 179], sizes = [1, 256], strides = [1, 1]} : vector<1x512xf32> to vector<1x256xf32>
      %cst_123 = arith.constant 0.000000e+00 : f32
      %730 = vector.broadcast %cst_123 : f32 to vector<1x256xf32>
      %731 = arith.select %64, %729, %730 : vector<1x256xi1>, vector<1x256xf32>
      %732 = vector.broadcast %728 : f32 to vector<1x256xf32>
      %733 = arith.mulf %732, %731 : vector<1x256xf32>
      %734 = arith.addf %727, %733 : vector<1x256xf32>
      %735 = arith.addf %688, %734 : vector<1x256xf32>
      %cst_124 = arith.constant 5.000000e-01 : f32
      %736 = vector.broadcast %cst_124 : f32 to vector<1x256xf32>
      %737 = arith.mulf %736, %735 : vector<1x256xf32>
      %738 = math.tanh %737 : vector<1x256xf32>
      %cst_125 = arith.constant 5.000000e-01 : f32
      %739 = vector.broadcast %cst_125 : f32 to vector<1x256xf32>
      %740 = arith.mulf %739, %738 : vector<1x256xf32>
      %cst_126 = arith.constant 5.000000e-01 : f32
      %741 = vector.broadcast %cst_126 : f32 to vector<1x256xf32>
      %742 = arith.addf %740, %741 : vector<1x256xf32>
      %743 = vector.extract_strided_slice %742 {offsets = [0, 0], sizes = [1, 256], strides = [1, 1]} : vector<1x256xf32> to vector<1x256xf32>
      %c0_127 = arith.constant 0 : index
      %c0_128 = arith.constant 0 : index
      %c0_129 = arith.constant 0 : index
      %744 = vector.load %arg4[%c0_127, %c0_128, %c0_129] : memref<1x1x256xf32, #tpu.memory_space<vmem>>, vector<1x1x256xf32>
      %745 = vector.shape_cast %744 : vector<1x1x256xf32> to vector<1x256xf32>
      %746 = vector.shape_cast %743 : vector<1x256xf32> to vector<1x1x256xf32>
      tpu.vector_store %arg4[%c0_127, %c0_128, %c0_129], %746 {strides = array<i32>} : memref<1x1x256xf32, #tpu.memory_space<vmem>>, vector<1x1x256xf32>,
    } else {
    }
    return
  }
  func.func @transform_0(%arg0: i32, %arg1: i32) -> i32 {
    %c0_i32 = arith.constant 0 : i32
    %c0_i32_0 = arith.constant 0 : i32
    return %c0_i32 : i32
  }
  func.func @transform_1(%arg0: i32, %arg1: i32) -> (i32, i32, i32) {
    %c0_i32 = arith.constant 0 : i32
    %c0_i32_0 = arith.constant 0 : i32
    return %arg0, %arg1, %c0_i32 : i32, i32, i32
  }
  func.func @transform_2(%arg0: i32, %arg1: i32) -> (i32, i32, i32) {
    %c0_i32 = arith.constant 0 : i32
    %c0_i32_0 = arith.constant 0 : i32
    %c0_i32_1 = arith.constant 0 : i32
    return %arg0, %c0_i32, %c0_i32_0 : i32, i32, i32
  }
}

</mosaic_0001>

<llo_original>
// kernel: tpu_custom_call.1
$region0: #{tpu_custom_call.1}
  #allocation0 [shape = 'u32[]', space=smem, size = 0x4, offset = 0x4, fixed_abs, tag = 'smem constant byte address 0x4 - core index']
  #allocation1 [shape = 'u32[144,128]{1,0:T(1,128)}', space=vmem, size = 0x12000, scoped, tag = 'internal scratch']
  #allocation2 [shape = 'f32[1,256]{1,0:T(1,128)}', space=vmem, size = 0x400, scoped, tag = 'scratch operand']
  #allocation3 [shape = 'f32[1,256]{1,0:T(1,128)}', space=vmem, size = 0x400, scoped, tag = 'scratch operand']
  #allocation4 [shape = 'f32[1,512]{1,0:T(1,128)}', space=vmem, size = 0x800, scoped, tag = 'scratch operand']
  #allocation5 [shape = 'f32[1,512]{1,0:T(1,128)}', space=vmem, size = 0x800, scoped, tag = 'scratch operand']
  %s0 = inlined_call_operand.hbm [shape: f32[98], index: 0, kind: input, shape index: {}]
  %s1 = inlined_call_operand.hbm [shape: f32[2,4,256], index: 1, kind: input, shape index: {}]
  %s2 = inlined_call_operand.hbm [shape: f32[2,1,256], index: 2, kind: output, shape index: {}]
  %s3 = sld [smem:[#allocation0]]
  $region57: #{tpu_custom_call.1} parent=0
    _
  %s5 = ssub.s32 1, %s3
  %s6 = scalar_select 0, %s5, %s3
  $region1: #{tpu_custom_call.1} parent=0
    #allocation6 [shape = 'u8[512]{0}', space=smem, size = 0x200, scoped, tag = 'input window, operand 0, single buffered']
    #allocation7 [shape = 's32[2]{0}', space=sflag, size = 0x8, scoped, tag = 'scoped memory for tpu_custom_call.1']
    #allocation8 [shape = 's32[2]{0}', space=sflag, size = 0x8, scoped, tag = 'scoped memory for tpu_custom_call.1']
    #allocation9 [shape = 's32[2]{0}', space=sflag, size = 0x8, scoped, tag = 'scoped memory for tpu_custom_call.1']
    #allocation10 [shape = 'u8[8192]{0}', space=vmem, size = 0x2000, scoped, tag = 'input window, operand 1']
    #allocation11 [shape = 'u8[2048]{0}', space=vmem, size = 0x800, scoped, tag = 'output window, operand 0']
    %7 = vsyncpa [#allocation9], 0
    %8 = vsyncpa [#allocation7], 0
    %s9 = scalar_lea.sflag [#allocation7], 1
    %10 = vsyncpa %s9, 0
    %11 = vsyncpa [#allocation8], 0
    %s12 = scalar_lea.sflag [#allocation8], 1
    %13 = vsyncpa %s12, 0
    loop: start=0, step=1, limit=4
    $region2: #{tpu_custom_call.1} parent=1 // loop_pre_header
      _
    $region3: #{tpu_custom_call.1} parent=1 // loop_header
      %s15 = sphi 0, %s19
      %p16 = scmp.ge.s32.totalorder %s15, 4
      %s22 = sphi 0, %s34
      %s23 = sphi 0, %s30
      %s24 = sphi 0, %s22
      %s25 = sphi 0, %s23
      %s26 = sphi 0, %s24
      %s27 = sphi 0, %s25
      %s35 = sphi 0, %s35
      %s37 = sphi 0, %s35
      %s38 = sphi 0, %s37
      %s52 = sphi 0, %s38
      %s60 = sphi 0, %s62
      %s63 = sphi 0, %s60
      %s64 = sphi 0, %s63
      %s80 = sphi 0, %s64
      %s86 = sphi 0, %s88
      %s89 = sphi 0, %s86
      %s90 = sphi 0, %s89
      %s106 = sphi 0, %s90
    $region4: #{tpu_custom_call.1} parent=1 // loop_header_branch
      %18 = sbr.rel (%p16) target = $region8
    $region5: #{tpu_custom_call.1} parent=1 // loop_body
      %s20 = ssub.s32 %s15, 1
      %s21 = ssub.s32 %s15, 2
      %s28 = sadd.s32 1, %s23
      %p29 = scmp.ge.s32.totalorder %s28, 1
      %s30 = scalar_select %p29, 0, %s28
      %s31 = sadd.s32 1, %s22
      %s32 = scalar_select %p29, %s31, %s22
      %p33 = scmp.ge.s32.totalorder %s32, 2
      %s34 = scalar_select %p33, 0, %s32
      %s36 = sadd.s32 %s35, 1
      %p39 = scmp.eq.s32.totalorder %s15, 1
      %p40 = scmp.ne.s32.totalorder %s35, %s37
      %p41 = scmp.eq.s32.totalorder %s15, 0
      %p42 = por %p40, %p41
      %p43 = scmp.ne.s32.totalorder %s35, %s37
      %p44 = scmp.eq.s32.totalorder %s20, 1
      %p45 = por %p43, %p44
      %p46 = scmp.ne.s32.totalorder %s37, %s38
      %p47 = scmp.eq.s32.totalorder %s20, 0
      %p48 = por %p46, %p47
      %p49 = scmp.ne.s32.totalorder %s37, %s38
      %p50 = scmp.eq.s32.totalorder %s21, 1
      %p51 = por %p49, %p50
      %p53 = scmp.ne.s32.totalorder %s38, %s52
      %p54 = scmp.eq.s32.totalorder %s21, 0
      %p55 = por %p53, %p54
      %s56 = ssub.s32 %s22, %s34
      %s57 = ssub.s32 %s23, %s30
      %s58 = sor.u32 %s56, %s57
      %p59 = scmp.eq.s32.totalorder %s58, 0
      %s61 = sadd.s32 %s60, 1
      %s62 = scalar_select %p59, %s60, %s61
      %p65 = pneg %p59
      %p66 = scmp.eq.s32.totalorder %s15, 1
      %p67 = por %p65, %p66
      %p68 = scmp.ne.s32.totalorder %s60, %s63
      %p69 = scmp.eq.s32.totalorder %s15, 0
      %p70 = por %p68, %p69
      %p71 = scmp.ne.s32.totalorder %s60, %s63
      %p72 = scmp.eq.s32.totalorder %s20, 1
      %p73 = por %p71, %p72
      %p74 = scmp.ne.s32.totalorder %s63, %s64
      %p75 = scmp.eq.s32.totalorder %s20, 0
      %p76 = por %p74, %p75
      %p77 = scmp.ne.s32.totalorder %s63, %s64
      %p78 = scmp.eq.s32.totalorder %s21, 1
      %p79 = por %p77, %p78
      %p81 = scmp.ne.s32.totalorder %s64, %s80
      %p82 = scmp.eq.s32.totalorder %s21, 0
      %p83 = por %p81, %p82
      %s84 = ssub.s32 %s22, %s34
      %p85 = scmp.eq.s32.totalorder %s84, 0
      %s87 = sadd.s32 %s86, 1
      %s88 = scalar_select %p85, %s86, %s87
      %p91 = pneg %p85
      %p92 = scmp.eq.s32.totalorder %s15, 1
      %p93 = por %p91, %p92
      %p94 = scmp.ne.s32.totalorder %s86, %s89
      %p95 = scmp.eq.s32.totalorder %s15, 0
      %p96 = por %p94, %p95
      %p97 = scmp.ne.s32.totalorder %s86, %s89
      %p98 = scmp.eq.s32.totalorder %s20, 1
      %p99 = por %p97, %p98
      %p100 = scmp.ne.s32.totalorder %s89, %s90
      %p101 = scmp.eq.s32.totalorder %s20, 0
      %p102 = por %p100, %p101
      %p103 = scmp.ne.s32.totalorder %s89, %s90
      %p104 = scmp.eq.s32.totalorder %s21, 1
      %p105 = por %p103, %p104
      %p107 = scmp.ne.s32.totalorder %s90, %s106
      %p108 = scmp.eq.s32.totalorder %s21, 0
      %p109 = por %p107, %p108
      %p110 = scmp.le.s32.totalorder 1, %s15
      %p111 = scmp.lt.s32.totalorder %s15, 3
      %p112 = pnand %p110, %p111
      %p113 = pneg %p112
      // Predicated region
      $region9: #{tpu_custom_call.1} parent=5 // pred_check
        _
      $region10: #{tpu_custom_call.1} parent=5 // pred_check_branch
        %115 = sbr.rel (%p112) target = $region12
      $region11: #{tpu_custom_call.1} parent=5 // pred_region
        %s116 = ssub.s32 %s15, 1
        // Predicated region
        $region13: #{tpu_custom_call.1} parent=11 // pred_check
          %p117 = pneg %p48
        $region14: #{tpu_custom_call.1} parent=11 // pred_check_branch
          %119 = sbr.rel (%p117) target = $region16
        $region15: #{tpu_custom_call.1} parent=11 // pred_region
          %s121 = ssub.s32 16, 16
          %122 = vsyncadd [#allocation9], %s121
          %125 = dma.hbm_to_smem %s0, 16, [#allocation6], [#allocation9]
        $region16: #{tpu_custom_call.1} parent=11 // pred_fallthru
          _
      $region12: #{tpu_custom_call.1} parent=5 // pred_fallthru
        _
      %p126 = scmp.lt.s32.totalorder %s15, 2
      // Predicated region
      $region17: #{tpu_custom_call.1} parent=5 // pred_check
        %p127 = pneg %p126
      $region18: #{tpu_custom_call.1} parent=5 // pred_check_branch
        %129 = sbr.rel (%p127) target = $region20
      $region19: #{tpu_custom_call.1} parent=5 // pred_region
        // Predicated region
        $region21: #{tpu_custom_call.1} parent=19 // pred_check
          %p130 = pneg %p70
        $region22: #{tpu_custom_call.1} parent=19 // pred_check_branch
          %132 = sbr.rel (%p130) target = $region24
        $region23: #{tpu_custom_call.1} parent=19 // pred_region
          %s133 = sand.u32 %s60, 1
          %s134 = scalar_lea.sflag [#allocation7], %s133
          %s135 = sand.u32 %s60, 1
          %s136 = smul.addr %s135, 8
          %s137 = scalar_lea.vmem [#allocation10], %s136
          %s139 = ssub.s32 128, 128
          %140 = vsyncadd %s134, %s139
          %s141 = smul.addr %s23, 2
          %s142 = smul.addr %s22, 2
          %s143 = sadd.s32 %s141, %s142
          %s144 = smul.addr %s143, 64
          %s145 = scalar_lea.hbm %s1, %s144
          %s147 = sshll.u32 %s137, 4
          %s148 = int_to_ptr.vmem [resolvable:$true] %s147
          %150 = dma.hbm_to_vmem [thread:$0]  %s145, 128, %s148, %s134
        $region24: #{tpu_custom_call.1} parent=19 // pred_fallthru
          _
      $region20: #{tpu_custom_call.1} parent=5 // pred_fallthru
        _
      %p151 = scmp.le.s32.totalorder 1, %s15
      %p152 = scmp.lt.s32.totalorder %s15, 3
      %p153 = pnand %p151, %p152
      %p154 = pneg %p153
      // Predicated region
      $region25: #{tpu_custom_call.1} parent=5 // pred_check
        _
      $region26: #{tpu_custom_call.1} parent=5 // pred_check_branch
        %156 = sbr.rel (%p153) target = $region28
      $region27: #{tpu_custom_call.1} parent=5 // pred_region
        %s157 = ssub.s32 %s15, 1
        // Predicated region
        $region29: #{tpu_custom_call.1} parent=27 // pred_check
          %p158 = pneg %p48
        $region30: #{tpu_custom_call.1} parent=27 // pred_check_branch
          %160 = sbr.rel (%p158) target = $region32
        $region31: #{tpu_custom_call.1} parent=27 // pred_region
          %161 = dma.done [#allocation9], 16
        $region32: #{tpu_custom_call.1} parent=27 // pred_fallthru
          _
        %s162 = sand.u32 %s63, 1
        %s163 = scalar_lea.sflag [#allocation7], %s162
        %s164 = sand.u32 %s63, 1
        %s165 = smul.addr %s164, 8
        %s166 = scalar_lea.vmem [#allocation10], %s165
        // Predicated region
        $region33: #{tpu_custom_call.1} parent=27 // pred_check
          %p167 = pneg %p76
        $region34: #{tpu_custom_call.1} parent=27 // pred_check_branch
          %169 = sbr.rel (%p167) target = $region36
        $region35: #{tpu_custom_call.1} parent=27 // pred_region
          %170 = dma.done %s163, 128
        $region36: #{tpu_custom_call.1} parent=27 // pred_fallthru
          _
        %171 = sfence
        %p172 = pneg %p48
        %p173 = pneg %p45
        %s174 = sand.u32 %s63, 1
        %s175 = scalar_lea.sflag [#allocation7], %s174
        %s176 = sand.u32 %s63, 1
        %s177 = smul.addr %s176, 8
        %s178 = scalar_lea.vmem [#allocation10], %s177
        %p179 = pneg %p76
        %p180 = pneg %p73
        %p181 = pneg %p102
        %p182 = pneg %p99
        %s183 = sand.u32 %s89, 1
        %s184 = scalar_lea.sflag [#allocation8], %s183
        %s185 = sand.u32 %s89, 1
        %s186 = smul.addr %s185, 2
        %s187 = scalar_lea.vmem [#allocation11], %s186
        %p188 = scmp.eq.s32.totalorder %s25, 0
        // Predicated region
        $region37: #{tpu_custom_call.1} parent=27 // pred_check
          %p189 = pneg %p188
        $region38: #{tpu_custom_call.1} parent=27 // pred_check_branch
          %191 = sbr.rel (%p189) target = $region40
        $region39: #{tpu_custom_call.1} parent=27 // pred_region
          %v192 = vlaneseq
          %vm193 = vcmp.ge.s32.totalorder %v192, 0
          %vm194 = vcmp.lt.s32.totalorder %v192, 256
          %vm195 = vmand %vm193, %vm194
          %196 = vst.msk [vmem:[#allocation2] sm:$0x3] %vm195, 0.0
          %197 = vst.msk [vmem:[#allocation3] sm:$0x3] %vm195, -inf
        $region40: #{tpu_custom_call.1} parent=27 // pred_fallthru
          _
        %v198 = vld [vmem:[#allocation2] sm:$0x3]
        %v199 = vld [vmem:[#allocation3] sm:$0x3]
        %s200 = smul.u32 0, 2
        %s201 = smul.addr %s200, 4
        %s202 = scalar_lea.vmem %s166, %s201 [#allocation10]
        %v203 = vld [vmem:[%s202] sm:$0xff]
        %v205 = vcombine.high %v203, %v203
        %vm207 = vcmask 1043456
        %v208 = vsel %vm207, %v203, 0.0
        %v209 = vrot.slane %v208, 4
        %v210 = vadd.f32 %v208, %v209
        %v211 = vrot.slane %v210, 2
        %v212 = vadd.f32 %v210, %v211
        %v213 = vrot.slane %v212, 1
        %v214 = vadd.f32 %v212, %v213
        %v215 = vsel %vm207, %v205, 0.0
        %v216 = vrot.slane %v215, 4
        %v217 = vadd.f32 %v215, %v216
        %v218 = vrot.slane %v217, 2
        %v219 = vadd.f32 %v217, %v218
        %v220 = vrot.slane %v219, 1
        %v221 = vadd.f32 %v219, %v220
        %v224 = vcombine.low %v214, %v221
        %v226 = vunpack.c.l.s4 1966171168
        %v227 = vunpack.c.0.s8 %v226
        %v228 = vlaneseq
        %v229 = vshrl.u32 %v228, 7
        %v230 = vsub.s32 %v227, %v229
        %v231 = vrot.slane %v224, %v230
        %v233 = vunpack.c.l.s4 1966171168
        %v234 = vunpack.c.0.s8 %v233
        %v235 = vlaneseq
        %v236 = vshrl.u32 %v235, 7
        %v237 = vsub.s32 %v234, %v236
        %v238 = vrot.slane %v231, %v237
        %v240 = vadd.f32 %v198, %v238
        %v241 = vsel %vm207, %v203, -inf
        %v242 = vrot.slane %v241, 4
        %v243 = vmax.f32 %v241, %v242
        %v244 = vrot.slane %v243, 2
        %v245 = vmax.f32 %v243, %v244
        %v246 = vrot.slane %v245, 1
        %v247 = vmax.f32 %v245, %v246
        %v248 = vsel %vm207, %v205, -inf
        %v249 = vrot.slane %v248, 4
        %v250 = vmax.f32 %v248, %v249
        %v251 = vrot.slane %v250, 2
        %v252 = vmax.f32 %v250, %v251
        %v253 = vrot.slane %v252, 1
        %v254 = vmax.f32 %v252, %v253
        %v257 = vcombine.low %v247, %v254
        %v259 = vunpack.c.l.s4 1966171168
        %v260 = vunpack.c.0.s8 %v259
        %v261 = vlaneseq
        %v262 = vshrl.u32 %v261, 7
        %v263 = vsub.s32 %v260, %v262
        %v264 = vrot.slane %v257, %v263
        %v266 = vunpack.c.l.s4 1966171168
        %v267 = vunpack.c.0.s8 %v266
        %v268 = vlaneseq
        %v269 = vshrl.u32 %v268, 7
        %v270 = vsub.s32 %v267, %v269
        %v271 = vrot.slane %v264, %v270
        %v273 = vmax.f32 %v199, %v271
        %v274 = vlaneseq
        %vm275 = vcmp.ge.s32.totalorder %v274, 0
        %vm276 = vcmp.lt.s32.totalorder %v274, 256
        %vm277 = vmand %vm275, %vm276
        %278 = vst.msk [vmem:[#allocation2] sm:$0x3] %vm277, %v240
        %279 = vst.msk [vmem:[#allocation3] sm:$0x3] %vm277, %v273
        // Predicated region
        $region41: #{tpu_custom_call.1} parent=27 // pred_check
          %p280 = pneg %p188
        $region42: #{tpu_custom_call.1} parent=27 // pred_check_branch
          %282 = sbr.rel (%p280) target = $region44
        $region43: #{tpu_custom_call.1} parent=27 // pred_region
          %v283 = vlaneseq
          %v284 = vand.u32 %v283, 127
          %v285 = vadd.s32 %v284, 128
          %vm286 = vcmp.lt.s32.totalorder %v284, 0
          %v287 = vsub.s32 0, %v284
          %v288 = vsel %vm286, %v287, %v284
          %v289 = vshrl.u32 %v288, 4
          %v290 = vand.u32 %v288, 15
          %v291 = vsub.s32 0, %v290
          %v292 = vsel %vm286, %v291, %v290
          %vm293 = vcmp.lt.s32.totalorder %v285, 0
          %v294 = vsub.s32 0, %v285
          %v295 = vsel %vm293, %v294, %v285
          %v296 = vshrl.u32 %v295, 4
          %v297 = vand.u32 %v295, 15
          %v298 = vsub.s32 0, %v297
          %v299 = vsel %vm293, %v298, %v297
          %vm300 = vcmp.ne.s32.totalorder %v292, 0
          %vm301 = vcmp.ne.s32.totalorder %v299, 0
          %vm302 = vcmp.lt.s32.totalorder %v292, 0
          %vm303 = vcmp.lt.s32.totalorder %v299, 0
          %vm304 = vmand %vm302, %vm300
          %vm305 = vmand %vm303, %vm301
          %v306 = vadd.s32 %v292, 16
          %v307 = vadd.s32 %v299, 16
          %v308 = vsel %vm304, %v306, %v292
          %v309 = vsel %vm305, %v307, %v299
          %vm310 = vcmp.ge.s32.totalorder %v308, 3
          %vm311 = vcmp.ge.s32.totalorder %v309, 3
          %vm312 = vcmp.lt.s32.totalorder %v308, 19
          %vm313 = vcmp.lt.s32.totalorder %v309, 19
          %vm314 = vmand %vm310, %vm312
          %vm315 = vmand %vm311, %vm313
          %vm316 = vcmp.ge.s32.totalorder %v308, 2
          %vm317 = vcmp.ge.s32.totalorder %v309, 2
          %vm318 = vcmp.lt.s32.totalorder %v308, 18
          %vm319 = vcmp.lt.s32.totalorder %v309, 18
          %vm320 = vmand %vm316, %vm318
          %vm321 = vmand %vm317, %vm319
          %vm322 = vcmp.ge.s32.totalorder %v308, 1
          %vm323 = vcmp.ge.s32.totalorder %v309, 1
          %vm324 = vcmp.lt.s32.totalorder %v308, 17
          %vm325 = vcmp.lt.s32.totalorder %v309, 17
          %vm326 = vmand %vm322, %vm324
          %vm327 = vmand %vm323, %vm325
          %vm328 = vcmp.ge.s32.totalorder %v308, 4294967295
          %vm329 = vcmp.ge.s32.totalorder %v309, 4294967295
          %vm330 = vcmp.lt.s32.totalorder %v308, 15
          %vm331 = vcmp.lt.s32.totalorder %v309, 15
          %vm332 = vmand %vm328, %vm330
          %vm333 = vmand %vm329, %vm331
          %vm334 = vcmp.ge.s32.totalorder %v308, 4294967294
          %vm335 = vcmp.ge.s32.totalorder %v309, 4294967294
          %vm336 = vcmp.lt.s32.totalorder %v308, 14
          %vm337 = vcmp.lt.s32.totalorder %v309, 14
          %vm338 = vmand %vm334, %vm336
          %vm339 = vmand %vm335, %vm337
          %vm340 = vcmp.ge.s32.totalorder %v308, 4294967293
          %vm341 = vcmp.ge.s32.totalorder %v309, 4294967293
          %vm342 = vcmp.lt.s32.totalorder %v308, 13
          %vm343 = vcmp.lt.s32.totalorder %v309, 13
          %vm344 = vmand %vm340, %vm342
          %vm345 = vmand %vm341, %vm343
          %vm346 = vcmp.lt.s32.totalorder %v274, 128
          %vm347 = vmand %vm275, %vm346
          %348 = vst.msk [vmem:[#allocation4] sm:$0x1] %vm347, 0.0
          %349 = vst.msk [vmem:[#allocation4 + $0x3] sm:$0x1] %vm347, 0.0
          %350 = vst.msk [vmem:[#allocation4 + $0x1] sm:$0x3] %vm277, %v240
          %v351 = vld [vmem:[#allocation4] sm:$0xf]
          %s352 = sld [smem:[#allocation6]]
          %v354 = vlaneseq
          %v355 = vshrl.u32 %v354, 7
          %v356 = vsub.s32 0, %v355
          %v357 = vrot.slane %v351, %v356
          %v358 = vlaneseq
          %v359 = vshrl.u32 %v358, 7
          %v360 = vsub.s32 1, %v359
          %v361 = vrot.slane %v351, %v360
          %v362 = vlaneseq
          %v363 = vshrl.u32 %v362, 7
          %v364 = vsub.s32 2, %v363
          %v365 = vrot.slane %v351, %v364
          %366 = vrot.lane.b32.xlu0 %v357, 51
          %v367 = vpop.permute.xlu0 %366
          %368 = vrot.lane.b32.xlu0 %v361, 51
          %v369 = vpop.permute.xlu0 %368
          %370 = vrot.lane.b32.xlu0 %v365, 51
          %v371 = vpop.permute.xlu0 %370
          %vm372 = vcmask 416768
          %v373 = vsel %vm372, %v367, %v369
          %v374 = vsel %vm372, %v369, %v371
          %v377 = vsel %vm314, %v373, 0.0
          %v378 = vsel %vm315, %v374, 0.0
          %v379 = vstv %s352
          %v380 = vmul.f32 %v379, %v377
          %v381 = vmul.f32 %v379, %v378
          %s382 = sld [smem:[#allocation6 + $0x1]]
          %383 = vrot.lane.b32.xlu0 %v357, 50
          %v384 = vpop.permute.xlu0 %383
          %385 = vrot.lane.b32.xlu0 %v361, 50
          %v386 = vpop.permute.xlu0 %385
          %387 = vrot.lane.b32.xlu0 %v365, 50
          %v388 = vpop.permute.xlu0 %387
          %vm389 = vcmask 408576
          %v390 = vsel %vm389, %v384, %v386
          %v391 = vsel %vm389, %v386, %v388
          %v394 = vsel %vm320, %v390, 0.0
          %v395 = vsel %vm321, %v391, 0.0
          %v396 = vstv %s382
          %v397 = vmul.f32 %v396, %v394
          %v398 = vmul.f32 %v396, %v395
          %v399 = vadd.f32 %v380, %v397
          %v400 = vadd.f32 %v381, %v398
          %s401 = sld [smem:[#allocation6 + $0x2]]
          %402 = vrot.lane.b32.xlu0 %v357, 49
          %v403 = vpop.permute.xlu0 %402
          %404 = vrot.lane.b32.xlu0 %v361, 49
          %v405 = vpop.permute.xlu0 %404
          %406 = vrot.lane.b32.xlu0 %v365, 49
          %v407 = vpop.permute.xlu0 %406
          %vm408 = vcmask 400384
          %v409 = vsel %vm408, %v403, %v405
          %v410 = vsel %vm408, %v405, %v407
          %v413 = vsel %vm326, %v409, 0.0
          %v414 = vsel %vm327, %v410, 0.0
          %v415 = vstv %s401
          %v416 = vmul.f32 %v415, %v413
          %v417 = vmul.f32 %v415, %v414
          %v418 = vadd.f32 %v399, %v416
          %v419 = vadd.f32 %v400, %v417
          %s420 = sld [smem:[#allocation6 + $0x3]]
          %v421 = vstv %s420
          %v422 = vmul.f32 %v421, %v351
          %v424 = vlaneseq
          %v425 = vshrl.u32 %v424, 7
          %v426 = vsub.s32 0, %v425
          %v427 = vrot.slane %v422, %v426
          %v428 = vlaneseq
          %v429 = vshrl.u32 %v428, 7
          %v430 = vsub.s32 1, %v429
          %v431 = vrot.slane %v422, %v430
          %v432 = vlaneseq
          %v433 = vshrl.u32 %v432, 7
          %v434 = vsub.s32 2, %v433
          %v435 = vrot.slane %v422, %v434
          %436 = vrot.lane.b32.xlu0 %v427, 48
          %v437 = vpop.permute.xlu0 %436
          %438 = vrot.lane.b32.xlu0 %v431, 48
          %v439 = vpop.permute.xlu0 %438
          %440 = vrot.lane.b32.xlu0 %v435, 48
          %v441 = vpop.permute.xlu0 %440
          %vm442 = vcmask 392192
          %v443 = vsel %vm442, %v437, %v439
          %v444 = vsel %vm442, %v439, %v441
          %v447 = vadd.f32 %v418, %v443
          %v448 = vadd.f32 %v419, %v444
          %s449 = sld [smem:[#allocation6 + $0x4]]
          %450 = vrot.lane.b32.xlu0 %v357, 47
          %v451 = vpop.permute.xlu0 %450
          %452 = vrot.lane.b32.xlu0 %v361, 47
          %v453 = vpop.permute.xlu0 %452
          %454 = vrot.lane.b32.xlu0 %v365, 47
          %v455 = vpop.permute.xlu0 %454
          %vm456 = vcmask 384000
          %v457 = vsel %vm456, %v451, %v453
          %v458 = vsel %vm456, %v453, %v455
          %v461 = vsel %vm332, %v457, 0.0
          %v462 = vsel %vm333, %v458, 0.0
          %v463 = vstv %s449
          %v464 = vmul.f32 %v463, %v461
          %v465 = vmul.f32 %v463, %v462
          %v466 = vadd.f32 %v447, %v464
          %v467 = vadd.f32 %v448, %v465
          %s468 = sld [smem:[#allocation6 + $0x5]]
          %469 = vrot.lane.b32.xlu0 %v357, 46
          %v470 = vpop.permute.xlu0 %469
          %471 = vrot.lane.b32.xlu0 %v361, 46
          %v472 = vpop.permute.xlu0 %471
          %473 = vrot.lane.b32.xlu0 %v365, 46
          %v474 = vpop.permute.xlu0 %473
          %vm475 = vcmask 375808
          %v476 = vsel %vm475, %v470, %v472
          %v477 = vsel %vm475, %v472, %v474
          %v480 = vsel %vm338, %v476, 0.0
          %v481 = vsel %vm339, %v477, 0.0
          %v482 = vstv %s468
          %v483 = vmul.f32 %v482, %v480
          %v484 = vmul.f32 %v482, %v481
          %v485 = vadd.f32 %v466, %v483
          %v486 = vadd.f32 %v467, %v484
          %s487 = sld [smem:[#allocation6 + $0x6]]
          %488 = vrot.lane.b32.xlu0 %v357, 45
          %v489 = vpop.permute.xlu0 %488
          %490 = vrot.lane.b32.xlu0 %v361, 45
          %v491 = vpop.permute.xlu0 %490
          %492 = vrot.lane.b32.xlu0 %v365, 45
          %v493 = vpop.permute.xlu0 %492
          %vm494 = vcmask 367616
          %v495 = vsel %vm494, %v489, %v491
          %v496 = vsel %vm494, %v491, %v493
          %v499 = vsel %vm344, %v495, 0.0
          %v500 = vsel %vm345, %v496, 0.0
          %v501 = vstv %s487
          %v502 = vmul.f32 %v501, %v499
          %v503 = vmul.f32 %v501, %v500
          %v504 = vadd.f32 %v485, %v502
          %v505 = vadd.f32 %v486, %v503
          %v506 = vadd.f32 %v504, 0.0
          %v507 = vadd.f32 %v505, 0.0
          %s508 = sld [smem:[#allocation6 + $0x7]]
          %509 = vrot.lane.b32.xlu0 %v357, 35
          %v510 = vpop.permute.xlu0 %509
          %511 = vrot.lane.b32.xlu0 %v361, 35
          %v512 = vpop.permute.xlu0 %511
          %513 = vrot.lane.b32.xlu0 %v365, 35
          %v514 = vpop.permute.xlu0 %513
          %vm515 = vcmask 285696
          %v516 = vsel %vm515, %v510, %v512
          %v517 = vsel %vm515, %v512, %v514
          %v520 = vsel %vm314, %v516, 0.0
          %v521 = vsel %vm315, %v517, 0.0
          %v522 = vstv %s508
          %v523 = vmul.f32 %v522, %v520
          %v524 = vmul.f32 %v522, %v521
          %s525 = sld [smem:[#allocation6 + $0x8]]
          %526 = vrot.lane.b32.xlu0 %v357, 34
          %v527 = vpop.permute.xlu0 %526
          %528 = vrot.lane.b32.xlu0 %v361, 34
          %v529 = vpop.permute.xlu0 %528
          %530 = vrot.lane.b32.xlu0 %v365, 34
          %v531 = vpop.permute.xlu0 %530
          %vm532 = vcmask 277504
          %v533 = vsel %vm532, %v527, %v529
          %v534 = vsel %vm532, %v529, %v531
          %v537 = vsel %vm320, %v533, 0.0
          %v538 = vsel %vm321, %v534, 0.0
          %v539 = vstv %s525
          %v540 = vmul.f32 %v539, %v537
          %v541 = vmul.f32 %v539, %v538
          %v542 = vadd.f32 %v523, %v540
          %v543 = vadd.f32 %v524, %v541
          %s544 = sld [smem:[#allocation6 + $0x9]]
          %545 = vrot.lane.b32.xlu0 %v357, 33
          %v546 = vpop.permute.xlu0 %545
          %547 = vrot.lane.b32.xlu0 %v361, 33
          %v548 = vpop.permute.xlu0 %547
          %549 = vrot.lane.b32.xlu0 %v365, 33
          %v550 = vpop.permute.xlu0 %549
          %vm551 = vcmask 269312
          %v552 = vsel %vm551, %v546, %v548
          %v553 = vsel %vm551, %v548, %v550
          %v556 = vsel %vm326, %v552, 0.0
          %v557 = vsel %vm327, %v553, 0.0
          %v558 = vstv %s544
          %v559 = vmul.f32 %v558, %v556
          %v560 = vmul.f32 %v558, %v557
          %v561 = vadd.f32 %v542, %v559
          %v562 = vadd.f32 %v543, %v560
          %s563 = sld [smem:[#allocation6 + $0xa]]
          %v564 = vstv %s563
          %v565 = vmul.f32 %v564, %v351
          %v567 = vlaneseq
          %v568 = vshrl.u32 %v567, 7
          %v569 = vsub.s32 0, %v568
          %v570 = vrot.slane %v565, %v569
          %v571 = vlaneseq
          %v572 = vshrl.u32 %v571, 7
          %v573 = vsub.s32 1, %v572
          %v574 = vrot.slane %v565, %v573
          %v575 = vlaneseq
          %v576 = vshrl.u32 %v575, 7
          %v577 = vsub.s32 2, %v576
          %v578 = vrot.slane %v565, %v577
          %579 = vrot.lane.b32.xlu0 %v570, 32
          %v580 = vpop.permute.xlu0 %579
          %581 = vrot.lane.b32.xlu0 %v574, 32
          %v582 = vpop.permute.xlu0 %581
          %583 = vrot.lane.b32.xlu0 %v578, 32
          %v584 = vpop.permute.xlu0 %583
          %vm585 = vcmask 261120
          %v586 = vsel %vm585, %v580, %v582
          %v587 = vsel %vm585, %v582, %v584
          %v590 = vadd.f32 %v561, %v586
          %v591 = vadd.f32 %v562, %v587
          %s592 = sld [smem:[#allocation6 + $0xb]]
          %593 = vrot.lane.b32.xlu0 %v357, 31
          %v594 = vpop.permute.xlu0 %593
          %595 = vrot.lane.b32.xlu0 %v361, 31
          %v596 = vpop.permute.xlu0 %595
          %597 = vrot.lane.b32.xlu0 %v365, 31
          %v598 = vpop.permute.xlu0 %597
          %vm599 = vcmask 252928
          %v600 = vsel %vm599, %v594, %v596
          %v601 = vsel %vm599, %v596, %v598
          %v604 = vsel %vm332, %v600, 0.0
          %v605 = vsel %vm333, %v601, 0.0
          %v606 = vstv %s592
          %v607 = vmul.f32 %v606, %v604
          %v608 = vmul.f32 %v606, %v605
          %v609 = vadd.f32 %v590, %v607
          %v610 = vadd.f32 %v591, %v608
          %s611 = sld [smem:[#allocation6 + $0xc]]
          %612 = vrot.lane.b32.xlu0 %v357, 30
          %v613 = vpop.permute.xlu0 %612
          %614 = vrot.lane.b32.xlu0 %v361, 30
          %v615 = vpop.permute.xlu0 %614
          %616 = vrot.lane.b32.xlu0 %v365, 30
          %v617 = vpop.permute.xlu0 %616
          %vm618 = vcmask 244736
          %v619 = vsel %vm618, %v613, %v615
          %v620 = vsel %vm618, %v615, %v617
          %v623 = vsel %vm338, %v619, 0.0
          %v624 = vsel %vm339, %v620, 0.0
          %v625 = vstv %s611
          %v626 = vmul.f32 %v625, %v623
          %v627 = vmul.f32 %v625, %v624
          %v628 = vadd.f32 %v609, %v626
          %v629 = vadd.f32 %v610, %v627
          %s630 = sld [smem:[#allocation6 + $0xd]]
          %631 = vrot.lane.b32.xlu0 %v357, 29
          %v632 = vpop.permute.xlu0 %631
          %633 = vrot.lane.b32.xlu0 %v361, 29
          %v634 = vpop.permute.xlu0 %633
          %635 = vrot.lane.b32.xlu0 %v365, 29
          %v636 = vpop.permute.xlu0 %635
          %vm637 = vcmask 236544
          %v638 = vsel %vm637, %v632, %v634
          %v639 = vsel %vm637, %v634, %v636
          %v642 = vsel %vm344, %v638, 0.0
          %v643 = vsel %vm345, %v639, 0.0
          %v644 = vstv %s630
          %v645 = vmul.f32 %v644, %v642
          %v646 = vmul.f32 %v644, %v643
          %v647 = vadd.f32 %v628, %v645
          %v648 = vadd.f32 %v629, %v646
          %v649 = vadd.f32 %v506, %v647
          %v650 = vadd.f32 %v507, %v648
          %s651 = sld [smem:[#allocation6 + $0xe]]
          %652 = vrot.lane.b32.xlu0 %v357, 19
          %v653 = vpop.permute.xlu0 %652
          %654 = vrot.lane.b32.xlu0 %v361, 19
          %v655 = vpop.permute.xlu0 %654
          %656 = vrot.lane.b32.xlu0 %v365, 19
          %v657 = vpop.permute.xlu0 %656
          %vm658 = vcmask 154624
          %v659 = vsel %vm658, %v653, %v655
          %v660 = vsel %vm658, %v655, %v657
          %v663 = vsel %vm314, %v659, 0.0
          %v664 = vsel %vm315, %v660, 0.0
          %v665 = vstv %s651
          %v666 = vmul.f32 %v665, %v663
          %v667 = vmul.f32 %v665, %v664
          %s668 = sld [smem:[#allocation6 + $0xf]]
          %669 = vrot.lane.b32.xlu0 %v357, 18
          %v670 = vpop.permute.xlu0 %669
          %671 = vrot.lane.b32.xlu0 %v361, 18
          %v672 = vpop.permute.xlu0 %671
          %673 = vrot.lane.b32.xlu0 %v365, 18
          %v674 = vpop.permute.xlu0 %673
          %vm675 = vcmask 146432
          %v676 = vsel %vm675, %v670, %v672
          %v677 = vsel %vm675, %v672, %v674
          %v680 = vsel %vm320, %v676, 0.0
          %v681 = vsel %vm321, %v677, 0.0
          %v682 = vstv %s668
          %v683 = vmul.f32 %v682, %v680
          %v684 = vmul.f32 %v682, %v681
          %v685 = vadd.f32 %v666, %v683
          %v686 = vadd.f32 %v667, %v684
          %s687 = sld [smem:[#allocation6 + $0x10]]
          %688 = vrot.lane.b32.xlu0 %v357, 17
          %v689 = vpop.permute.xlu0 %688
          %690 = vrot.lane.b32.xlu0 %v361, 17
          %v691 = vpop.permute.xlu0 %690
          %692 = vrot.lane.b32.xlu0 %v365, 17
          %v693 = vpop.permute.xlu0 %692
          %vm694 = vcmask 138240
          %v695 = vsel %vm694, %v689, %v691
          %v696 = vsel %vm694, %v691, %v693
          %v699 = vsel %vm326, %v695, 0.0
          %v700 = vsel %vm327, %v696, 0.0
          %v701 = vstv %s687
          %v702 = vmul.f32 %v701, %v699
          %v703 = vmul.f32 %v701, %v700
          %v704 = vadd.f32 %v685, %v702
          %v705 = vadd.f32 %v686, %v703
          %s706 = sld [smem:[#allocation6 + $0x11]]
          %v707 = vstv %s706
          %v708 = vmul.f32 %v707, %v351
          %v710 = vlaneseq
          %v711 = vshrl.u32 %v710, 7
          %v712 = vsub.s32 0, %v711
          %v713 = vrot.slane %v708, %v712
          %v714 = vlaneseq
          %v715 = vshrl.u32 %v714, 7
          %v716 = vsub.s32 1, %v715
          %v717 = vrot.slane %v708, %v716
          %v718 = vlaneseq
          %v719 = vshrl.u32 %v718, 7
          %v720 = vsub.s32 2, %v719
          %v721 = vrot.slane %v708, %v720
          %722 = vrot.lane.b32.xlu0 %v713, 16
          %v723 = vpop.permute.xlu0 %722
          %724 = vrot.lane.b32.xlu0 %v717, 16
          %v725 = vpop.permute.xlu0 %724
          %726 = vrot.lane.b32.xlu0 %v721, 16
          %v727 = vpop.permute.xlu0 %726
          %vm728 = vcmask 130048
          %v729 = vsel %vm728, %v723, %v725
          %v730 = vsel %vm728, %v725, %v727
          %v733 = vadd.f32 %v704, %v729
          %v734 = vadd.f32 %v705, %v730
          %s735 = sld [smem:[#allocation6 + $0x12]]
          %736 = vrot.lane.b32.xlu0 %v357, 15
          %v737 = vpop.permute.xlu0 %736
          %738 = vrot.lane.b32.xlu0 %v361, 15
          %v739 = vpop.permute.xlu0 %738
          %740 = vrot.lane.b32.xlu0 %v365, 15
          %v741 = vpop.permute.xlu0 %740
          %vm742 = vcmask 121856
          %v743 = vsel %vm742, %v737, %v739
          %v744 = vsel %vm742, %v739, %v741
          %v747 = vsel %vm332, %v743, 0.0
          %v748 = vsel %vm333, %v744, 0.0
          %v749 = vstv %s735
          %v750 = vmul.f32 %v749, %v747
          %v751 = vmul.f32 %v749, %v748
          %v752 = vadd.f32 %v733, %v750
          %v753 = vadd.f32 %v734, %v751
          %s754 = sld [smem:[#allocation6 + $0x13]]
          %755 = vrot.lane.b32.xlu0 %v357, 14
          %v756 = vpop.permute.xlu0 %755
          %757 = vrot.lane.b32.xlu0 %v361, 14
          %v758 = vpop.permute.xlu0 %757
          %759 = vrot.lane.b32.xlu0 %v365, 14
          %v760 = vpop.permute.xlu0 %759
          %vm761 = vcmask 113664
          %v762 = vsel %vm761, %v756, %v758
          %v763 = vsel %vm761, %v758, %v760
          %v766 = vsel %vm338, %v762, 0.0
          %v767 = vsel %vm339, %v763, 0.0
          %v768 = vstv %s754
          %v769 = vmul.f32 %v768, %v766
          %v770 = vmul.f32 %v768, %v767
          %v771 = vadd.f32 %v752, %v769
          %v772 = vadd.f32 %v753, %v770
          %s773 = sld [smem:[#allocation6 + $0x14]]
          %774 = vrot.lane.b32.xlu0 %v357, 13
          %v775 = vpop.permute.xlu0 %774
          %776 = vrot.lane.b32.xlu0 %v361, 13
          %v777 = vpop.permute.xlu0 %776
          %778 = vrot.lane.b32.xlu0 %v365, 13
          %v779 = vpop.permute.xlu0 %778
          %vm780 = vcmask 105472
          %v781 = vsel %vm780, %v775, %v777
          %v782 = vsel %vm780, %v777, %v779
          %v785 = vsel %vm344, %v781, 0.0
          %v786 = vsel %vm345, %v782, 0.0
          %v787 = vstv %s773
          %v788 = vmul.f32 %v787, %v785
          %v789 = vmul.f32 %v787, %v786
          %v790 = vadd.f32 %v771, %v788
          %v791 = vadd.f32 %v772, %v789
          %v792 = vadd.f32 %v649, %v790
          %v793 = vadd.f32 %v650, %v791
          %s794 = sld [smem:[#allocation6 + $0x15]]
          %795 = vrot.lane.b32.xlu0 %v357, 3
          %v796 = vpop.permute.xlu0 %795
          %797 = vrot.lane.b32.xlu0 %v361, 3
          %v798 = vpop.permute.xlu0 %797
          %799 = vrot.lane.b32.xlu0 %v365, 3
          %v800 = vpop.permute.xlu0 %799
          %vm801 = vcmask 23552
          %v802 = vsel %vm801, %v796, %v798
          %v803 = vsel %vm801, %v798, %v800
          %v806 = vsel %vm314, %v802, 0.0
          %v807 = vsel %vm315, %v803, 0.0
          %v808 = vstv %s794
          %v809 = vmul.f32 %v808, %v806
          %v810 = vmul.f32 %v808, %v807
          %s811 = sld [smem:[#allocation6 + $0x16]]
          %812 = vrot.lane.b32.xlu0 %v357, 2
          %v813 = vpop.permute.xlu0 %812
          %814 = vrot.lane.b32.xlu0 %v361, 2
          %v815 = vpop.permute.xlu0 %814
          %816 = vrot.lane.b32.xlu0 %v365, 2
          %v817 = vpop.permute.xlu0 %816
          %vm818 = vcmask 15360
          %v819 = vsel %vm818, %v813, %v815
          %v820 = vsel %vm818, %v815, %v817
          %v823 = vsel %vm320, %v819, 0.0
          %v824 = vsel %vm321, %v820, 0.0
          %v825 = vstv %s811
          %v826 = vmul.f32 %v825, %v823
          %v827 = vmul.f32 %v825, %v824
          %v828 = vadd.f32 %v809, %v826
          %v829 = vadd.f32 %v810, %v827
          %s830 = sld [smem:[#allocation6 + $0x17]]
          %831 = vrot.lane.b32.xlu0 %v357, 1
          %v832 = vpop.permute.xlu0 %831
          %833 = vrot.lane.b32.xlu0 %v361, 1
          %v834 = vpop.permute.xlu0 %833
          %835 = vrot.lane.b32.xlu0 %v365, 1
          %v836 = vpop.permute.xlu0 %835
          %vm837 = vcmask 7168
          %v838 = vsel %vm837, %v832, %v834
          %v839 = vsel %vm837, %v834, %v836
          %v842 = vsel %vm326, %v838, 0.0
          %v843 = vsel %vm327, %v839, 0.0
          %v844 = vstv %s830
          %v845 = vmul.f32 %v844, %v842
          %v846 = vmul.f32 %v844, %v843
          %v847 = vadd.f32 %v828, %v845
          %v848 = vadd.f32 %v829, %v846
          %s849 = sld [smem:[#allocation6 + $0x18]]
          %v850 = vstv %s849
          %v851 = vrot.slane %v351, 1
          %v853 = vmul.f32 %v850, %v851
          %v855 = vlaneseq
          %v856 = vshrl.u32 %v855, 7
          %v857 = vsub.s32 0, %v856
          %v858 = vrot.slane %v853, %v857
          %v859 = vlaneseq
          %v860 = vshrl.u32 %v859, 7
          %v861 = vsub.s32 1, %v860
          %v862 = vrot.slane %v853, %v861
          %v865 = vadd.f32 %v847, %v858
          %v866 = vadd.f32 %v848, %v862
          %s867 = sld [smem:[#allocation6 + $0x19]]
          %v868 = vlaneseq
          %v869 = vshrl.u32 %v868, 7
          %v870 = vsub.s32 3, %v869
          %v871 = vrot.slane %v351, %v870
          %872 = vrot.lane.b32.xlu0 %v361, 127
          %v873 = vpop.permute.xlu0 %872
          %874 = vrot.lane.b32.xlu0 %v365, 127
          %v875 = vpop.permute.xlu0 %874
          %876 = vrot.lane.b32.xlu0 %v871, 127
          %v877 = vpop.permute.xlu0 %876
          %vm878 = vcmask 1039360
          %v879 = vsel %vm878, %v873, %v875
          %v880 = vsel %vm878, %v875, %v877
          %v883 = vsel %vm332, %v879, 0.0
          %v884 = vsel %vm333, %v880, 0.0
          %v885 = vstv %s867
          %v886 = vmul.f32 %v885, %v883
          %v887 = vmul.f32 %v885, %v884
          %v888 = vadd.f32 %v865, %v886
          %v889 = vadd.f32 %v866, %v887
          %s890 = sld [smem:[#allocation6 + $0x1a]]
          %891 = vrot.lane.b32.xlu0 %v361, 126
          %v892 = vpop.permute.xlu0 %891
          %893 = vrot.lane.b32.xlu0 %v365, 126
          %v894 = vpop.permute.xlu0 %893
          %895 = vrot.lane.b32.xlu0 %v871, 126
          %v896 = vpop.permute.xlu0 %895
          %vm897 = vcmask 1031168
          %v898 = vsel %vm897, %v892, %v894
          %v899 = vsel %vm897, %v894, %v896
          %v902 = vsel %vm338, %v898, 0.0
          %v903 = vsel %vm339, %v899, 0.0
          %v904 = vstv %s890
          %v905 = vmul.f32 %v904, %v902
          %v906 = vmul.f32 %v904, %v903
          %v907 = vadd.f32 %v888, %v905
          %v908 = vadd.f32 %v889, %v906
          %s909 = sld [smem:[#allocation6 + $0x1b]]
          %910 = vrot.lane.b32.xlu0 %v361, 125
          %v911 = vpop.permute.xlu0 %910
          %912 = vrot.lane.b32.xlu0 %v365, 125
          %v913 = vpop.permute.xlu0 %912
          %914 = vrot.lane.b32.xlu0 %v871, 125
          %v915 = vpop.permute.xlu0 %914
          %vm916 = vcmask 1022976
          %v917 = vsel %vm916, %v911, %v913
          %v918 = vsel %vm916, %v913, %v915
          %v921 = vsel %vm344, %v917, 0.0
          %v922 = vsel %vm345, %v918, 0.0
          %v923 = vstv %s909
          %v924 = vmul.f32 %v923, %v921
          %v925 = vmul.f32 %v923, %v922
          %v926 = vadd.f32 %v907, %v924
          %v927 = vadd.f32 %v908, %v925
          %v928 = vadd.f32 %v792, %v926
          %v929 = vadd.f32 %v793, %v927
          %s930 = sld [smem:[#allocation6 + $0x1c]]
          %931 = vrot.lane.b32.xlu0 %v361, 115
          %v932 = vpop.permute.xlu0 %931
          %933 = vrot.lane.b32.xlu0 %v365, 115
          %v934 = vpop.permute.xlu0 %933
          %935 = vrot.lane.b32.xlu0 %v871, 115
          %v936 = vpop.permute.xlu0 %935
          %vm937 = vcmask 941056
          %v938 = vsel %vm937, %v932, %v934
          %v939 = vsel %vm937, %v934, %v936
          %v942 = vsel %vm314, %v938, 0.0
          %v943 = vsel %vm315, %v939, 0.0
          %v944 = vstv %s930
          %v945 = vmul.f32 %v944, %v942
          %v946 = vmul.f32 %v944, %v943
          %s947 = sld [smem:[#allocation6 + $0x1d]]
          %948 = vrot.lane.b32.xlu0 %v361, 114
          %v949 = vpop.permute.xlu0 %948
          %950 = vrot.lane.b32.xlu0 %v365, 114
          %v951 = vpop.permute.xlu0 %950
          %952 = vrot.lane.b32.xlu0 %v871, 114
          %v953 = vpop.permute.xlu0 %952
          %vm954 = vcmask 932864
          %v955 = vsel %vm954, %v949, %v951
          %v956 = vsel %vm954, %v951, %v953
          %v959 = vsel %vm320, %v955, 0.0
          %v960 = vsel %vm321, %v956, 0.0
          %v961 = vstv %s947
          %v962 = vmul.f32 %v961, %v959
          %v963 = vmul.f32 %v961, %v960
          %v964 = vadd.f32 %v945, %v962
          %v965 = vadd.f32 %v946, %v963
          %s966 = sld [smem:[#allocation6 + $0x1e]]
          %967 = vrot.lane.b32.xlu0 %v361, 113
          %v968 = vpop.permute.xlu0 %967
          %969 = vrot.lane.b32.xlu0 %v365, 113
          %v970 = vpop.permute.xlu0 %969
          %971 = vrot.lane.b32.xlu0 %v871, 113
          %v972 = vpop.permute.xlu0 %971
          %vm973 = vcmask 924672
          %v974 = vsel %vm973, %v968, %v970
          %v975 = vsel %vm973, %v970, %v972
          %v978 = vsel %vm326, %v974, 0.0
          %v979 = vsel %vm327, %v975, 0.0
          %v980 = vstv %s966
          %v981 = vmul.f32 %v980, %v978
          %v982 = vmul.f32 %v980, %v979
          %v983 = vadd.f32 %v964, %v981
          %v984 = vadd.f32 %v965, %v982
          %s985 = sld [smem:[#allocation6 + $0x1f]]
          %v986 = vstv %s985
          %987 = vrot.lane.b32.xlu0 %v351, 112
          %v988 = vpop.permute.xlu0 %987
          %v989 = vrot.slane %v988, 1
          %v990 = vrot.slane %v988, 2
          %vm991 = vcmask 916480
          %v992 = vsel %vm991, %v989, %v990
          %v994 = vmul.f32 %v986, %v992
          %v996 = vlaneseq
          %v997 = vshrl.u32 %v996, 7
          %v998 = vsub.s32 0, %v997
          %v999 = vrot.slane %v994, %v998
          %v1000 = vlaneseq
          %v1001 = vshrl.u32 %v1000, 7
          %v1002 = vsub.s32 1, %v1001
          %v1003 = vrot.slane %v994, %v1002
          %v1006 = vadd.f32 %v983, %v999
          %v1007 = vadd.f32 %v984, %v1003
          %s1008 = sld [smem:[#allocation6 + $0x20]]
          %1009 = vrot.lane.b32.xlu0 %v361, 111
          %v1010 = vpop.permute.xlu0 %1009
          %1011 = vrot.lane.b32.xlu0 %v365, 111
          %v1012 = vpop.permute.xlu0 %1011
          %1013 = vrot.lane.b32.xlu0 %v871, 111
          %v1014 = vpop.permute.xlu0 %1013
          %vm1015 = vcmask 908288
          %v1016 = vsel %vm1015, %v1010, %v1012
          %v1017 = vsel %vm1015, %v1012, %v1014
          %v1020 = vsel %vm332, %v1016, 0.0
          %v1021 = vsel %vm333, %v1017, 0.0
          %v1022 = vstv %s1008
          %v1023 = vmul.f32 %v1022, %v1020
          %v1024 = vmul.f32 %v1022, %v1021
          %v1025 = vadd.f32 %v1006, %v1023
          %v1026 = vadd.f32 %v1007, %v1024
          %s1027 = sld [smem:[#allocation6 + $0x21]]
          %1028 = vrot.lane.b32.xlu0 %v361, 110
          %v1029 = vpop.permute.xlu0 %1028
          %1030 = vrot.lane.b32.xlu0 %v365, 110
          %v1031 = vpop.permute.xlu0 %1030
          %1032 = vrot.lane.b32.xlu0 %v871, 110
          %v1033 = vpop.permute.xlu0 %1032
          %vm1034 = vcmask 900096
          %v1035 = vsel %vm1034, %v1029, %v1031
          %v1036 = vsel %vm1034, %v1031, %v1033
          %v1039 = vsel %vm338, %v1035, 0.0
          %v1040 = vsel %vm339, %v1036, 0.0
          %v1041 = vstv %s1027
          %v1042 = vmul.f32 %v1041, %v1039
          %v1043 = vmul.f32 %v1041, %v1040
          %v1044 = vadd.f32 %v1025, %v1042
          %v1045 = vadd.f32 %v1026, %v1043
          %s1046 = sld [smem:[#allocation6 + $0x22]]
          %1047 = vrot.lane.b32.xlu0 %v361, 109
          %v1048 = vpop.permute.xlu0 %1047
          %1049 = vrot.lane.b32.xlu0 %v365, 109
          %v1050 = vpop.permute.xlu0 %1049
          %1051 = vrot.lane.b32.xlu0 %v871, 109
          %v1052 = vpop.permute.xlu0 %1051
          %vm1053 = vcmask 891904
          %v1054 = vsel %vm1053, %v1048, %v1050
          %v1055 = vsel %vm1053, %v1050, %v1052
          %v1058 = vsel %vm344, %v1054, 0.0
          %v1059 = vsel %vm345, %v1055, 0.0
          %v1060 = vstv %s1046
          %v1061 = vmul.f32 %v1060, %v1058
          %v1062 = vmul.f32 %v1060, %v1059
          %v1063 = vadd.f32 %v1044, %v1061
          %v1064 = vadd.f32 %v1045, %v1062
          %v1065 = vadd.f32 %v928, %v1063
          %v1066 = vadd.f32 %v929, %v1064
          %s1067 = sld [smem:[#allocation6 + $0x23]]
          %1068 = vrot.lane.b32.xlu0 %v361, 99
          %v1069 = vpop.permute.xlu0 %1068
          %1070 = vrot.lane.b32.xlu0 %v365, 99
          %v1071 = vpop.permute.xlu0 %1070
          %1072 = vrot.lane.b32.xlu0 %v871, 99
          %v1073 = vpop.permute.xlu0 %1072
          %vm1074 = vcmask 809984
          %v1075 = vsel %vm1074, %v1069, %v1071
          %v1076 = vsel %vm1074, %v1071, %v1073
          %v1079 = vsel %vm314, %v1075, 0.0
          %v1080 = vsel %vm315, %v1076, 0.0
          %v1081 = vstv %s1067
          %v1082 = vmul.f32 %v1081, %v1079
          %v1083 = vmul.f32 %v1081, %v1080
          %s1084 = sld [smem:[#allocation6 + $0x24]]
          %1085 = vrot.lane.b32.xlu0 %v361, 98
          %v1086 = vpop.permute.xlu0 %1085
          %1087 = vrot.lane.b32.xlu0 %v365, 98
          %v1088 = vpop.permute.xlu0 %1087
          %1089 = vrot.lane.b32.xlu0 %v871, 98
          %v1090 = vpop.permute.xlu0 %1089
          %vm1091 = vcmask 801792
          %v1092 = vsel %vm1091, %v1086, %v1088
          %v1093 = vsel %vm1091, %v1088, %v1090
          %v1096 = vsel %vm320, %v1092, 0.0
          %v1097 = vsel %vm321, %v1093, 0.0
          %v1098 = vstv %s1084
          %v1099 = vmul.f32 %v1098, %v1096
          %v1100 = vmul.f32 %v1098, %v1097
          %v1101 = vadd.f32 %v1082, %v1099
          %v1102 = vadd.f32 %v1083, %v1100
          %s1103 = sld [smem:[#allocation6 + $0x25]]
          %1104 = vrot.lane.b32.xlu0 %v361, 97
          %v1105 = vpop.permute.xlu0 %1104
          %1106 = vrot.lane.b32.xlu0 %v365, 97
          %v1107 = vpop.permute.xlu0 %1106
          %1108 = vrot.lane.b32.xlu0 %v871, 97
          %v1109 = vpop.permute.xlu0 %1108
          %vm1110 = vcmask 793600
          %v1111 = vsel %vm1110, %v1105, %v1107
          %v1112 = vsel %vm1110, %v1107, %v1109
          %v1115 = vsel %vm326, %v1111, 0.0
          %v1116 = vsel %vm327, %v1112, 0.0
          %v1117 = vstv %s1103
          %v1118 = vmul.f32 %v1117, %v1115
          %v1119 = vmul.f32 %v1117, %v1116
          %v1120 = vadd.f32 %v1101, %v1118
          %v1121 = vadd.f32 %v1102, %v1119
          %s1122 = sld [smem:[#allocation6 + $0x26]]
          %v1123 = vstv %s1122
          %1124 = vrot.lane.b32.xlu0 %v351, 96
          %v1125 = vpop.permute.xlu0 %1124
          %v1126 = vrot.slane %v1125, 1
          %v1127 = vrot.slane %v1125, 2
          %vm1128 = vcmask 785408
          %v1129 = vsel %vm1128, %v1126, %v1127
          %v1131 = vmul.f32 %v1123, %v1129
          %v1133 = vlaneseq
          %v1134 = vshrl.u32 %v1133, 7
          %v1135 = vsub.s32 0, %v1134
          %v1136 = vrot.slane %v1131, %v1135
          %v1137 = vlaneseq
          %v1138 = vshrl.u32 %v1137, 7
          %v1139 = vsub.s32 1, %v1138
          %v1140 = vrot.slane %v1131, %v1139
          %v1143 = vadd.f32 %v1120, %v1136
          %v1144 = vadd.f32 %v1121, %v1140
          %s1145 = sld [smem:[#allocation6 + $0x27]]
          %1146 = vrot.lane.b32.xlu0 %v361, 95
          %v1147 = vpop.permute.xlu0 %1146
          %1148 = vrot.lane.b32.xlu0 %v365, 95
          %v1149 = vpop.permute.xlu0 %1148
          %1150 = vrot.lane.b32.xlu0 %v871, 95
          %v1151 = vpop.permute.xlu0 %1150
          %vm1152 = vcmask 777216
          %v1153 = vsel %vm1152, %v1147, %v1149
          %v1154 = vsel %vm1152, %v1149, %v1151
          %v1157 = vsel %vm332, %v1153, 0.0
          %v1158 = vsel %vm333, %v1154, 0.0
          %v1159 = vstv %s1145
          %v1160 = vmul.f32 %v1159, %v1157
          %v1161 = vmul.f32 %v1159, %v1158
          %v1162 = vadd.f32 %v1143, %v1160
          %v1163 = vadd.f32 %v1144, %v1161
          %s1164 = sld [smem:[#allocation6 + $0x28]]
          %1165 = vrot.lane.b32.xlu0 %v361, 94
          %v1166 = vpop.permute.xlu0 %1165
          %1167 = vrot.lane.b32.xlu0 %v365, 94
          %v1168 = vpop.permute.xlu0 %1167
          %1169 = vrot.lane.b32.xlu0 %v871, 94
          %v1170 = vpop.permute.xlu0 %1169
          %vm1171 = vcmask 769024
          %v1172 = vsel %vm1171, %v1166, %v1168
          %v1173 = vsel %vm1171, %v1168, %v1170
          %v1176 = vsel %vm338, %v1172, 0.0
          %v1177 = vsel %vm339, %v1173, 0.0
          %v1178 = vstv %s1164
          %v1179 = vmul.f32 %v1178, %v1176
          %v1180 = vmul.f32 %v1178, %v1177
          %v1181 = vadd.f32 %v1162, %v1179
          %v1182 = vadd.f32 %v1163, %v1180
          %s1183 = sld [smem:[#allocation6 + $0x29]]
          %1184 = vrot.lane.b32.xlu0 %v361, 93
          %v1185 = vpop.permute.xlu0 %1184
          %1186 = vrot.lane.b32.xlu0 %v365, 93
          %v1187 = vpop.permute.xlu0 %1186
          %1188 = vrot.lane.b32.xlu0 %v871, 93
          %v1189 = vpop.permute.xlu0 %1188
          %vm1190 = vcmask 760832
          %v1191 = vsel %vm1190, %v1185, %v1187
          %v1192 = vsel %vm1190, %v1187, %v1189
          %v1195 = vsel %vm344, %v1191, 0.0
          %v1196 = vsel %vm345, %v1192, 0.0
          %v1197 = vstv %s1183
          %v1198 = vmul.f32 %v1197, %v1195
          %v1199 = vmul.f32 %v1197, %v1196
          %v1200 = vadd.f32 %v1181, %v1198
          %v1201 = vadd.f32 %v1182, %v1199
          %v1202 = vadd.f32 %v1065, %v1200
          %v1203 = vadd.f32 %v1066, %v1201
          %s1204 = sld [smem:[#allocation6 + $0x2a]]
          %1205 = vrot.lane.b32.xlu0 %v361, 83
          %v1206 = vpop.permute.xlu0 %1205
          %1207 = vrot.lane.b32.xlu0 %v365, 83
          %v1208 = vpop.permute.xlu0 %1207
          %1209 = vrot.lane.b32.xlu0 %v871, 83
          %v1210 = vpop.permute.xlu0 %1209
          %vm1211 = vcmask 678912
          %v1212 = vsel %vm1211, %v1206, %v1208
          %v1213 = vsel %vm1211, %v1208, %v1210
          %v1216 = vsel %vm314, %v1212, 0.0
          %v1217 = vsel %vm315, %v1213, 0.0
          %v1218 = vstv %s1204
          %v1219 = vmul.f32 %v1218, %v1216
          %v1220 = vmul.f32 %v1218, %v1217
          %s1221 = sld [smem:[#allocation6 + $0x2b]]
          %1222 = vrot.lane.b32.xlu0 %v361, 82
          %v1223 = vpop.permute.xlu0 %1222
          %1224 = vrot.lane.b32.xlu0 %v365, 82
          %v1225 = vpop.permute.xlu0 %1224
          %1226 = vrot.lane.b32.xlu0 %v871, 82
          %v1227 = vpop.permute.xlu0 %1226
          %vm1228 = vcmask 670720
          %v1229 = vsel %vm1228, %v1223, %v1225
          %v1230 = vsel %vm1228, %v1225, %v1227
          %v1233 = vsel %vm320, %v1229, 0.0
          %v1234 = vsel %vm321, %v1230, 0.0
          %v1235 = vstv %s1221
          %v1236 = vmul.f32 %v1235, %v1233
          %v1237 = vmul.f32 %v1235, %v1234
          %v1238 = vadd.f32 %v1219, %v1236
          %v1239 = vadd.f32 %v1220, %v1237
          %s1240 = sld [smem:[#allocation6 + $0x2c]]
          %1241 = vrot.lane.b32.xlu0 %v361, 81
          %v1242 = vpop.permute.xlu0 %1241
          %1243 = vrot.lane.b32.xlu0 %v365, 81
          %v1244 = vpop.permute.xlu0 %1243
          %1245 = vrot.lane.b32.xlu0 %v871, 81
          %v1246 = vpop.permute.xlu0 %1245
          %vm1247 = vcmask 662528
          %v1248 = vsel %vm1247, %v1242, %v1244
          %v1249 = vsel %vm1247, %v1244, %v1246
          %v1252 = vsel %vm326, %v1248, 0.0
          %v1253 = vsel %vm327, %v1249, 0.0
          %v1254 = vstv %s1240
          %v1255 = vmul.f32 %v1254, %v1252
          %v1256 = vmul.f32 %v1254, %v1253
          %v1257 = vadd.f32 %v1238, %v1255
          %v1258 = vadd.f32 %v1239, %v1256
          %s1259 = sld [smem:[#allocation6 + $0x2d]]
          %v1260 = vstv %s1259
          %1261 = vrot.lane.b32.xlu0 %v351, 80
          %v1262 = vpop.permute.xlu0 %1261
          %v1263 = vrot.slane %v1262, 1
          %v1264 = vrot.slane %v1262, 2
          %vm1265 = vcmask 654336
          %v1266 = vsel %vm1265, %v1263, %v1264
          %v1268 = vmul.f32 %v1260, %v1266
          %v1270 = vlaneseq
          %v1271 = vshrl.u32 %v1270, 7
          %v1272 = vsub.s32 0, %v1271
          %v1273 = vrot.slane %v1268, %v1272
          %v1274 = vlaneseq
          %v1275 = vshrl.u32 %v1274, 7
          %v1276 = vsub.s32 1, %v1275
          %v1277 = vrot.slane %v1268, %v1276
          %v1280 = vadd.f32 %v1257, %v1273
          %v1281 = vadd.f32 %v1258, %v1277
          %s1282 = sld [smem:[#allocation6 + $0x2e]]
          %1283 = vrot.lane.b32.xlu0 %v361, 79
          %v1284 = vpop.permute.xlu0 %1283
          %1285 = vrot.lane.b32.xlu0 %v365, 79
          %v1286 = vpop.permute.xlu0 %1285
          %1287 = vrot.lane.b32.xlu0 %v871, 79
          %v1288 = vpop.permute.xlu0 %1287
          %vm1289 = vcmask 646144
          %v1290 = vsel %vm1289, %v1284, %v1286
          %v1291 = vsel %vm1289, %v1286, %v1288
          %v1294 = vsel %vm332, %v1290, 0.0
          %v1295 = vsel %vm333, %v1291, 0.0
          %v1296 = vstv %s1282
          %v1297 = vmul.f32 %v1296, %v1294
          %v1298 = vmul.f32 %v1296, %v1295
          %v1299 = vadd.f32 %v1280, %v1297
          %v1300 = vadd.f32 %v1281, %v1298
          %s1301 = sld [smem:[#allocation6 + $0x2f]]
          %1302 = vrot.lane.b32.xlu0 %v361, 78
          %v1303 = vpop.permute.xlu0 %1302
          %1304 = vrot.lane.b32.xlu0 %v365, 78
          %v1305 = vpop.permute.xlu0 %1304
          %1306 = vrot.lane.b32.xlu0 %v871, 78
          %v1307 = vpop.permute.xlu0 %1306
          %vm1308 = vcmask 637952
          %v1309 = vsel %vm1308, %v1303, %v1305
          %v1310 = vsel %vm1308, %v1305, %v1307
          %v1313 = vsel %vm338, %v1309, 0.0
          %v1314 = vsel %vm339, %v1310, 0.0
          %v1315 = vstv %s1301
          %v1316 = vmul.f32 %v1315, %v1313
          %v1317 = vmul.f32 %v1315, %v1314
          %v1318 = vadd.f32 %v1299, %v1316
          %v1319 = vadd.f32 %v1300, %v1317
          %s1320 = sld [smem:[#allocation6 + $0x30]]
          %1321 = vrot.lane.b32.xlu0 %v361, 77
          %v1322 = vpop.permute.xlu0 %1321
          %1323 = vrot.lane.b32.xlu0 %v365, 77
          %v1324 = vpop.permute.xlu0 %1323
          %1325 = vrot.lane.b32.xlu0 %v871, 77
          %v1326 = vpop.permute.xlu0 %1325
          %vm1327 = vcmask 629760
          %v1328 = vsel %vm1327, %v1322, %v1324
          %v1329 = vsel %vm1327, %v1324, %v1326
          %v1332 = vsel %vm344, %v1328, 0.0
          %v1333 = vsel %vm345, %v1329, 0.0
          %v1334 = vstv %s1320
          %v1335 = vmul.f32 %v1334, %v1332
          %v1336 = vmul.f32 %v1334, %v1333
          %v1337 = vadd.f32 %v1318, %v1335
          %v1338 = vadd.f32 %v1319, %v1336
          %v1339 = vadd.f32 %v1202, %v1337
          %v1340 = vadd.f32 %v1203, %v1338
          %1341 = vst.msk [vmem:[#allocation5] sm:$0x1] %vm347, 0.0
          %1342 = vst.msk [vmem:[#allocation5 + $0x3] sm:$0x1] %vm347, 0.0
          %1343 = vst.msk [vmem:[#allocation5 + $0x1] sm:$0x3] %vm277, %v273
          %v1344 = vld [vmem:[#allocation5] sm:$0xf]
          %s1345 = sld [smem:[#allocation6 + $0x31]]
          %v1347 = vlaneseq
          %v1348 = vshrl.u32 %v1347, 7
          %v1349 = vsub.s32 0, %v1348
          %v1350 = vrot.slane %v1344, %v1349
          %v1351 = vlaneseq
          %v1352 = vshrl.u32 %v1351, 7
          %v1353 = vsub.s32 1, %v1352
          %v1354 = vrot.slane %v1344, %v1353
          %v1355 = vlaneseq
          %v1356 = vshrl.u32 %v1355, 7
          %v1357 = vsub.s32 2, %v1356
          %v1358 = vrot.slane %v1344, %v1357
          %1359 = vrot.lane.b32.xlu0 %v1350, 51
          %v1360 = vpop.permute.xlu0 %1359
          %1361 = vrot.lane.b32.xlu0 %v1354, 51
          %v1362 = vpop.permute.xlu0 %1361
          %1363 = vrot.lane.b32.xlu0 %v1358, 51
          %v1364 = vpop.permute.xlu0 %1363
          %v1365 = vsel %vm372, %v1360, %v1362
          %v1366 = vsel %vm372, %v1362, %v1364
          %v1369 = vsel %vm314, %v1365, 0.0
          %v1370 = vsel %vm315, %v1366, 0.0
          %v1371 = vstv %s1345
          %v1372 = vmul.f32 %v1371, %v1369
          %v1373 = vmul.f32 %v1371, %v1370
          %s1374 = sld [smem:[#allocation6 + $0x32]]
          %1375 = vrot.lane.b32.xlu0 %v1350, 50
          %v1376 = vpop.permute.xlu0 %1375
          %1377 = vrot.lane.b32.xlu0 %v1354, 50
          %v1378 = vpop.permute.xlu0 %1377
          %1379 = vrot.lane.b32.xlu0 %v1358, 50
          %v1380 = vpop.permute.xlu0 %1379
          %v1381 = vsel %vm389, %v1376, %v1378
          %v1382 = vsel %vm389, %v1378, %v1380
          %v1385 = vsel %vm320, %v1381, 0.0
          %v1386 = vsel %vm321, %v1382, 0.0
          %v1387 = vstv %s1374
          %v1388 = vmul.f32 %v1387, %v1385
          %v1389 = vmul.f32 %v1387, %v1386
          %v1390 = vadd.f32 %v1372, %v1388
          %v1391 = vadd.f32 %v1373, %v1389
          %s1392 = sld [smem:[#allocation6 + $0x33]]
          %1393 = vrot.lane.b32.xlu0 %v1350, 49
          %v1394 = vpop.permute.xlu0 %1393
          %1395 = vrot.lane.b32.xlu0 %v1354, 49
          %v1396 = vpop.permute.xlu0 %1395
          %1397 = vrot.lane.b32.xlu0 %v1358, 49
          %v1398 = vpop.permute.xlu0 %1397
          %v1399 = vsel %vm408, %v1394, %v1396
          %v1400 = vsel %vm408, %v1396, %v1398
          %v1403 = vsel %vm326, %v1399, 0.0
          %v1404 = vsel %vm327, %v1400, 0.0
          %v1405 = vstv %s1392
          %v1406 = vmul.f32 %v1405, %v1403
          %v1407 = vmul.f32 %v1405, %v1404
          %v1408 = vadd.f32 %v1390, %v1406
          %v1409 = vadd.f32 %v1391, %v1407
          %s1410 = sld [smem:[#allocation6 + $0x34]]
          %v1411 = vstv %s1410
          %v1412 = vmul.f32 %v1411, %v1344
          %v1414 = vlaneseq
          %v1415 = vshrl.u32 %v1414, 7
          %v1416 = vsub.s32 0, %v1415
          %v1417 = vrot.slane %v1412, %v1416
          %v1418 = vlaneseq
          %v1419 = vshrl.u32 %v1418, 7
          %v1420 = vsub.s32 1, %v1419
          %v1421 = vrot.slane %v1412, %v1420
          %v1422 = vlaneseq
          %v1423 = vshrl.u32 %v1422, 7
          %v1424 = vsub.s32 2, %v1423
          %v1425 = vrot.slane %v1412, %v1424
          %1426 = vrot.lane.b32.xlu0 %v1417, 48
          %v1427 = vpop.permute.xlu0 %1426
          %1428 = vrot.lane.b32.xlu0 %v1421, 48
          %v1429 = vpop.permute.xlu0 %1428
          %1430 = vrot.lane.b32.xlu0 %v1425, 48
          %v1431 = vpop.permute.xlu0 %1430
          %v1432 = vsel %vm442, %v1427, %v1429
          %v1433 = vsel %vm442, %v1429, %v1431
          %v1436 = vadd.f32 %v1408, %v1432
          %v1437 = vadd.f32 %v1409, %v1433
          %s1438 = sld [smem:[#allocation6 + $0x35]]
          %1439 = vrot.lane.b32.xlu0 %v1350, 47
          %v1440 = vpop.permute.xlu0 %1439
          %1441 = vrot.lane.b32.xlu0 %v1354, 47
          %v1442 = vpop.permute.xlu0 %1441
          %1443 = vrot.lane.b32.xlu0 %v1358, 47
          %v1444 = vpop.permute.xlu0 %1443
          %v1445 = vsel %vm456, %v1440, %v1442
          %v1446 = vsel %vm456, %v1442, %v1444
          %v1449 = vsel %vm332, %v1445, 0.0
          %v1450 = vsel %vm333, %v1446, 0.0
          %v1451 = vstv %s1438
          %v1452 = vmul.f32 %v1451, %v1449
          %v1453 = vmul.f32 %v1451, %v1450
          %v1454 = vadd.f32 %v1436, %v1452
          %v1455 = vadd.f32 %v1437, %v1453
          %s1456 = sld [smem:[#allocation6 + $0x36]]
          %1457 = vrot.lane.b32.xlu0 %v1350, 46
          %v1458 = vpop.permute.xlu0 %1457
          %1459 = vrot.lane.b32.xlu0 %v1354, 46
          %v1460 = vpop.permute.xlu0 %1459
          %1461 = vrot.lane.b32.xlu0 %v1358, 46
          %v1462 = vpop.permute.xlu0 %1461
          %v1463 = vsel %vm475, %v1458, %v1460
          %v1464 = vsel %vm475, %v1460, %v1462
          %v1467 = vsel %vm338, %v1463, 0.0
          %v1468 = vsel %vm339, %v1464, 0.0
          %v1469 = vstv %s1456
          %v1470 = vmul.f32 %v1469, %v1467
          %v1471 = vmul.f32 %v1469, %v1468
          %v1472 = vadd.f32 %v1454, %v1470
          %v1473 = vadd.f32 %v1455, %v1471
          %s1474 = sld [smem:[#allocation6 + $0x37]]
          %1475 = vrot.lane.b32.xlu0 %v1350, 45
          %v1476 = vpop.permute.xlu0 %1475
          %1477 = vrot.lane.b32.xlu0 %v1354, 45
          %v1478 = vpop.permute.xlu0 %1477
          %1479 = vrot.lane.b32.xlu0 %v1358, 45
          %v1480 = vpop.permute.xlu0 %1479
          %v1481 = vsel %vm494, %v1476, %v1478
          %v1482 = vsel %vm494, %v1478, %v1480
          %v1485 = vsel %vm344, %v1481, 0.0
          %v1486 = vsel %vm345, %v1482, 0.0
          %v1487 = vstv %s1474
          %v1488 = vmul.f32 %v1487, %v1485
          %v1489 = vmul.f32 %v1487, %v1486
          %v1490 = vadd.f32 %v1472, %v1488
          %v1491 = vadd.f32 %v1473, %v1489
          %v1492 = vadd.f32 %v1339, %v1490
          %v1493 = vadd.f32 %v1340, %v1491
          %s1494 = sld [smem:[#allocation6 + $0x38]]
          %1495 = vrot.lane.b32.xlu0 %v1350, 35
          %v1496 = vpop.permute.xlu0 %1495
          %1497 = vrot.lane.b32.xlu0 %v1354, 35
          %v1498 = vpop.permute.xlu0 %1497
          %1499 = vrot.lane.b32.xlu0 %v1358, 35
          %v1500 = vpop.permute.xlu0 %1499
          %v1501 = vsel %vm515, %v1496, %v1498
          %v1502 = vsel %vm515, %v1498, %v1500
          %v1505 = vsel %vm314, %v1501, 0.0
          %v1506 = vsel %vm315, %v1502, 0.0
          %v1507 = vstv %s1494
          %v1508 = vmul.f32 %v1507, %v1505
          %v1509 = vmul.f32 %v1507, %v1506
          %s1510 = sld [smem:[#allocation6 + $0x39]]
          %1511 = vrot.lane.b32.xlu0 %v1350, 34
          %v1512 = vpop.permute.xlu0 %1511
          %1513 = vrot.lane.b32.xlu0 %v1354, 34
          %v1514 = vpop.permute.xlu0 %1513
          %1515 = vrot.lane.b32.xlu0 %v1358, 34
          %v1516 = vpop.permute.xlu0 %1515
          %v1517 = vsel %vm532, %v1512, %v1514
          %v1518 = vsel %vm532, %v1514, %v1516
          %v1521 = vsel %vm320, %v1517, 0.0
          %v1522 = vsel %vm321, %v1518, 0.0
          %v1523 = vstv %s1510
          %v1524 = vmul.f32 %v1523, %v1521
          %v1525 = vmul.f32 %v1523, %v1522
          %v1526 = vadd.f32 %v1508, %v1524
          %v1527 = vadd.f32 %v1509, %v1525
          %s1528 = sld [smem:[#allocation6 + $0x3a]]
          %1529 = vrot.lane.b32.xlu0 %v1350, 33
          %v1530 = vpop.permute.xlu0 %1529
          %1531 = vrot.lane.b32.xlu0 %v1354, 33
          %v1532 = vpop.permute.xlu0 %1531
          %1533 = vrot.lane.b32.xlu0 %v1358, 33
          %v1534 = vpop.permute.xlu0 %1533
          %v1535 = vsel %vm551, %v1530, %v1532
          %v1536 = vsel %vm551, %v1532, %v1534
          %v1539 = vsel %vm326, %v1535, 0.0
          %v1540 = vsel %vm327, %v1536, 0.0
          %v1541 = vstv %s1528
          %v1542 = vmul.f32 %v1541, %v1539
          %v1543 = vmul.f32 %v1541, %v1540
          %v1544 = vadd.f32 %v1526, %v1542
          %v1545 = vadd.f32 %v1527, %v1543
          %s1546 = sld [smem:[#allocation6 + $0x3b]]
          %v1547 = vstv %s1546
          %v1548 = vmul.f32 %v1547, %v1344
          %v1550 = vlaneseq
          %v1551 = vshrl.u32 %v1550, 7
          %v1552 = vsub.s32 0, %v1551
          %v1553 = vrot.slane %v1548, %v1552
          %v1554 = vlaneseq
          %v1555 = vshrl.u32 %v1554, 7
          %v1556 = vsub.s32 1, %v1555
          %v1557 = vrot.slane %v1548, %v1556
          %v1558 = vlaneseq
          %v1559 = vshrl.u32 %v1558, 7
          %v1560 = vsub.s32 2, %v1559
          %v1561 = vrot.slane %v1548, %v1560
          %1562 = vrot.lane.b32.xlu0 %v1553, 32
          %v1563 = vpop.permute.xlu0 %1562
          %1564 = vrot.lane.b32.xlu0 %v1557, 32
          %v1565 = vpop.permute.xlu0 %1564
          %1566 = vrot.lane.b32.xlu0 %v1561, 32
          %v1567 = vpop.permute.xlu0 %1566
          %v1568 = vsel %vm585, %v1563, %v1565
          %v1569 = vsel %vm585, %v1565, %v1567
          %v1572 = vadd.f32 %v1544, %v1568
          %v1573 = vadd.f32 %v1545, %v1569
          %s1574 = sld [smem:[#allocation6 + $0x3c]]
          %1575 = vrot.lane.b32.xlu0 %v1350, 31
          %v1576 = vpop.permute.xlu0 %1575
          %1577 = vrot.lane.b32.xlu0 %v1354, 31
          %v1578 = vpop.permute.xlu0 %1577
          %1579 = vrot.lane.b32.xlu0 %v1358, 31
          %v1580 = vpop.permute.xlu0 %1579
          %v1581 = vsel %vm599, %v1576, %v1578
          %v1582 = vsel %vm599, %v1578, %v1580
          %v1585 = vsel %vm332, %v1581, 0.0
          %v1586 = vsel %vm333, %v1582, 0.0
          %v1587 = vstv %s1574
          %v1588 = vmul.f32 %v1587, %v1585
          %v1589 = vmul.f32 %v1587, %v1586
          %v1590 = vadd.f32 %v1572, %v1588
          %v1591 = vadd.f32 %v1573, %v1589
          %s1592 = sld [smem:[#allocation6 + $0x3d]]
          %1593 = vrot.lane.b32.xlu0 %v1350, 30
          %v1594 = vpop.permute.xlu0 %1593
          %1595 = vrot.lane.b32.xlu0 %v1354, 30
          %v1596 = vpop.permute.xlu0 %1595
          %1597 = vrot.lane.b32.xlu0 %v1358, 30
          %v1598 = vpop.permute.xlu0 %1597
          %v1599 = vsel %vm618, %v1594, %v1596
          %v1600 = vsel %vm618, %v1596, %v1598
          %v1603 = vsel %vm338, %v1599, 0.0
          %v1604 = vsel %vm339, %v1600, 0.0
          %v1605 = vstv %s1592
          %v1606 = vmul.f32 %v1605, %v1603
          %v1607 = vmul.f32 %v1605, %v1604
          %v1608 = vadd.f32 %v1590, %v1606
          %v1609 = vadd.f32 %v1591, %v1607
          %s1610 = sld [smem:[#allocation6 + $0x3e]]
          %1611 = vrot.lane.b32.xlu0 %v1350, 29
          %v1612 = vpop.permute.xlu0 %1611
          %1613 = vrot.lane.b32.xlu0 %v1354, 29
          %v1614 = vpop.permute.xlu0 %1613
          %1615 = vrot.lane.b32.xlu0 %v1358, 29
          %v1616 = vpop.permute.xlu0 %1615
          %v1617 = vsel %vm637, %v1612, %v1614
          %v1618 = vsel %vm637, %v1614, %v1616
          %v1621 = vsel %vm344, %v1617, 0.0
          %v1622 = vsel %vm345, %v1618, 0.0
          %v1623 = vstv %s1610
          %v1624 = vmul.f32 %v1623, %v1621
          %v1625 = vmul.f32 %v1623, %v1622
          %v1626 = vadd.f32 %v1608, %v1624
          %v1627 = vadd.f32 %v1609, %v1625
          %v1628 = vadd.f32 %v1492, %v1626
          %v1629 = vadd.f32 %v1493, %v1627
          %s1630 = sld [smem:[#allocation6 + $0x3f]]
          %1631 = vrot.lane.b32.xlu0 %v1350, 19
          %v1632 = vpop.permute.xlu0 %1631
          %1633 = vrot.lane.b32.xlu0 %v1354, 19
          %v1634 = vpop.permute.xlu0 %1633
          %1635 = vrot.lane.b32.xlu0 %v1358, 19
          %v1636 = vpop.permute.xlu0 %1635
          %v1637 = vsel %vm658, %v1632, %v1634
          %v1638 = vsel %vm658, %v1634, %v1636
          %v1641 = vsel %vm314, %v1637, 0.0
          %v1642 = vsel %vm315, %v1638, 0.0
          %v1643 = vstv %s1630
          %v1644 = vmul.f32 %v1643, %v1641
          %v1645 = vmul.f32 %v1643, %v1642
          %s1646 = sld [smem:[#allocation6 + $0x40]]
          %1647 = vrot.lane.b32.xlu0 %v1350, 18
          %v1648 = vpop.permute.xlu0 %1647
          %1649 = vrot.lane.b32.xlu0 %v1354, 18
          %v1650 = vpop.permute.xlu0 %1649
          %1651 = vrot.lane.b32.xlu0 %v1358, 18
          %v1652 = vpop.permute.xlu0 %1651
          %v1653 = vsel %vm675, %v1648, %v1650
          %v1654 = vsel %vm675, %v1650, %v1652
          %v1657 = vsel %vm320, %v1653, 0.0
          %v1658 = vsel %vm321, %v1654, 0.0
          %v1659 = vstv %s1646
          %v1660 = vmul.f32 %v1659, %v1657
          %v1661 = vmul.f32 %v1659, %v1658
          %v1662 = vadd.f32 %v1644, %v1660
          %v1663 = vadd.f32 %v1645, %v1661
          %s1664 = sld [smem:[#allocation6 + $0x41]]
          %1665 = vrot.lane.b32.xlu0 %v1350, 17
          %v1666 = vpop.permute.xlu0 %1665
          %1667 = vrot.lane.b32.xlu0 %v1354, 17
          %v1668 = vpop.permute.xlu0 %1667
          %1669 = vrot.lane.b32.xlu0 %v1358, 17
          %v1670 = vpop.permute.xlu0 %1669
          %v1671 = vsel %vm694, %v1666, %v1668
          %v1672 = vsel %vm694, %v1668, %v1670
          %v1675 = vsel %vm326, %v1671, 0.0
          %v1676 = vsel %vm327, %v1672, 0.0
          %v1677 = vstv %s1664
          %v1678 = vmul.f32 %v1677, %v1675
          %v1679 = vmul.f32 %v1677, %v1676
          %v1680 = vadd.f32 %v1662, %v1678
          %v1681 = vadd.f32 %v1663, %v1679
          %s1682 = sld [smem:[#allocation6 + $0x42]]
          %v1683 = vstv %s1682
          %v1684 = vmul.f32 %v1683, %v1344
          %v1686 = vlaneseq
          %v1687 = vshrl.u32 %v1686, 7
          %v1688 = vsub.s32 0, %v1687
          %v1689 = vrot.slane %v1684, %v1688
          %v1690 = vlaneseq
          %v1691 = vshrl.u32 %v1690, 7
          %v1692 = vsub.s32 1, %v1691
          %v1693 = vrot.slane %v1684, %v1692
          %v1694 = vlaneseq
          %v1695 = vshrl.u32 %v1694, 7
          %v1696 = vsub.s32 2, %v1695
          %v1697 = vrot.slane %v1684, %v1696
          %1698 = vrot.lane.b32.xlu0 %v1689, 16
          %v1699 = vpop.permute.xlu0 %1698
          %1700 = vrot.lane.b32.xlu0 %v1693, 16
          %v1701 = vpop.permute.xlu0 %1700
          %1702 = vrot.lane.b32.xlu0 %v1697, 16
          %v1703 = vpop.permute.xlu0 %1702
          %v1704 = vsel %vm728, %v1699, %v1701
          %v1705 = vsel %vm728, %v1701, %v1703
          %v1708 = vadd.f32 %v1680, %v1704
          %v1709 = vadd.f32 %v1681, %v1705
          %s1710 = sld [smem:[#allocation6 + $0x43]]
          %1711 = vrot.lane.b32.xlu0 %v1350, 15
          %v1712 = vpop.permute.xlu0 %1711
          %1713 = vrot.lane.b32.xlu0 %v1354, 15
          %v1714 = vpop.permute.xlu0 %1713
          %1715 = vrot.lane.b32.xlu0 %v1358, 15
          %v1716 = vpop.permute.xlu0 %1715
          %v1717 = vsel %vm742, %v1712, %v1714
          %v1718 = vsel %vm742, %v1714, %v1716
          %v1721 = vsel %vm332, %v1717, 0.0
          %v1722 = vsel %vm333, %v1718, 0.0
          %v1723 = vstv %s1710
          %v1724 = vmul.f32 %v1723, %v1721
          %v1725 = vmul.f32 %v1723, %v1722
          %v1726 = vadd.f32 %v1708, %v1724
          %v1727 = vadd.f32 %v1709, %v1725
          %s1728 = sld [smem:[#allocation6 + $0x44]]
          %1729 = vrot.lane.b32.xlu0 %v1350, 14
          %v1730 = vpop.permute.xlu0 %1729
          %1731 = vrot.lane.b32.xlu0 %v1354, 14
          %v1732 = vpop.permute.xlu0 %1731
          %1733 = vrot.lane.b32.xlu0 %v1358, 14
          %v1734 = vpop.permute.xlu0 %1733
          %v1735 = vsel %vm761, %v1730, %v1732
          %v1736 = vsel %vm761, %v1732, %v1734
          %v1739 = vsel %vm338, %v1735, 0.0
          %v1740 = vsel %vm339, %v1736, 0.0
          %v1741 = vstv %s1728
          %v1742 = vmul.f32 %v1741, %v1739
          %v1743 = vmul.f32 %v1741, %v1740
          %v1744 = vadd.f32 %v1726, %v1742
          %v1745 = vadd.f32 %v1727, %v1743
          %s1746 = sld [smem:[#allocation6 + $0x45]]
          %1747 = vrot.lane.b32.xlu0 %v1350, 13
          %v1748 = vpop.permute.xlu0 %1747
          %1749 = vrot.lane.b32.xlu0 %v1354, 13
          %v1750 = vpop.permute.xlu0 %1749
          %1751 = vrot.lane.b32.xlu0 %v1358, 13
          %v1752 = vpop.permute.xlu0 %1751
          %v1753 = vsel %vm780, %v1748, %v1750
          %v1754 = vsel %vm780, %v1750, %v1752
          %v1757 = vsel %vm344, %v1753, 0.0
          %v1758 = vsel %vm345, %v1754, 0.0
          %v1759 = vstv %s1746
          %v1760 = vmul.f32 %v1759, %v1757
          %v1761 = vmul.f32 %v1759, %v1758
          %v1762 = vadd.f32 %v1744, %v1760
          %v1763 = vadd.f32 %v1745, %v1761
          %v1764 = vadd.f32 %v1628, %v1762
          %v1765 = vadd.f32 %v1629, %v1763
          %s1766 = sld [smem:[#allocation6 + $0x46]]
          %1767 = vrot.lane.b32.xlu0 %v1350, 3
          %v1768 = vpop.permute.xlu0 %1767
          %1769 = vrot.lane.b32.xlu0 %v1354, 3
          %v1770 = vpop.permute.xlu0 %1769
          %1771 = vrot.lane.b32.xlu0 %v1358, 3
          %v1772 = vpop.permute.xlu0 %1771
          %v1773 = vsel %vm801, %v1768, %v1770
          %v1774 = vsel %vm801, %v1770, %v1772
          %v1777 = vsel %vm314, %v1773, 0.0
          %v1778 = vsel %vm315, %v1774, 0.0
          %v1779 = vstv %s1766
          %v1780 = vmul.f32 %v1779, %v1777
          %v1781 = vmul.f32 %v1779, %v1778
          %s1782 = sld [smem:[#allocation6 + $0x47]]
          %1783 = vrot.lane.b32.xlu0 %v1350, 2
          %v1784 = vpop.permute.xlu0 %1783
          %1785 = vrot.lane.b32.xlu0 %v1354, 2
          %v1786 = vpop.permute.xlu0 %1785
          %1787 = vrot.lane.b32.xlu0 %v1358, 2
          %v1788 = vpop.permute.xlu0 %1787
          %v1789 = vsel %vm818, %v1784, %v1786
          %v1790 = vsel %vm818, %v1786, %v1788
          %v1793 = vsel %vm320, %v1789, 0.0
          %v1794 = vsel %vm321, %v1790, 0.0
          %v1795 = vstv %s1782
          %v1796 = vmul.f32 %v1795, %v1793
          %v1797 = vmul.f32 %v1795, %v1794
          %v1798 = vadd.f32 %v1780, %v1796
          %v1799 = vadd.f32 %v1781, %v1797
          %s1800 = sld [smem:[#allocation6 + $0x48]]
          %1801 = vrot.lane.b32.xlu0 %v1350, 1
          %v1802 = vpop.permute.xlu0 %1801
          %1803 = vrot.lane.b32.xlu0 %v1354, 1
          %v1804 = vpop.permute.xlu0 %1803
          %1805 = vrot.lane.b32.xlu0 %v1358, 1
          %v1806 = vpop.permute.xlu0 %1805
          %v1807 = vsel %vm837, %v1802, %v1804
          %v1808 = vsel %vm837, %v1804, %v1806
          %v1811 = vsel %vm326, %v1807, 0.0
          %v1812 = vsel %vm327, %v1808, 0.0
          %v1813 = vstv %s1800
          %v1814 = vmul.f32 %v1813, %v1811
          %v1815 = vmul.f32 %v1813, %v1812
          %v1816 = vadd.f32 %v1798, %v1814
          %v1817 = vadd.f32 %v1799, %v1815
          %s1818 = sld [smem:[#allocation6 + $0x49]]
          %v1819 = vstv %s1818
          %v1820 = vrot.slane %v1344, 1
          %v1822 = vmul.f32 %v1819, %v1820
          %v1824 = vlaneseq
          %v1825 = vshrl.u32 %v1824, 7
          %v1826 = vsub.s32 0, %v1825
          %v1827 = vrot.slane %v1822, %v1826
          %v1828 = vlaneseq
          %v1829 = vshrl.u32 %v1828, 7
          %v1830 = vsub.s32 1, %v1829
          %v1831 = vrot.slane %v1822, %v1830
          %v1834 = vadd.f32 %v1816, %v1827
          %v1835 = vadd.f32 %v1817, %v1831
          %s1836 = sld [smem:[#allocation6 + $0x4a]]
          %v1837 = vlaneseq
          %v1838 = vshrl.u32 %v1837, 7
          %v1839 = vsub.s32 3, %v1838
          %v1840 = vrot.slane %v1344, %v1839
          %1841 = vrot.lane.b32.xlu0 %v1354, 127
          %v1842 = vpop.permute.xlu0 %1841
          %1843 = vrot.lane.b32.xlu0 %v1358, 127
          %v1844 = vpop.permute.xlu0 %1843
          %1845 = vrot.lane.b32.xlu0 %v1840, 127
          %v1846 = vpop.permute.xlu0 %1845
          %v1847 = vsel %vm878, %v1842, %v1844
          %v1848 = vsel %vm878, %v1844, %v1846
          %v1851 = vsel %vm332, %v1847, 0.0
          %v1852 = vsel %vm333, %v1848, 0.0
          %v1853 = vstv %s1836
          %v1854 = vmul.f32 %v1853, %v1851
          %v1855 = vmul.f32 %v1853, %v1852
          %v1856 = vadd.f32 %v1834, %v1854
          %v1857 = vadd.f32 %v1835, %v1855
          %s1858 = sld [smem:[#allocation6 + $0x4b]]
          %1859 = vrot.lane.b32.xlu0 %v1354, 126
          %v1860 = vpop.permute.xlu0 %1859
          %1861 = vrot.lane.b32.xlu0 %v1358, 126
          %v1862 = vpop.permute.xlu0 %1861
          %1863 = vrot.lane.b32.xlu0 %v1840, 126
          %v1864 = vpop.permute.xlu0 %1863
          %v1865 = vsel %vm897, %v1860, %v1862
          %v1866 = vsel %vm897, %v1862, %v1864
          %v1869 = vsel %vm338, %v1865, 0.0
          %v1870 = vsel %vm339, %v1866, 0.0
          %v1871 = vstv %s1858
          %v1872 = vmul.f32 %v1871, %v1869
          %v1873 = vmul.f32 %v1871, %v1870
          %v1874 = vadd.f32 %v1856, %v1872
          %v1875 = vadd.f32 %v1857, %v1873
          %s1876 = sld [smem:[#allocation6 + $0x4c]]
          %1877 = vrot.lane.b32.xlu0 %v1354, 125
          %v1878 = vpop.permute.xlu0 %1877
          %1879 = vrot.lane.b32.xlu0 %v1358, 125
          %v1880 = vpop.permute.xlu0 %1879
          %1881 = vrot.lane.b32.xlu0 %v1840, 125
          %v1882 = vpop.permute.xlu0 %1881
          %v1883 = vsel %vm916, %v1878, %v1880
          %v1884 = vsel %vm916, %v1880, %v1882
          %v1887 = vsel %vm344, %v1883, 0.0
          %v1888 = vsel %vm345, %v1884, 0.0
          %v1889 = vstv %s1876
          %v1890 = vmul.f32 %v1889, %v1887
          %v1891 = vmul.f32 %v1889, %v1888
          %v1892 = vadd.f32 %v1874, %v1890
          %v1893 = vadd.f32 %v1875, %v1891
          %v1894 = vadd.f32 %v1764, %v1892
          %v1895 = vadd.f32 %v1765, %v1893
          %s1896 = sld [smem:[#allocation6 + $0x4d]]
          %1897 = vrot.lane.b32.xlu0 %v1354, 115
          %v1898 = vpop.permute.xlu0 %1897
          %1899 = vrot.lane.b32.xlu0 %v1358, 115
          %v1900 = vpop.permute.xlu0 %1899
          %1901 = vrot.lane.b32.xlu0 %v1840, 115
          %v1902 = vpop.permute.xlu0 %1901
          %v1903 = vsel %vm937, %v1898, %v1900
          %v1904 = vsel %vm937, %v1900, %v1902
          %v1907 = vsel %vm314, %v1903, 0.0
          %v1908 = vsel %vm315, %v1904, 0.0
          %v1909 = vstv %s1896
          %v1910 = vmul.f32 %v1909, %v1907
          %v1911 = vmul.f32 %v1909, %v1908
          %s1912 = sld [smem:[#allocation6 + $0x4e]]
          %1913 = vrot.lane.b32.xlu0 %v1354, 114
          %v1914 = vpop.permute.xlu0 %1913
          %1915 = vrot.lane.b32.xlu0 %v1358, 114
          %v1916 = vpop.permute.xlu0 %1915
          %1917 = vrot.lane.b32.xlu0 %v1840, 114
          %v1918 = vpop.permute.xlu0 %1917
          %v1919 = vsel %vm954, %v1914, %v1916
          %v1920 = vsel %vm954, %v1916, %v1918
          %v1923 = vsel %vm320, %v1919, 0.0
          %v1924 = vsel %vm321, %v1920, 0.0
          %v1925 = vstv %s1912
          %v1926 = vmul.f32 %v1925, %v1923
          %v1927 = vmul.f32 %v1925, %v1924
          %v1928 = vadd.f32 %v1910, %v1926
          %v1929 = vadd.f32 %v1911, %v1927
          %s1930 = sld [smem:[#allocation6 + $0x4f]]
          %1931 = vrot.lane.b32.xlu0 %v1354, 113
          %v1932 = vpop.permute.xlu0 %1931
          %1933 = vrot.lane.b32.xlu0 %v1358, 113
          %v1934 = vpop.permute.xlu0 %1933
          %1935 = vrot.lane.b32.xlu0 %v1840, 113
          %v1936 = vpop.permute.xlu0 %1935
          %v1937 = vsel %vm973, %v1932, %v1934
          %v1938 = vsel %vm973, %v1934, %v1936
          %v1941 = vsel %vm326, %v1937, 0.0
          %v1942 = vsel %vm327, %v1938, 0.0
          %v1943 = vstv %s1930
          %v1944 = vmul.f32 %v1943, %v1941
          %v1945 = vmul.f32 %v1943, %v1942
          %v1946 = vadd.f32 %v1928, %v1944
          %v1947 = vadd.f32 %v1929, %v1945
          %s1948 = sld [smem:[#allocation6 + $0x50]]
          %v1949 = vstv %s1948
          %1950 = vrot.lane.b32.xlu0 %v1344, 112
          %v1951 = vpop.permute.xlu0 %1950
          %v1952 = vrot.slane %v1951, 1
          %v1953 = vrot.slane %v1951, 2
          %v1954 = vsel %vm991, %v1952, %v1953
          %v1956 = vmul.f32 %v1949, %v1954
          %v1958 = vlaneseq
          %v1959 = vshrl.u32 %v1958, 7
          %v1960 = vsub.s32 0, %v1959
          %v1961 = vrot.slane %v1956, %v1960
          %v1962 = vlaneseq
          %v1963 = vshrl.u32 %v1962, 7
          %v1964 = vsub.s32 1, %v1963
          %v1965 = vrot.slane %v1956, %v1964
          %v1968 = vadd.f32 %v1946, %v1961
          %v1969 = vadd.f32 %v1947, %v1965
          %s1970 = sld [smem:[#allocation6 + $0x51]]
          %1971 = vrot.lane.b32.xlu0 %v1354, 111
          %v1972 = vpop.permute.xlu0 %1971
          %1973 = vrot.lane.b32.xlu0 %v1358, 111
          %v1974 = vpop.permute.xlu0 %1973
          %1975 = vrot.lane.b32.xlu0 %v1840, 111
          %v1976 = vpop.permute.xlu0 %1975
          %v1977 = vsel %vm1015, %v1972, %v1974
          %v1978 = vsel %vm1015, %v1974, %v1976
          %v1981 = vsel %vm332, %v1977, 0.0
          %v1982 = vsel %vm333, %v1978, 0.0
          %v1983 = vstv %s1970
          %v1984 = vmul.f32 %v1983, %v1981
          %v1985 = vmul.f32 %v1983, %v1982
          %v1986 = vadd.f32 %v1968, %v1984
          %v1987 = vadd.f32 %v1969, %v1985
          %s1988 = sld [smem:[#allocation6 + $0x52]]
          %1989 = vrot.lane.b32.xlu0 %v1354, 110
          %v1990 = vpop.permute.xlu0 %1989
          %1991 = vrot.lane.b32.xlu0 %v1358, 110
          %v1992 = vpop.permute.xlu0 %1991
          %1993 = vrot.lane.b32.xlu0 %v1840, 110
          %v1994 = vpop.permute.xlu0 %1993
          %v1995 = vsel %vm1034, %v1990, %v1992
          %v1996 = vsel %vm1034, %v1992, %v1994
          %v1999 = vsel %vm338, %v1995, 0.0
          %v2000 = vsel %vm339, %v1996, 0.0
          %v2001 = vstv %s1988
          %v2002 = vmul.f32 %v2001, %v1999
          %v2003 = vmul.f32 %v2001, %v2000
          %v2004 = vadd.f32 %v1986, %v2002
          %v2005 = vadd.f32 %v1987, %v2003
          %s2006 = sld [smem:[#allocation6 + $0x53]]
          %2007 = vrot.lane.b32.xlu0 %v1354, 109
          %v2008 = vpop.permute.xlu0 %2007
          %2009 = vrot.lane.b32.xlu0 %v1358, 109
          %v2010 = vpop.permute.xlu0 %2009
          %2011 = vrot.lane.b32.xlu0 %v1840, 109
          %v2012 = vpop.permute.xlu0 %2011
          %v2013 = vsel %vm1053, %v2008, %v2010
          %v2014 = vsel %vm1053, %v2010, %v2012
          %v2017 = vsel %vm344, %v2013, 0.0
          %v2018 = vsel %vm345, %v2014, 0.0
          %v2019 = vstv %s2006
          %v2020 = vmul.f32 %v2019, %v2017
          %v2021 = vmul.f32 %v2019, %v2018
          %v2022 = vadd.f32 %v2004, %v2020
          %v2023 = vadd.f32 %v2005, %v2021
          %v2024 = vadd.f32 %v1894, %v2022
          %v2025 = vadd.f32 %v1895, %v2023
          %s2026 = sld [smem:[#allocation6 + $0x54]]
          %2027 = vrot.lane.b32.xlu0 %v1354, 99
          %v2028 = vpop.permute.xlu0 %2027
          %2029 = vrot.lane.b32.xlu0 %v1358, 99
          %v2030 = vpop.permute.xlu0 %2029
          %2031 = vrot.lane.b32.xlu0 %v1840, 99
          %v2032 = vpop.permute.xlu0 %2031
          %v2033 = vsel %vm1074, %v2028, %v2030
          %v2034 = vsel %vm1074, %v2030, %v2032
          %v2037 = vsel %vm314, %v2033, 0.0
          %v2038 = vsel %vm315, %v2034, 0.0
          %v2039 = vstv %s2026
          %v2040 = vmul.f32 %v2039, %v2037
          %v2041 = vmul.f32 %v2039, %v2038
          %s2042 = sld [smem:[#allocation6 + $0x55]]
          %2043 = vrot.lane.b32.xlu0 %v1354, 98
          %v2044 = vpop.permute.xlu0 %2043
          %2045 = vrot.lane.b32.xlu0 %v1358, 98
          %v2046 = vpop.permute.xlu0 %2045
          %2047 = vrot.lane.b32.xlu0 %v1840, 98
          %v2048 = vpop.permute.xlu0 %2047
          %v2049 = vsel %vm1091, %v2044, %v2046
          %v2050 = vsel %vm1091, %v2046, %v2048
          %v2053 = vsel %vm320, %v2049, 0.0
          %v2054 = vsel %vm321, %v2050, 0.0
          %v2055 = vstv %s2042
          %v2056 = vmul.f32 %v2055, %v2053
          %v2057 = vmul.f32 %v2055, %v2054
          %v2058 = vadd.f32 %v2040, %v2056
          %v2059 = vadd.f32 %v2041, %v2057
          %s2060 = sld [smem:[#allocation6 + $0x56]]
          %2061 = vrot.lane.b32.xlu0 %v1354, 97
          %v2062 = vpop.permute.xlu0 %2061
          %2063 = vrot.lane.b32.xlu0 %v1358, 97
          %v2064 = vpop.permute.xlu0 %2063
          %2065 = vrot.lane.b32.xlu0 %v1840, 97
          %v2066 = vpop.permute.xlu0 %2065
          %v2067 = vsel %vm1110, %v2062, %v2064
          %v2068 = vsel %vm1110, %v2064, %v2066
          %v2071 = vsel %vm326, %v2067, 0.0
          %v2072 = vsel %vm327, %v2068, 0.0
          %v2073 = vstv %s2060
          %v2074 = vmul.f32 %v2073, %v2071
          %v2075 = vmul.f32 %v2073, %v2072
          %v2076 = vadd.f32 %v2058, %v2074
          %v2077 = vadd.f32 %v2059, %v2075
          %s2078 = sld [smem:[#allocation6 + $0x57]]
          %v2079 = vstv %s2078
          %2080 = vrot.lane.b32.xlu0 %v1344, 96
          %v2081 = vpop.permute.xlu0 %2080
          %v2082 = vrot.slane %v2081, 1
          %v2083 = vrot.slane %v2081, 2
          %v2084 = vsel %vm1128, %v2082, %v2083
          %v2086 = vmul.f32 %v2079, %v2084
          %v2088 = vlaneseq
          %v2089 = vshrl.u32 %v2088, 7
          %v2090 = vsub.s32 0, %v2089
          %v2091 = vrot.slane %v2086, %v2090
          %v2092 = vlaneseq
          %v2093 = vshrl.u32 %v2092, 7
          %v2094 = vsub.s32 1, %v2093
          %v2095 = vrot.slane %v2086, %v2094
          %v2098 = vadd.f32 %v2076, %v2091
          %v2099 = vadd.f32 %v2077, %v2095
          %s2100 = sld [smem:[#allocation6 + $0x58]]
          %2101 = vrot.lane.b32.xlu0 %v1354, 95
          %v2102 = vpop.permute.xlu0 %2101
          %2103 = vrot.lane.b32.xlu0 %v1358, 95
          %v2104 = vpop.permute.xlu0 %2103
          %2105 = vrot.lane.b32.xlu0 %v1840, 95
          %v2106 = vpop.permute.xlu0 %2105
          %v2107 = vsel %vm1152, %v2102, %v2104
          %v2108 = vsel %vm1152, %v2104, %v2106
          %v2111 = vsel %vm332, %v2107, 0.0
          %v2112 = vsel %vm333, %v2108, 0.0
          %v2113 = vstv %s2100
          %v2114 = vmul.f32 %v2113, %v2111
          %v2115 = vmul.f32 %v2113, %v2112
          %v2116 = vadd.f32 %v2098, %v2114
          %v2117 = vadd.f32 %v2099, %v2115
          %s2118 = sld [smem:[#allocation6 + $0x59]]
          %2119 = vrot.lane.b32.xlu0 %v1354, 94
          %v2120 = vpop.permute.xlu0 %2119
          %2121 = vrot.lane.b32.xlu0 %v1358, 94
          %v2122 = vpop.permute.xlu0 %2121
          %2123 = vrot.lane.b32.xlu0 %v1840, 94
          %v2124 = vpop.permute.xlu0 %2123
          %v2125 = vsel %vm1171, %v2120, %v2122
          %v2126 = vsel %vm1171, %v2122, %v2124
          %v2129 = vsel %vm338, %v2125, 0.0
          %v2130 = vsel %vm339, %v2126, 0.0
          %v2131 = vstv %s2118
          %v2132 = vmul.f32 %v2131, %v2129
          %v2133 = vmul.f32 %v2131, %v2130
          %v2134 = vadd.f32 %v2116, %v2132
          %v2135 = vadd.f32 %v2117, %v2133
          %s2136 = sld [smem:[#allocation6 + $0x5a]]
          %2137 = vrot.lane.b32.xlu0 %v1354, 93
          %v2138 = vpop.permute.xlu0 %2137
          %2139 = vrot.lane.b32.xlu0 %v1358, 93
          %v2140 = vpop.permute.xlu0 %2139
          %2141 = vrot.lane.b32.xlu0 %v1840, 93
          %v2142 = vpop.permute.xlu0 %2141
          %v2143 = vsel %vm1190, %v2138, %v2140
          %v2144 = vsel %vm1190, %v2140, %v2142
          %v2147 = vsel %vm344, %v2143, 0.0
          %v2148 = vsel %vm345, %v2144, 0.0
          %v2149 = vstv %s2136
          %v2150 = vmul.f32 %v2149, %v2147
          %v2151 = vmul.f32 %v2149, %v2148
          %v2152 = vadd.f32 %v2134, %v2150
          %v2153 = vadd.f32 %v2135, %v2151
          %v2154 = vadd.f32 %v2024, %v2152
          %v2155 = vadd.f32 %v2025, %v2153
          %s2156 = sld [smem:[#allocation6 + $0x5b]]
          %2157 = vrot.lane.b32.xlu0 %v1354, 83
          %v2158 = vpop.permute.xlu0 %2157
          %2159 = vrot.lane.b32.xlu0 %v1358, 83
          %v2160 = vpop.permute.xlu0 %2159
          %2161 = vrot.lane.b32.xlu0 %v1840, 83
          %v2162 = vpop.permute.xlu0 %2161
          %v2163 = vsel %vm1211, %v2158, %v2160
          %v2164 = vsel %vm1211, %v2160, %v2162
          %v2167 = vsel %vm314, %v2163, 0.0
          %v2168 = vsel %vm315, %v2164, 0.0
          %v2169 = vstv %s2156
          %v2170 = vmul.f32 %v2169, %v2167
          %v2171 = vmul.f32 %v2169, %v2168
          %s2172 = sld [smem:[#allocation6 + $0x5c]]
          %2173 = vrot.lane.b32.xlu0 %v1354, 82
          %v2174 = vpop.permute.xlu0 %2173
          %2175 = vrot.lane.b32.xlu0 %v1358, 82
          %v2176 = vpop.permute.xlu0 %2175
          %2177 = vrot.lane.b32.xlu0 %v1840, 82
          %v2178 = vpop.permute.xlu0 %2177
          %v2179 = vsel %vm1228, %v2174, %v2176
          %v2180 = vsel %vm1228, %v2176, %v2178
          %v2183 = vsel %vm320, %v2179, 0.0
          %v2184 = vsel %vm321, %v2180, 0.0
          %v2185 = vstv %s2172
          %v2186 = vmul.f32 %v2185, %v2183
          %v2187 = vmul.f32 %v2185, %v2184
          %v2188 = vadd.f32 %v2170, %v2186
          %v2189 = vadd.f32 %v2171, %v2187
          %s2190 = sld [smem:[#allocation6 + $0x5d]]
          %2191 = vrot.lane.b32.xlu0 %v1354, 81
          %v2192 = vpop.permute.xlu0 %2191
          %2193 = vrot.lane.b32.xlu0 %v1358, 81
          %v2194 = vpop.permute.xlu0 %2193
          %2195 = vrot.lane.b32.xlu0 %v1840, 81
          %v2196 = vpop.permute.xlu0 %2195
          %v2197 = vsel %vm1247, %v2192, %v2194
          %v2198 = vsel %vm1247, %v2194, %v2196
          %v2201 = vsel %vm326, %v2197, 0.0
          %v2202 = vsel %vm327, %v2198, 0.0
          %v2203 = vstv %s2190
          %v2204 = vmul.f32 %v2203, %v2201
          %v2205 = vmul.f32 %v2203, %v2202
          %v2206 = vadd.f32 %v2188, %v2204
          %v2207 = vadd.f32 %v2189, %v2205
          %s2208 = sld [smem:[#allocation6 + $0x5e]]
          %v2209 = vstv %s2208
          %2210 = vrot.lane.b32.xlu0 %v1344, 80
          %v2211 = vpop.permute.xlu0 %2210
          %v2212 = vrot.slane %v2211, 1
          %v2213 = vrot.slane %v2211, 2
          %v2214 = vsel %vm1265, %v2212, %v2213
          %v2216 = vmul.f32 %v2209, %v2214
          %v2218 = vlaneseq
          %v2219 = vshrl.u32 %v2218, 7
          %v2220 = vsub.s32 0, %v2219
          %v2221 = vrot.slane %v2216, %v2220
          %v2222 = vlaneseq
          %v2223 = vshrl.u32 %v2222, 7
          %v2224 = vsub.s32 1, %v2223
          %v2225 = vrot.slane %v2216, %v2224
          %v2228 = vadd.f32 %v2206, %v2221
          %v2229 = vadd.f32 %v2207, %v2225
          %s2230 = sld [smem:[#allocation6 + $0x5f]]
          %2231 = vrot.lane.b32.xlu0 %v1354, 79
          %v2232 = vpop.permute.xlu0 %2231
          %2233 = vrot.lane.b32.xlu0 %v1358, 79
          %v2234 = vpop.permute.xlu0 %2233
          %2235 = vrot.lane.b32.xlu0 %v1840, 79
          %v2236 = vpop.permute.xlu0 %2235
          %v2237 = vsel %vm1289, %v2232, %v2234
          %v2238 = vsel %vm1289, %v2234, %v2236
          %v2241 = vsel %vm332, %v2237, 0.0
          %v2242 = vsel %vm333, %v2238, 0.0
          %v2243 = vstv %s2230
          %v2244 = vmul.f32 %v2243, %v2241
          %v2245 = vmul.f32 %v2243, %v2242
          %v2246 = vadd.f32 %v2228, %v2244
          %v2247 = vadd.f32 %v2229, %v2245
          %s2248 = sld [smem:[#allocation6 + $0x60]]
          %2249 = vrot.lane.b32.xlu0 %v1354, 78
          %v2250 = vpop.permute.xlu0 %2249
          %2251 = vrot.lane.b32.xlu0 %v1358, 78
          %v2252 = vpop.permute.xlu0 %2251
          %2253 = vrot.lane.b32.xlu0 %v1840, 78
          %v2254 = vpop.permute.xlu0 %2253
          %v2255 = vsel %vm1308, %v2250, %v2252
          %v2256 = vsel %vm1308, %v2252, %v2254
          %v2259 = vsel %vm338, %v2255, 0.0
          %v2260 = vsel %vm339, %v2256, 0.0
          %v2261 = vstv %s2248
          %v2262 = vmul.f32 %v2261, %v2259
          %v2263 = vmul.f32 %v2261, %v2260
          %v2264 = vadd.f32 %v2246, %v2262
          %v2265 = vadd.f32 %v2247, %v2263
          %s2266 = sld [smem:[#allocation6 + $0x61]]
          %2267 = vrot.lane.b32.xlu0 %v1354, 77
          %v2268 = vpop.permute.xlu0 %2267
          %2269 = vrot.lane.b32.xlu0 %v1358, 77
          %v2270 = vpop.permute.xlu0 %2269
          %2271 = vrot.lane.b32.xlu0 %v1840, 77
          %v2272 = vpop.permute.xlu0 %2271
          %v2273 = vsel %vm1327, %v2268, %v2270
          %v2274 = vsel %vm1327, %v2270, %v2272
          %v2277 = vsel %vm344, %v2273, 0.0
          %v2278 = vsel %vm345, %v2274, 0.0
          %v2279 = vstv %s2266
          %v2280 = vmul.f32 %v2279, %v2277
          %v2281 = vmul.f32 %v2279, %v2278
          %v2282 = vadd.f32 %v2264, %v2280
          %v2283 = vadd.f32 %v2265, %v2281
          %v2284 = vadd.f32 %v2154, %v2282
          %v2285 = vadd.f32 %v2155, %v2283
          %v2286 = vmul.f32 %v2284, 0.5
          %v2287 = vmul.f32 %v2285, 0.5
          %v2288 = vtanh.pop %v2286
          %v2289 = vtanh.pop %v2287
          %v2290 = vmul.f32 %v2288, 0.5
          %v2291 = vmul.f32 %v2289, 0.5
          %v2292 = vadd.f32 %v2290, 0.5
          %v2293 = vadd.f32 %v2291, 0.5
          %v2296 = vcombine.low %v2292, %v2293
          %v2298 = vunpack.c.l.s4 1966171168
          %v2299 = vunpack.c.0.s8 %v2298
          %v2300 = vlaneseq
          %v2301 = vshrl.u32 %v2300, 7
          %v2302 = vsub.s32 %v2299, %v2301
          %v2303 = vrot.slane %v2296, %v2302
          %v2305 = vunpack.c.l.s4 1966171168
          %v2306 = vunpack.c.0.s8 %v2305
          %v2307 = vlaneseq
          %v2308 = vshrl.u32 %v2307, 7
          %v2309 = vsub.s32 %v2306, %v2308
          %v2310 = vrot.slane %v2303, %v2309
          %2312 = vst.msk [vmem:[%s187] sm:$0x3] %vm277, %v2310
        $region44: #{tpu_custom_call.1} parent=27 // pred_fallthru
          _
        %s2313 = sand.u32 %s89, 1
        %s2314 = scalar_lea.sflag [#allocation8], %s2313
        %s2315 = sand.u32 %s89, 1
        %s2316 = smul.addr %s2315, 2
        %s2317 = scalar_lea.vmem [#allocation11], %s2316
        // Predicated region
        $region45: #{tpu_custom_call.1} parent=27 // pred_check
          %p2318 = pneg %p99
        $region46: #{tpu_custom_call.1} parent=27 // pred_check_branch
          %2320 = sbr.rel (%p2318) target = $region48
        $region47: #{tpu_custom_call.1} parent=27 // pred_region
          %s2322 = ssub.s32 32, 32
          %2323 = vsyncadd %s2314, %s2322
          %s2324 = smul.addr %s24, 2
          %s2325 = smul.addr %s2324, 16
          %s2326 = scalar_lea.hbm %s2, %s2325
          %s2328 = sshll.u32 %s2317, 4
          %s2329 = int_to_ptr.vmem [resolvable:$true] %s2328
          %2331 = dma.vmem_to_hbm [thread:$0]  %s2329, 32, %s2326, %s2314
        $region48: #{tpu_custom_call.1} parent=27 // pred_fallthru
          _
      $region28: #{tpu_custom_call.1} parent=5 // pred_fallthru
        _
      %p2332 = scmp.le.s32.totalorder 2, %s15
      // Predicated region
      $region49: #{tpu_custom_call.1} parent=5 // pred_check
        %p2333 = pneg %p2332
      $region50: #{tpu_custom_call.1} parent=5 // pred_check_branch
        %2335 = sbr.rel (%p2333) target = $region52
      $region51: #{tpu_custom_call.1} parent=5 // pred_region
        %s2336 = ssub.s32 %s15, 2
        // Predicated region
        $region53: #{tpu_custom_call.1} parent=51 // pred_check
          %p2337 = pneg %p105
        $region54: #{tpu_custom_call.1} parent=51 // pred_check_branch
          %2339 = sbr.rel (%p2337) target = $region56
        $region55: #{tpu_custom_call.1} parent=51 // pred_region
          %s2340 = sand.u32 %s90, 1
          %s2341 = scalar_lea.sflag [#allocation8], %s2340
          %s2342 = sand.u32 %s90, 1
          %s2343 = smul.addr %s2342, 2
          %s2344 = scalar_lea.vmem [#allocation11], %s2343
          %2345 = dma.done %s2341, 32
        $region56: #{tpu_custom_call.1} parent=51 // pred_fallthru
          _
      $region52: #{tpu_custom_call.1} parent=5 // pred_fallthru
        _
    $region6: #{tpu_custom_call.1} parent=1 // loop_footer
      %s19 = sadd.s32 1, %s15
    $region7: #{tpu_custom_call.1} parent=1 // loop_footer_branch
      %14 = sbr.rel target = $region3
    $region8: #{tpu_custom_call.1} parent=1 // loop_exit
      _
    %2346 = vsyncpa [#allocation7], 1
    %s2347 = scalar_lea.sflag [#allocation7], 1
    %2348 = vsyncpa %s2347, 1
    %2349 = vsyncpa [#allocation8], 1
    %s2350 = scalar_lea.sflag [#allocation8], 1
    %2351 = vsyncpa %s2350, 1
    %2352 = vsyncpa [#allocation9], 1
    %s2353 = scalar_lea.sflag [#allocation9], 1
    %2354 = vsyncpa %s2353, 1

</llo_original>
